<compile_context>
chip_gen: v7x
topology: tpu7x:2x2x1
jax: 0.10.0
libtpu: 0.0.40
codegen_flags: <defaults>
</compile_context>

<pallas_src>
import jax
import jax.numpy as jnp
from jax.experimental import pallas as pl
from jax.experimental.pallas import tpu as pltpu

HIDDEN = 10      # hidden_dim fixed to 10 in the module's __init__
LAYERS = 3       # num_layers fixed to 3


def gru_mlp_kernel(x_ref,                                  # (S*B, D) time-major
                   wih0, whh0, bx0, bhn0,                  # layer 0 packed params
                   wih1, whh1, bx1, bhn1,                  # layer 1 packed params
                   wih2, whh2, bx2, bhn2,                  # layer 2 packed params
                   fc1w, fc1b, fc2w, fc2b, fc3w, fc3b,     # MLP head params
                   out_ref,                                # (B, c_out)
                   seq_buf):                               # VMEM (S*B, H)
    H = HIDDEN
    B = out_ref.shape[0]
    SB = x_ref.shape[0]
    S = SB // B

    layer_params = [(wih0, whh0, bx0, bhn0),
                    (wih1, whh1, bx1, bhn1),
                    (wih2, whh2, bx2, bhn2)]

    h_last = None
    for li, (wih_r, whh_r, bx_r, bhn_r) in enumerate(layer_params):
        # Hoist weight / bias loads out of the time loop (once per layer).
        wih = wih_r[...]                   # (D_in, 3H)
        whh = whh_r[...]                   # (H, 3H)
        bx = bx_r[...]                     # (1, 3H)  = bih + [bhh_r, bhh_z, 0]
        bhn = bhn_r[...]                   # (1, H)   = bhh_n (stays inside r*(...))

        # Hoisted input-side projection: one matmul per layer, off the serial chain.
        layer_in = x_ref[...] if li == 0 else seq_buf[...]          # (S*B, D_in)
        gx_all = jnp.dot(layer_in, wih,
                         preferred_element_type=jnp.float32) + bx   # (S*B, 3H)

        last_layer = (li == LAYERS - 1)
        h = jnp.zeros((B, H), jnp.float32)

        # Statically unrolled recurrence; h stays in vregs.
        # TODO(synk): per review, a VPU formulation of the (B,H)x(H,3H) recurrence
        # dot may shave MXU-latency per step; decide from a bundle dump.
        for t in range(S):
            gx = gx_all[t * B:(t + 1) * B, :]                       # (B, 3H)
            gh = jnp.dot(h, whh, preferred_element_type=jnp.float32)  # (B, 3H)

            r = jax.nn.sigmoid(gx[:, 0:H] + gh[:, 0:H])
            z = jax.nn.sigmoid(gx[:, H:2 * H] + gh[:, H:2 * H])
            n = jnp.tanh(gx[:, 2 * H:3 * H] + r * (gh[:, 2 * H:3 * H] + bhn))
            h = (1.0 - z) * n + z * h

            if not last_layer:
                seq_buf[t * B:(t + 1) * B, :] = h                   # feeds next layer
        h_last = h

    # x[:, -1] of the top GRU layer == final hidden state h_last.
    # MLP head. nn.Dropout(0.5) is identity in eval mode (no RNG needed).
    y = jnp.dot(h_last, fc1w[...], preferred_element_type=jnp.float32) + fc1b[...]
    y = jnp.maximum(y, 0.0)
    y = jnp.dot(y, fc2w[...], preferred_element_type=jnp.float32) + fc2b[...]
    y = jnp.maximum(y, 0.0)
    y = jnp.dot(y, fc3w[...], preferred_element_type=jnp.float32) + fc3b[...]
    out_ref[...] = y.astype(out_ref.dtype)


def gru_model_forward(x_enc, params):
    """x_enc: (B, S, enc_in) float32 (batch_first, like the PyTorch module)."""
    B, S, D = x_enc.shape
    # Time-major 2D slab: row index = t*B + b.  (Tiny: 64 floats at these sizes.)
    x2d = jnp.transpose(x_enc, (1, 0, 2)).reshape(S * B, D)

    ins = [x2d]
    for (wih, whh, bih, bhh) in params["gru"]:
        wih_p = jnp.concatenate([wih[0], wih[1], wih[2]], axis=1)       # (D_in, 3H)
        whh_p = jnp.concatenate([whh[0], whh[1], whh[2]], axis=1)       # (H, 3H)
        # bih+bhh pre-summed for r/z gates; b_hn kept separate (multiplied by r).
        bx = jnp.concatenate([bih[0] + bhh[0], bih[1] + bhh[1], bih[2]], axis=1)
        bhn = bhh[2]                                                    # (1, H)
        ins += [wih_p, whh_p, bx, bhn]
    ins += [params["fc1w"], params["fc1b"],
            params["fc2w"], params["fc2b"],
            params["fc3w"], params["fc3b"]]

    c_out = params["fc3w"].shape[1]
    vmem = pl.BlockSpec(memory_space=pltpu.MemorySpace.VMEM)

    # No grid: the whole problem fits trivially in VMEM (<10 KiB).
    # TODO(synk): on v7x, add a parallel batch grid axis if B grows to use both TCs.
    return pl.pallas_call(
        gru_mlp_kernel,
        out_shape=jax.ShapeDtypeStruct((B, c_out), jnp.float32),
        in_specs=[vmem] * len(ins),
        out_specs=vmem,
        scratch_shapes=[
            pltpu.VMEM((S * B, HIDDEN), jnp.float32),   # inter-layer sequence buffer
        ],
    )(*ins)


def init_params(key, enc_in, c_out):
    """Deterministic init, PyTorch-style uniform(-1/sqrt(fan), 1/sqrt(fan))."""
    def unif(k, shape, bound):
        return jax.random.uniform(k, shape, jnp.float32, -bound, bound)

    params = {"gru": []}
    kg = 1.0 / jnp.sqrt(float(HIDDEN))
    keys = jax.random.split(key, LAYERS * 4 + 6)
    ki = 0
    for layer in range(LAYERS):
        d_in = enc_in if layer == 0 else HIDDEN
        wih = unif(keys[ki], (3, d_in, HIDDEN), kg); ki += 1     # gate order [r, z, n]
        whh = unif(keys[ki], (3, HIDDEN, HIDDEN), kg); ki += 1
        bih = unif(keys[ki], (3, 1, HIDDEN), kg); ki += 1
        bhh = unif(keys[ki], (3, 1, HIDDEN), kg); ki += 1
        params["gru"].append((wih, whh, bih, bhh))

    k1 = 1.0 / jnp.sqrt(float(HIDDEN))
    k2 = 1.0 / jnp.sqrt(20.0)
    k3 = 1.0 / jnp.sqrt(30.0)
    params["fc1w"] = unif(keys[ki], (HIDDEN, 20), k1); ki += 1
    params["fc1b"] = unif(keys[ki], (1, 20), k1); ki += 1
    params["fc2w"] = unif(keys[ki], (20, 30), k2); ki += 1
    params["fc2b"] = unif(keys[ki], (1, 30), k2); ki += 1
    params["fc3w"] = unif(keys[ki], (30, c_out), k3); ki += 1
    params["fc3b"] = unif(keys[ki], (1, c_out), k3); ki += 1
    return params


def gru_model_reference(x_enc, params):
    """Pure-JAX reference of the PyTorch forward (eval mode)."""
    B, S, _ = x_enc.shape
    seq = x_enc
    for (wih, whh, bih, bhh) in params["gru"]:
        h = jnp.zeros((B, HIDDEN), jnp.float32)
        outs = []
        for t in range(S):
            xt = seq[:, t]
            r = jax.nn.sigmoid(xt @ wih[0] + bih[0] + h @ whh[0] + bhh[0])
            z = jax.nn.sigmoid(xt @ wih[1] + bih[1] + h @ whh[1] + bhh[1])
            n = jnp.tanh(xt @ wih[2] + bih[2] + r * (h @ whh[2] + bhh[2]))
            h = (1.0 - z) * n + z * h
            outs.append(h)
        seq = jnp.stack(outs, axis=1)
    y = seq[:, -1]
    y = jnp.maximum(y @ params["fc1w"] + params["fc1b"], 0.0)
    y = jnp.maximum(y @ params["fc2w"] + params["fc2b"], 0.0)
    return y @ params["fc3w"] + params["fc3b"]


if __name__ == "__main__":
    B, S, ENC_IN, C_OUT = 2, 8, 4, 6

    key = jax.random.PRNGKey(0)
    k_param, k_x, k_mark, k_dec, k_markd = jax.random.split(key, 5)
    params = init_params(k_param, ENC_IN, C_OUT)

    x_enc = jax.random.normal(k_x, (B, S, ENC_IN), jnp.float32)
    # x_mark_enc / x_dec / x_mark_dec are unused by the PyTorch forward.
    x_mark_enc = jax.random.normal(k_mark, (B, S, 3), jnp.float32)
    x_dec = jax.random.normal(k_dec, (B, S, ENC_IN), jnp.float32)
    x_mark_dec = jax.random.normal(k_markd, (B, S, 3), jnp.float32)

    out = gru_model_forward(x_enc, params)
    out = jax.block_until_ready(out)

    ref = gru_model_reference(x_enc, params)
    assert out.shape == (B, C_OUT)
    assert jnp.max(jnp.abs(out - ref)) < 1e-3, "Pallas output mismatch vs reference"

    print("KERNEL_OK")
</pallas_src>

<mosaic_0001>
module attributes {stable_mosaic.version = 11 : i64} {
  func.func @gru_mlp_kernel(%arg0: memref<16x4xf32, #tpu.memory_space<vmem>>, %arg1: memref<4x30xf32, #tpu.memory_space<vmem>>, %arg2: memref<10x30xf32, #tpu.memory_space<vmem>>, %arg3: memref<1x30xf32, #tpu.memory_space<vmem>>, %arg4: memref<1x10xf32, #tpu.memory_space<vmem>>, %arg5: memref<10x30xf32, #tpu.memory_space<vmem>>, %arg6: memref<10x30xf32, #tpu.memory_space<vmem>>, %arg7: memref<1x30xf32, #tpu.memory_space<vmem>>, %arg8: memref<1x10xf32, #tpu.memory_space<vmem>>, %arg9: memref<10x30xf32, #tpu.memory_space<vmem>>, %arg10: memref<10x30xf32, #tpu.memory_space<vmem>>, %arg11: memref<1x30xf32, #tpu.memory_space<vmem>>, %arg12: memref<1x10xf32, #tpu.memory_space<vmem>>, %arg13: memref<10x20xf32, #tpu.memory_space<vmem>>, %arg14: memref<1x20xf32, #tpu.memory_space<vmem>>, %arg15: memref<20x30xf32, #tpu.memory_space<vmem>>, %arg16: memref<1x30xf32, #tpu.memory_space<vmem>>, %arg17: memref<30x6xf32, #tpu.memory_space<vmem>>, %arg18: memref<1x6xf32, #tpu.memory_space<vmem>>, %arg19: memref<2x6xf32, #tpu.memory_space<vmem>>, %arg20: memref<16x10xf32, #tpu.memory_space<vmem>>) attributes {dimension_semantics = [], scalar_prefetch = 0 : i64, scratch_operands = 1 : i64, tpu.core_type = #tpu.core_type<tc>} {
    %c0 = arith.constant 0 : index
    %c0_0 = arith.constant 0 : index
    %0 = vector.load %arg1[%c0, %c0_0] : memref<4x30xf32, #tpu.memory_space<vmem>>, vector<4x30xf32>
    %c0_1 = arith.constant 0 : index
    %c0_2 = arith.constant 0 : index
    %1 = vector.load %arg2[%c0_1, %c0_2] : memref<10x30xf32, #tpu.memory_space<vmem>>, vector<10x30xf32>
    %c0_3 = arith.constant 0 : index
    %c0_4 = arith.constant 0 : index
    %2 = vector.load %arg3[%c0_3, %c0_4] : memref<1x30xf32, #tpu.memory_space<vmem>>, vector<1x30xf32>
    %c0_5 = arith.constant 0 : index
    %c0_6 = arith.constant 0 : index
    %3 = vector.load %arg4[%c0_5, %c0_6] : memref<1x10xf32, #tpu.memory_space<vmem>>, vector<1x10xf32>
    %c0_7 = arith.constant 0 : index
    %c0_8 = arith.constant 0 : index
    %4 = vector.load %arg0[%c0_7, %c0_8] : memref<16x4xf32, #tpu.memory_space<vmem>>, vector<16x4xf32>
    %cst = arith.constant dense<0.000000e+00> : vector<16x30xf32>
    %5 = tpu.matmul %4, %0, %cst {dimension_numbers = #tpu.dot_dimension_numbers<[1], [0], [0], [1], [0, 0, 1, 1], [], []>} : vector<16x4xf32>, vector<4x30xf32>, vector<16x30xf32> -> vector<16x30xf32>
    %6 = vector.broadcast %2 : vector<1x30xf32> to vector<16x30xf32>
    %7 = arith.addf %5, %6 : vector<16x30xf32>
    %cst_9 = arith.constant 0.000000e+00 : f32
    %8 = vector.broadcast %cst_9 : f32 to vector<2x10xf32>
    %9 = vector.extract_strided_slice %7 {offsets = [0, 0], sizes = [2, 30], strides = [1, 1]} : vector<16x30xf32> to vector<2x30xf32>
    %cst_10 = arith.constant dense<0.000000e+00> : vector<2x30xf32>
    %10 = tpu.matmul %8, %1, %cst_10 {dimension_numbers = #tpu.dot_dimension_numbers<[1], [0], [0], [1], [0, 0, 1, 1], [], []>} : vector<2x10xf32>, vector<10x30xf32>, vector<2x30xf32> -> vector<2x30xf32>
    %11 = vector.extract_strided_slice %9 {offsets = [0, 0], sizes = [2, 10], strides = [1, 1]} : vector<2x30xf32> to vector<2x10xf32>
    %12 = vector.extract_strided_slice %10 {offsets = [0, 0], sizes = [2, 10], strides = [1, 1]} : vector<2x30xf32> to vector<2x10xf32>
    %13 = arith.addf %11, %12 : vector<2x10xf32>
    %14 = arith.negf %13 : vector<2x10xf32>
    %15 = math.exp %14 : vector<2x10xf32>
    %cst_11 = arith.constant 1.000000e+00 : f32
    %16 = vector.broadcast %cst_11 : f32 to vector<2x10xf32>
    %17 = arith.addf %16, %15 : vector<2x10xf32>
    %18 = arith.divf %16, %17 : vector<2x10xf32>
    %19 = vector.extract_strided_slice %9 {offsets = [0, 10], sizes = [2, 10], strides = [1, 1]} : vector<2x30xf32> to vector<2x10xf32>
    %20 = vector.extract_strided_slice %10 {offsets = [0, 10], sizes = [2, 10], strides = [1, 1]} : vector<2x30xf32> to vector<2x10xf32>
    %21 = arith.addf %19, %20 : vector<2x10xf32>
    %22 = arith.negf %21 : vector<2x10xf32>
    %23 = math.exp %22 : vector<2x10xf32>
    %cst_12 = arith.constant 1.000000e+00 : f32
    %24 = vector.broadcast %cst_12 : f32 to vector<2x10xf32>
    %25 = arith.addf %24, %23 : vector<2x10xf32>
    %26 = arith.divf %24, %25 : vector<2x10xf32>
    %27 = vector.extract_strided_slice %9 {offsets = [0, 20], sizes = [2, 10], strides = [1, 1]} : vector<2x30xf32> to vector<2x10xf32>
    %28 = vector.extract_strided_slice %10 {offsets = [0, 20], sizes = [2, 10], strides = [1, 1]} : vector<2x30xf32> to vector<2x10xf32>
    %29 = vector.broadcast %3 : vector<1x10xf32> to vector<2x10xf32>
    %30 = arith.addf %28, %29 : vector<2x10xf32>
    %31 = arith.mulf %18, %30 : vector<2x10xf32>
    %32 = arith.addf %27, %31 : vector<2x10xf32>
    %33 = math.tanh %32 : vector<2x10xf32>
    %cst_13 = arith.constant 1.000000e+00 : f32
    %34 = vector.broadcast %cst_13 : f32 to vector<2x10xf32>
    %35 = arith.subf %34, %26 : vector<2x10xf32>
    %36 = arith.mulf %35, %33 : vector<2x10xf32>
    %37 = arith.mulf %26, %8 : vector<2x10xf32>
    %38 = arith.addf %36, %37 : vector<2x10xf32>
    %c0_14 = arith.constant 0 : index
    %c0_15 = arith.constant 0 : index
    %39 = vector.load %arg20[%c0_14, %c0_15] : memref<16x10xf32, #tpu.memory_space<vmem>>, vector<2x10xf32>
    tpu.vector_store %arg20[%c0_14, %c0_15], %38 {strides = array<i32>} : memref<16x10xf32, #tpu.memory_space<vmem>>, vector<2x10xf32>,
    %40 = vector.extract_strided_slice %7 {offsets = [2, 0], sizes = [2, 30], strides = [1, 1]} : vector<16x30xf32> to vector<2x30xf32>
    %cst_16 = arith.constant dense<0.000000e+00> : vector<2x30xf32>
    %41 = tpu.matmul %38, %1, %cst_16 {dimension_numbers = #tpu.dot_dimension_numbers<[1], [0], [0], [1], [0, 0, 1, 1], [], []>} : vector<2x10xf32>, vector<10x30xf32>, vector<2x30xf32> -> vector<2x30xf32>
    %42 = vector.extract_strided_slice %40 {offsets = [0, 0], sizes = [2, 10], strides = [1, 1]} : vector<2x30xf32> to vector<2x10xf32>
    %43 = vector.extract_strided_slice %41 {offsets = [0, 0], sizes = [2, 10], strides = [1, 1]} : vector<2x30xf32> to vector<2x10xf32>
    %44 = arith.addf %42, %43 : vector<2x10xf32>
    %45 = arith.negf %44 : vector<2x10xf32>
    %46 = math.exp %45 : vector<2x10xf32>
    %cst_17 = arith.constant 1.000000e+00 : f32
    %47 = vector.broadcast %cst_17 : f32 to vector<2x10xf32>
    %48 = arith.addf %47, %46 : vector<2x10xf32>
    %49 = arith.divf %47, %48 : vector<2x10xf32>
    %50 = vector.extract_strided_slice %40 {offsets = [0, 10], sizes = [2, 10], strides = [1, 1]} : vector<2x30xf32> to vector<2x10xf32>
    %51 = vector.extract_strided_slice %41 {offsets = [0, 10], sizes = [2, 10], strides = [1, 1]} : vector<2x30xf32> to vector<2x10xf32>
    %52 = arith.addf %50, %51 : vector<2x10xf32>
    %53 = arith.negf %52 : vector<2x10xf32>
    %54 = math.exp %53 : vector<2x10xf32>
    %cst_18 = arith.constant 1.000000e+00 : f32
    %55 = vector.broadcast %cst_18 : f32 to vector<2x10xf32>
    %56 = arith.addf %55, %54 : vector<2x10xf32>
    %57 = arith.divf %55, %56 : vector<2x10xf32>
    %58 = vector.extract_strided_slice %40 {offsets = [0, 20], sizes = [2, 10], strides = [1, 1]} : vector<2x30xf32> to vector<2x10xf32>
    %59 = vector.extract_strided_slice %41 {offsets = [0, 20], sizes = [2, 10], strides = [1, 1]} : vector<2x30xf32> to vector<2x10xf32>
    %60 = vector.broadcast %3 : vector<1x10xf32> to vector<2x10xf32>
    %61 = arith.addf %59, %60 : vector<2x10xf32>
    %62 = arith.mulf %49, %61 : vector<2x10xf32>
    %63 = arith.addf %58, %62 : vector<2x10xf32>
    %64 = math.tanh %63 : vector<2x10xf32>
    %cst_19 = arith.constant 1.000000e+00 : f32
    %65 = vector.broadcast %cst_19 : f32 to vector<2x10xf32>
    %66 = arith.subf %65, %57 : vector<2x10xf32>
    %67 = arith.mulf %66, %64 : vector<2x10xf32>
    %68 = arith.mulf %57, %38 : vector<2x10xf32>
    %69 = arith.addf %67, %68 : vector<2x10xf32>
    %c2 = arith.constant 2 : index
    %c0_20 = arith.constant 0 : index
    %70 = vector.load %arg20[%c2, %c0_20] : memref<16x10xf32, #tpu.memory_space<vmem>>, vector<2x10xf32>
    tpu.vector_store %arg20[%c2, %c0_20], %69 {strides = array<i32>} : memref<16x10xf32, #tpu.memory_space<vmem>>, vector<2x10xf32>,
    %71 = vector.extract_strided_slice %7 {offsets = [4, 0], sizes = [2, 30], strides = [1, 1]} : vector<16x30xf32> to vector<2x30xf32>
    %cst_21 = arith.constant dense<0.000000e+00> : vector<2x30xf32>
    %72 = tpu.matmul %69, %1, %cst_21 {dimension_numbers = #tpu.dot_dimension_numbers<[1], [0], [0], [1], [0, 0, 1, 1], [], []>} : vector<2x10xf32>, vector<10x30xf32>, vector<2x30xf32> -> vector<2x30xf32>
    %73 = vector.extract_strided_slice %71 {offsets = [0, 0], sizes = [2, 10], strides = [1, 1]} : vector<2x30xf32> to vector<2x10xf32>
    %74 = vector.extract_strided_slice %72 {offsets = [0, 0], sizes = [2, 10], strides = [1, 1]} : vector<2x30xf32> to vector<2x10xf32>
    %75 = arith.addf %73, %74 : vector<2x10xf32>
    %76 = arith.negf %75 : vector<2x10xf32>
    %77 = math.exp %76 : vector<2x10xf32>
    %cst_22 = arith.constant 1.000000e+00 : f32
    %78 = vector.broadcast %cst_22 : f32 to vector<2x10xf32>
    %79 = arith.addf %78, %77 : vector<2x10xf32>
    %80 = arith.divf %78, %79 : vector<2x10xf32>
    %81 = vector.extract_strided_slice %71 {offsets = [0, 10], sizes = [2, 10], strides = [1, 1]} : vector<2x30xf32> to vector<2x10xf32>
    %82 = vector.extract_strided_slice %72 {offsets = [0, 10], sizes = [2, 10], strides = [1, 1]} : vector<2x30xf32> to vector<2x10xf32>
    %83 = arith.addf %81, %82 : vector<2x10xf32>
    %84 = arith.negf %83 : vector<2x10xf32>
    %85 = math.exp %84 : vector<2x10xf32>
    %cst_23 = arith.constant 1.000000e+00 : f32
    %86 = vector.broadcast %cst_23 : f32 to vector<2x10xf32>
    %87 = arith.addf %86, %85 : vector<2x10xf32>
    %88 = arith.divf %86, %87 : vector<2x10xf32>
    %89 = vector.extract_strided_slice %71 {offsets = [0, 20], sizes = [2, 10], strides = [1, 1]} : vector<2x30xf32> to vector<2x10xf32>
    %90 = vector.extract_strided_slice %72 {offsets = [0, 20], sizes = [2, 10], strides = [1, 1]} : vector<2x30xf32> to vector<2x10xf32>
    %91 = vector.broadcast %3 : vector<1x10xf32> to vector<2x10xf32>
    %92 = arith.addf %90, %91 : vector<2x10xf32>
    %93 = arith.mulf %80, %92 : vector<2x10xf32>
    %94 = arith.addf %89, %93 : vector<2x10xf32>
    %95 = math.tanh %94 : vector<2x10xf32>
    %cst_24 = arith.constant 1.000000e+00 : f32
    %96 = vector.broadcast %cst_24 : f32 to vector<2x10xf32>
    %97 = arith.subf %96, %88 : vector<2x10xf32>
    %98 = arith.mulf %97, %95 : vector<2x10xf32>
    %99 = arith.mulf %88, %69 : vector<2x10xf32>
    %100 = arith.addf %98, %99 : vector<2x10xf32>
    %c4 = arith.constant 4 : index
    %c0_25 = arith.constant 0 : index
    %101 = vector.load %arg20[%c4, %c0_25] : memref<16x10xf32, #tpu.memory_space<vmem>>, vector<2x10xf32>
    tpu.vector_store %arg20[%c4, %c0_25], %100 {strides = array<i32>} : memref<16x10xf32, #tpu.memory_space<vmem>>, vector<2x10xf32>,
    %102 = vector.extract_strided_slice %7 {offsets = [6, 0], sizes = [2, 30], strides = [1, 1]} : vector<16x30xf32> to vector<2x30xf32>
    %cst_26 = arith.constant dense<0.000000e+00> : vector<2x30xf32>
    %103 = tpu.matmul %100, %1, %cst_26 {dimension_numbers = #tpu.dot_dimension_numbers<[1], [0], [0], [1], [0, 0, 1, 1], [], []>} : vector<2x10xf32>, vector<10x30xf32>, vector<2x30xf32> -> vector<2x30xf32>
    %104 = vector.extract_strided_slice %102 {offsets = [0, 0], sizes = [2, 10], strides = [1, 1]} : vector<2x30xf32> to vector<2x10xf32>
    %105 = vector.extract_strided_slice %103 {offsets = [0, 0], sizes = [2, 10], strides = [1, 1]} : vector<2x30xf32> to vector<2x10xf32>
    %106 = arith.addf %104, %105 : vector<2x10xf32>
    %107 = arith.negf %106 : vector<2x10xf32>
    %108 = math.exp %107 : vector<2x10xf32>
    %cst_27 = arith.constant 1.000000e+00 : f32
    %109 = vector.broadcast %cst_27 : f32 to vector<2x10xf32>
    %110 = arith.addf %109, %108 : vector<2x10xf32>
    %111 = arith.divf %109, %110 : vector<2x10xf32>
    %112 = vector.extract_strided_slice %102 {offsets = [0, 10], sizes = [2, 10], strides = [1, 1]} : vector<2x30xf32> to vector<2x10xf32>
    %113 = vector.extract_strided_slice %103 {offsets = [0, 10], sizes = [2, 10], strides = [1, 1]} : vector<2x30xf32> to vector<2x10xf32>
    %114 = arith.addf %112, %113 : vector<2x10xf32>
    %115 = arith.negf %114 : vector<2x10xf32>
    %116 = math.exp %115 : vector<2x10xf32>
    %cst_28 = arith.constant 1.000000e+00 : f32
    %117 = vector.broadcast %cst_28 : f32 to vector<2x10xf32>
    %118 = arith.addf %117, %116 : vector<2x10xf32>
    %119 = arith.divf %117, %118 : vector<2x10xf32>
    %120 = vector.extract_strided_slice %102 {offsets = [0, 20], sizes = [2, 10], strides = [1, 1]} : vector<2x30xf32> to vector<2x10xf32>
    %121 = vector.extract_strided_slice %103 {offsets = [0, 20], sizes = [2, 10], strides = [1, 1]} : vector<2x30xf32> to vector<2x10xf32>
    %122 = vector.broadcast %3 : vector<1x10xf32> to vector<2x10xf32>
    %123 = arith.addf %121, %122 : vector<2x10xf32>
    %124 = arith.mulf %111, %123 : vector<2x10xf32>
    %125 = arith.addf %120, %124 : vector<2x10xf32>
    %126 = math.tanh %125 : vector<2x10xf32>
    %cst_29 = arith.constant 1.000000e+00 : f32
    %127 = vector.broadcast %cst_29 : f32 to vector<2x10xf32>
    %128 = arith.subf %127, %119 : vector<2x10xf32>
    %129 = arith.mulf %128, %126 : vector<2x10xf32>
    %130 = arith.mulf %119, %100 : vector<2x10xf32>
    %131 = arith.addf %129, %130 : vector<2x10xf32>
    %c6 = arith.constant 6 : index
    %c0_30 = arith.constant 0 : index
    %132 = vector.load %arg20[%c6, %c0_30] : memref<16x10xf32, #tpu.memory_space<vmem>>, vector<2x10xf32>
    tpu.vector_store %arg20[%c6, %c0_30], %131 {strides = array<i32>} : memref<16x10xf32, #tpu.memory_space<vmem>>, vector<2x10xf32>,
    %133 = vector.extract_strided_slice %7 {offsets = [8, 0], sizes = [2, 30], strides = [1, 1]} : vector<16x30xf32> to vector<2x30xf32>
    %cst_31 = arith.constant dense<0.000000e+00> : vector<2x30xf32>
    %134 = tpu.matmul %131, %1, %cst_31 {dimension_numbers = #tpu.dot_dimension_numbers<[1], [0], [0], [1], [0, 0, 1, 1], [], []>} : vector<2x10xf32>, vector<10x30xf32>, vector<2x30xf32> -> vector<2x30xf32>
    %135 = vector.extract_strided_slice %133 {offsets = [0, 0], sizes = [2, 10], strides = [1, 1]} : vector<2x30xf32> to vector<2x10xf32>
    %136 = vector.extract_strided_slice %134 {offsets = [0, 0], sizes = [2, 10], strides = [1, 1]} : vector<2x30xf32> to vector<2x10xf32>
    %137 = arith.addf %135, %136 : vector<2x10xf32>
    %138 = arith.negf %137 : vector<2x10xf32>
    %139 = math.exp %138 : vector<2x10xf32>
    %cst_32 = arith.constant 1.000000e+00 : f32
    %140 = vector.broadcast %cst_32 : f32 to vector<2x10xf32>
    %141 = arith.addf %140, %139 : vector<2x10xf32>
    %142 = arith.divf %140, %141 : vector<2x10xf32>
    %143 = vector.extract_strided_slice %133 {offsets = [0, 10], sizes = [2, 10], strides = [1, 1]} : vector<2x30xf32> to vector<2x10xf32>
    %144 = vector.extract_strided_slice %134 {offsets = [0, 10], sizes = [2, 10], strides = [1, 1]} : vector<2x30xf32> to vector<2x10xf32>
    %145 = arith.addf %143, %144 : vector<2x10xf32>
    %146 = arith.negf %145 : vector<2x10xf32>
    %147 = math.exp %146 : vector<2x10xf32>
    %cst_33 = arith.constant 1.000000e+00 : f32
    %148 = vector.broadcast %cst_33 : f32 to vector<2x10xf32>
    %149 = arith.addf %148, %147 : vector<2x10xf32>
    %150 = arith.divf %148, %149 : vector<2x10xf32>
    %151 = vector.extract_strided_slice %133 {offsets = [0, 20], sizes = [2, 10], strides = [1, 1]} : vector<2x30xf32> to vector<2x10xf32>
    %152 = vector.extract_strided_slice %134 {offsets = [0, 20], sizes = [2, 10], strides = [1, 1]} : vector<2x30xf32> to vector<2x10xf32>
    %153 = vector.broadcast %3 : vector<1x10xf32> to vector<2x10xf32>
    %154 = arith.addf %152, %153 : vector<2x10xf32>
    %155 = arith.mulf %142, %154 : vector<2x10xf32>
    %156 = arith.addf %151, %155 : vector<2x10xf32>
    %157 = math.tanh %156 : vector<2x10xf32>
    %cst_34 = arith.constant 1.000000e+00 : f32
    %158 = vector.broadcast %cst_34 : f32 to vector<2x10xf32>
    %159 = arith.subf %158, %150 : vector<2x10xf32>
    %160 = arith.mulf %159, %157 : vector<2x10xf32>
    %161 = arith.mulf %150, %131 : vector<2x10xf32>
    %162 = arith.addf %160, %161 : vector<2x10xf32>
    %c8 = arith.constant 8 : index
    %c0_35 = arith.constant 0 : index
    %163 = vector.load %arg20[%c8, %c0_35] : memref<16x10xf32, #tpu.memory_space<vmem>>, vector<2x10xf32>
    tpu.vector_store %arg20[%c8, %c0_35], %162 {strides = array<i32>} : memref<16x10xf32, #tpu.memory_space<vmem>>, vector<2x10xf32>,
    %164 = vector.extract_strided_slice %7 {offsets = [10, 0], sizes = [2, 30], strides = [1, 1]} : vector<16x30xf32> to vector<2x30xf32>
    %cst_36 = arith.constant dense<0.000000e+00> : vector<2x30xf32>
    %165 = tpu.matmul %162, %1, %cst_36 {dimension_numbers = #tpu.dot_dimension_numbers<[1], [0], [0], [1], [0, 0, 1, 1], [], []>} : vector<2x10xf32>, vector<10x30xf32>, vector<2x30xf32> -> vector<2x30xf32>
    %166 = vector.extract_strided_slice %164 {offsets = [0, 0], sizes = [2, 10], strides = [1, 1]} : vector<2x30xf32> to vector<2x10xf32>
    %167 = vector.extract_strided_slice %165 {offsets = [0, 0], sizes = [2, 10], strides = [1, 1]} : vector<2x30xf32> to vector<2x10xf32>
    %168 = arith.addf %166, %167 : vector<2x10xf32>
    %169 = arith.negf %168 : vector<2x10xf32>
    %170 = math.exp %169 : vector<2x10xf32>
    %cst_37 = arith.constant 1.000000e+00 : f32
    %171 = vector.broadcast %cst_37 : f32 to vector<2x10xf32>
    %172 = arith.addf %171, %170 : vector<2x10xf32>
    %173 = arith.divf %171, %172 : vector<2x10xf32>
    %174 = vector.extract_strided_slice %164 {offsets = [0, 10], sizes = [2, 10], strides = [1, 1]} : vector<2x30xf32> to vector<2x10xf32>
    %175 = vector.extract_strided_slice %165 {offsets = [0, 10], sizes = [2, 10], strides = [1, 1]} : vector<2x30xf32> to vector<2x10xf32>
    %176 = arith.addf %174, %175 : vector<2x10xf32>
    %177 = arith.negf %176 : vector<2x10xf32>
    %178 = math.exp %177 : vector<2x10xf32>
    %cst_38 = arith.constant 1.000000e+00 : f32
    %179 = vector.broadcast %cst_38 : f32 to vector<2x10xf32>
    %180 = arith.addf %179, %178 : vector<2x10xf32>
    %181 = arith.divf %179, %180 : vector<2x10xf32>
    %182 = vector.extract_strided_slice %164 {offsets = [0, 20], sizes = [2, 10], strides = [1, 1]} : vector<2x30xf32> to vector<2x10xf32>
    %183 = vector.extract_strided_slice %165 {offsets = [0, 20], sizes = [2, 10], strides = [1, 1]} : vector<2x30xf32> to vector<2x10xf32>
    %184 = vector.broadcast %3 : vector<1x10xf32> to vector<2x10xf32>
    %185 = arith.addf %183, %184 : vector<2x10xf32>
    %186 = arith.mulf %173, %185 : vector<2x10xf32>
    %187 = arith.addf %182, %186 : vector<2x10xf32>
    %188 = math.tanh %187 : vector<2x10xf32>
    %cst_39 = arith.constant 1.000000e+00 : f32
    %189 = vector.broadcast %cst_39 : f32 to vector<2x10xf32>
    %190 = arith.subf %189, %181 : vector<2x10xf32>
    %191 = arith.mulf %190, %188 : vector<2x10xf32>
    %192 = arith.mulf %181, %162 : vector<2x10xf32>
    %193 = arith.addf %191, %192 : vector<2x10xf32>
    %c10 = arith.constant 10 : index
    %c0_40 = arith.constant 0 : index
    %194 = vector.load %arg20[%c10, %c0_40] : memref<16x10xf32, #tpu.memory_space<vmem>>, vector<2x10xf32>
    tpu.vector_store %arg20[%c10, %c0_40], %193 {strides = array<i32>} : memref<16x10xf32, #tpu.memory_space<vmem>>, vector<2x10xf32>,
    %195 = vector.extract_strided_slice %7 {offsets = [12, 0], sizes = [2, 30], strides = [1, 1]} : vector<16x30xf32> to vector<2x30xf32>
    %cst_41 = arith.constant dense<0.000000e+00> : vector<2x30xf32>
    %196 = tpu.matmul %193, %1, %cst_41 {dimension_numbers = #tpu.dot_dimension_numbers<[1], [0], [0], [1], [0, 0, 1, 1], [], []>} : vector<2x10xf32>, vector<10x30xf32>, vector<2x30xf32> -> vector<2x30xf32>
    %197 = vector.extract_strided_slice %195 {offsets = [0, 0], sizes = [2, 10], strides = [1, 1]} : vector<2x30xf32> to vector<2x10xf32>
    %198 = vector.extract_strided_slice %196 {offsets = [0, 0], sizes = [2, 10], strides = [1, 1]} : vector<2x30xf32> to vector<2x10xf32>
    %199 = arith.addf %197, %198 : vector<2x10xf32>
    %200 = arith.negf %199 : vector<2x10xf32>
    %201 = math.exp %200 : vector<2x10xf32>
    %cst_42 = arith.constant 1.000000e+00 : f32
    %202 = vector.broadcast %cst_42 : f32 to vector<2x10xf32>
    %203 = arith.addf %202, %201 : vector<2x10xf32>
    %204 = arith.divf %202, %203 : vector<2x10xf32>
    %205 = vector.extract_strided_slice %195 {offsets = [0, 10], sizes = [2, 10], strides = [1, 1]} : vector<2x30xf32> to vector<2x10xf32>
    %206 = vector.extract_strided_slice %196 {offsets = [0, 10], sizes = [2, 10], strides = [1, 1]} : vector<2x30xf32> to vector<2x10xf32>
    %207 = arith.addf %205, %206 : vector<2x10xf32>
    %208 = arith.negf %207 : vector<2x10xf32>
    %209 = math.exp %208 : vector<2x10xf32>
    %cst_43 = arith.constant 1.000000e+00 : f32
    %210 = vector.broadcast %cst_43 : f32 to vector<2x10xf32>
    %211 = arith.addf %210, %209 : vector<2x10xf32>
    %212 = arith.divf %210, %211 : vector<2x10xf32>
    %213 = vector.extract_strided_slice %195 {offsets = [0, 20], sizes = [2, 10], strides = [1, 1]} : vector<2x30xf32> to vector<2x10xf32>
    %214 = vector.extract_strided_slice %196 {offsets = [0, 20], sizes = [2, 10], strides = [1, 1]} : vector<2x30xf32> to vector<2x10xf32>
    %215 = vector.broadcast %3 : vector<1x10xf32> to vector<2x10xf32>
    %216 = arith.addf %214, %215 : vector<2x10xf32>
    %217 = arith.mulf %204, %216 : vector<2x10xf32>
    %218 = arith.addf %213, %217 : vector<2x10xf32>
    %219 = math.tanh %218 : vector<2x10xf32>
    %cst_44 = arith.constant 1.000000e+00 : f32
    %220 = vector.broadcast %cst_44 : f32 to vector<2x10xf32>
    %221 = arith.subf %220, %212 : vector<2x10xf32>
    %222 = arith.mulf %221, %219 : vector<2x10xf32>
    %223 = arith.mulf %212, %193 : vector<2x10xf32>
    %224 = arith.addf %222, %223 : vector<2x10xf32>
    %c12 = arith.constant 12 : index
    %c0_45 = arith.constant 0 : index
    %225 = vector.load %arg20[%c12, %c0_45] : memref<16x10xf32, #tpu.memory_space<vmem>>, vector<2x10xf32>
    tpu.vector_store %arg20[%c12, %c0_45], %224 {strides = array<i32>} : memref<16x10xf32, #tpu.memory_space<vmem>>, vector<2x10xf32>,
    %226 = vector.extract_strided_slice %7 {offsets = [14, 0], sizes = [2, 30], strides = [1, 1]} : vector<16x30xf32> to vector<2x30xf32>
    %cst_46 = arith.constant dense<0.000000e+00> : vector<2x30xf32>
    %227 = tpu.matmul %224, %1, %cst_46 {dimension_numbers = #tpu.dot_dimension_numbers<[1], [0], [0], [1], [0, 0, 1, 1], [], []>} : vector<2x10xf32>, vector<10x30xf32>, vector<2x30xf32> -> vector<2x30xf32>
    %228 = vector.extract_strided_slice %226 {offsets = [0, 0], sizes = [2, 10], strides = [1, 1]} : vector<2x30xf32> to vector<2x10xf32>
    %229 = vector.extract_strided_slice %227 {offsets = [0, 0], sizes = [2, 10], strides = [1, 1]} : vector<2x30xf32> to vector<2x10xf32>
    %230 = arith.addf %228, %229 : vector<2x10xf32>
    %231 = arith.negf %230 : vector<2x10xf32>
    %232 = math.exp %231 : vector<2x10xf32>
    %cst_47 = arith.constant 1.000000e+00 : f32
    %233 = vector.broadcast %cst_47 : f32 to vector<2x10xf32>
    %234 = arith.addf %233, %232 : vector<2x10xf32>
    %235 = arith.divf %233, %234 : vector<2x10xf32>
    %236 = vector.extract_strided_slice %226 {offsets = [0, 10], sizes = [2, 10], strides = [1, 1]} : vector<2x30xf32> to vector<2x10xf32>
    %237 = vector.extract_strided_slice %227 {offsets = [0, 10], sizes = [2, 10], strides = [1, 1]} : vector<2x30xf32> to vector<2x10xf32>
    %238 = arith.addf %236, %237 : vector<2x10xf32>
    %239 = arith.negf %238 : vector<2x10xf32>
    %240 = math.exp %239 : vector<2x10xf32>
    %cst_48 = arith.constant 1.000000e+00 : f32
    %241 = vector.broadcast %cst_48 : f32 to vector<2x10xf32>
    %242 = arith.addf %241, %240 : vector<2x10xf32>
    %243 = arith.divf %241, %242 : vector<2x10xf32>
    %244 = vector.extract_strided_slice %226 {offsets = [0, 20], sizes = [2, 10], strides = [1, 1]} : vector<2x30xf32> to vector<2x10xf32>
    %245 = vector.extract_strided_slice %227 {offsets = [0, 20], sizes = [2, 10], strides = [1, 1]} : vector<2x30xf32> to vector<2x10xf32>
    %246 = vector.broadcast %3 : vector<1x10xf32> to vector<2x10xf32>
    %247 = arith.addf %245, %246 : vector<2x10xf32>
    %248 = arith.mulf %235, %247 : vector<2x10xf32>
    %249 = arith.addf %244, %248 : vector<2x10xf32>
    %250 = math.tanh %249 : vector<2x10xf32>
    %cst_49 = arith.constant 1.000000e+00 : f32
    %251 = vector.broadcast %cst_49 : f32 to vector<2x10xf32>
    %252 = arith.subf %251, %243 : vector<2x10xf32>
    %253 = arith.mulf %252, %250 : vector<2x10xf32>
    %254 = arith.mulf %243, %224 : vector<2x10xf32>
    %255 = arith.addf %253, %254 : vector<2x10xf32>
    %c14 = arith.constant 14 : index
    %c0_50 = arith.constant 0 : index
    %256 = vector.load %arg20[%c14, %c0_50] : memref<16x10xf32, #tpu.memory_space<vmem>>, vector<2x10xf32>
    tpu.vector_store %arg20[%c14, %c0_50], %255 {strides = array<i32>} : memref<16x10xf32, #tpu.memory_space<vmem>>, vector<2x10xf32>,
    %c0_51 = arith.constant 0 : index
    %c0_52 = arith.constant 0 : index
    %257 = vector.load %arg5[%c0_51, %c0_52] : memref<10x30xf32, #tpu.memory_space<vmem>>, vector<10x30xf32>
    %c0_53 = arith.constant 0 : index
    %c0_54 = arith.constant 0 : index
    %258 = vector.load %arg6[%c0_53, %c0_54] : memref<10x30xf32, #tpu.memory_space<vmem>>, vector<10x30xf32>
    %c0_55 = arith.constant 0 : index
    %c0_56 = arith.constant 0 : index
    %259 = vector.load %arg7[%c0_55, %c0_56] : memref<1x30xf32, #tpu.memory_space<vmem>>, vector<1x30xf32>
    %c0_57 = arith.constant 0 : index
    %c0_58 = arith.constant 0 : index
    %260 = vector.load %arg8[%c0_57, %c0_58] : memref<1x10xf32, #tpu.memory_space<vmem>>, vector<1x10xf32>
    %c0_59 = arith.constant 0 : index
    %c0_60 = arith.constant 0 : index
    %261 = vector.load %arg20[%c0_59, %c0_60] : memref<16x10xf32, #tpu.memory_space<vmem>>, vector<16x10xf32>
    %cst_61 = arith.constant dense<0.000000e+00> : vector<16x30xf32>
    %262 = tpu.matmul %261, %257, %cst_61 {dimension_numbers = #tpu.dot_dimension_numbers<[1], [0], [0], [1], [0, 0, 1, 1], [], []>} : vector<16x10xf32>, vector<10x30xf32>, vector<16x30xf32> -> vector<16x30xf32>
    %263 = vector.broadcast %259 : vector<1x30xf32> to vector<16x30xf32>
    %264 = arith.addf %262, %263 : vector<16x30xf32>
    %cst_62 = arith.constant 0.000000e+00 : f32
    %265 = vector.broadcast %cst_62 : f32 to vector<2x10xf32>
    %266 = vector.extract_strided_slice %264 {offsets = [0, 0], sizes = [2, 30], strides = [1, 1]} : vector<16x30xf32> to vector<2x30xf32>
    %cst_63 = arith.constant dense<0.000000e+00> : vector<2x30xf32>
    %267 = tpu.matmul %265, %258, %cst_63 {dimension_numbers = #tpu.dot_dimension_numbers<[1], [0], [0], [1], [0, 0, 1, 1], [], []>} : vector<2x10xf32>, vector<10x30xf32>, vector<2x30xf32> -> vector<2x30xf32>
    %268 = vector.extract_strided_slice %266 {offsets = [0, 0], sizes = [2, 10], strides = [1, 1]} : vector<2x30xf32> to vector<2x10xf32>
    %269 = vector.extract_strided_slice %267 {offsets = [0, 0], sizes = [2, 10], strides = [1, 1]} : vector<2x30xf32> to vector<2x10xf32>
    %270 = arith.addf %268, %269 : vector<2x10xf32>
    %271 = arith.negf %270 : vector<2x10xf32>
    %272 = math.exp %271 : vector<2x10xf32>
    %cst_64 = arith.constant 1.000000e+00 : f32
    %273 = vector.broadcast %cst_64 : f32 to vector<2x10xf32>
    %274 = arith.addf %273, %272 : vector<2x10xf32>
    %275 = arith.divf %273, %274 : vector<2x10xf32>
    %276 = vector.extract_strided_slice %266 {offsets = [0, 10], sizes = [2, 10], strides = [1, 1]} : vector<2x30xf32> to vector<2x10xf32>
    %277 = vector.extract_strided_slice %267 {offsets = [0, 10], sizes = [2, 10], strides = [1, 1]} : vector<2x30xf32> to vector<2x10xf32>
    %278 = arith.addf %276, %277 : vector<2x10xf32>
    %279 = arith.negf %278 : vector<2x10xf32>
    %280 = math.exp %279 : vector<2x10xf32>
    %cst_65 = arith.constant 1.000000e+00 : f32
    %281 = vector.broadcast %cst_65 : f32 to vector<2x10xf32>
    %282 = arith.addf %281, %280 : vector<2x10xf32>
    %283 = arith.divf %281, %282 : vector<2x10xf32>
    %284 = vector.extract_strided_slice %266 {offsets = [0, 20], sizes = [2, 10], strides = [1, 1]} : vector<2x30xf32> to vector<2x10xf32>
    %285 = vector.extract_strided_slice %267 {offsets = [0, 20], sizes = [2, 10], strides = [1, 1]} : vector<2x30xf32> to vector<2x10xf32>
    %286 = vector.broadcast %260 : vector<1x10xf32> to vector<2x10xf32>
    %287 = arith.addf %285, %286 : vector<2x10xf32>
    %288 = arith.mulf %275, %287 : vector<2x10xf32>
    %289 = arith.addf %284, %288 : vector<2x10xf32>
    %290 = math.tanh %289 : vector<2x10xf32>
    %cst_66 = arith.constant 1.000000e+00 : f32
    %291 = vector.broadcast %cst_66 : f32 to vector<2x10xf32>
    %292 = arith.subf %291, %283 : vector<2x10xf32>
    %293 = arith.mulf %292, %290 : vector<2x10xf32>
    %294 = arith.mulf %283, %265 : vector<2x10xf32>
    %295 = arith.addf %293, %294 : vector<2x10xf32>
    %c0_67 = arith.constant 0 : index
    %c0_68 = arith.constant 0 : index
    %296 = vector.load %arg20[%c0_67, %c0_68] : memref<16x10xf32, #tpu.memory_space<vmem>>, vector<2x10xf32>
    tpu.vector_store %arg20[%c0_67, %c0_68], %295 {strides = array<i32>} : memref<16x10xf32, #tpu.memory_space<vmem>>, vector<2x10xf32>,
    %297 = vector.extract_strided_slice %264 {offsets = [2, 0], sizes = [2, 30], strides = [1, 1]} : vector<16x30xf32> to vector<2x30xf32>
    %cst_69 = arith.constant dense<0.000000e+00> : vector<2x30xf32>
    %298 = tpu.matmul %295, %258, %cst_69 {dimension_numbers = #tpu.dot_dimension_numbers<[1], [0], [0], [1], [0, 0, 1, 1], [], []>} : vector<2x10xf32>, vector<10x30xf32>, vector<2x30xf32> -> vector<2x30xf32>
    %299 = vector.extract_strided_slice %297 {offsets = [0, 0], sizes = [2, 10], strides = [1, 1]} : vector<2x30xf32> to vector<2x10xf32>
    %300 = vector.extract_strided_slice %298 {offsets = [0, 0], sizes = [2, 10], strides = [1, 1]} : vector<2x30xf32> to vector<2x10xf32>
    %301 = arith.addf %299, %300 : vector<2x10xf32>
    %302 = arith.negf %301 : vector<2x10xf32>
    %303 = math.exp %302 : vector<2x10xf32>
    %cst_70 = arith.constant 1.000000e+00 : f32
    %304 = vector.broadcast %cst_70 : f32 to vector<2x10xf32>
    %305 = arith.addf %304, %303 : vector<2x10xf32>
    %306 = arith.divf %304, %305 : vector<2x10xf32>
    %307 = vector.extract_strided_slice %297 {offsets = [0, 10], sizes = [2, 10], strides = [1, 1]} : vector<2x30xf32> to vector<2x10xf32>
    %308 = vector.extract_strided_slice %298 {offsets = [0, 10], sizes = [2, 10], strides = [1, 1]} : vector<2x30xf32> to vector<2x10xf32>
    %309 = arith.addf %307, %308 : vector<2x10xf32>
    %310 = arith.negf %309 : vector<2x10xf32>
    %311 = math.exp %310 : vector<2x10xf32>
    %cst_71 = arith.constant 1.000000e+00 : f32
    %312 = vector.broadcast %cst_71 : f32 to vector<2x10xf32>
    %313 = arith.addf %312, %311 : vector<2x10xf32>
    %314 = arith.divf %312, %313 : vector<2x10xf32>
    %315 = vector.extract_strided_slice %297 {offsets = [0, 20], sizes = [2, 10], strides = [1, 1]} : vector<2x30xf32> to vector<2x10xf32>
    %316 = vector.extract_strided_slice %298 {offsets = [0, 20], sizes = [2, 10], strides = [1, 1]} : vector<2x30xf32> to vector<2x10xf32>
    %317 = vector.broadcast %260 : vector<1x10xf32> to vector<2x10xf32>
    %318 = arith.addf %316, %317 : vector<2x10xf32>
    %319 = arith.mulf %306, %318 : vector<2x10xf32>
    %320 = arith.addf %315, %319 : vector<2x10xf32>
    %321 = math.tanh %320 : vector<2x10xf32>
    %cst_72 = arith.constant 1.000000e+00 : f32
    %322 = vector.broadcast %cst_72 : f32 to vector<2x10xf32>
    %323 = arith.subf %322, %314 : vector<2x10xf32>
    %324 = arith.mulf %323, %321 : vector<2x10xf32>
    %325 = arith.mulf %314, %295 : vector<2x10xf32>
    %326 = arith.addf %324, %325 : vector<2x10xf32>
    %c2_73 = arith.constant 2 : index
    %c0_74 = arith.constant 0 : index
    %327 = vector.load %arg20[%c2_73, %c0_74] : memref<16x10xf32, #tpu.memory_space<vmem>>, vector<2x10xf32>
    tpu.vector_store %arg20[%c2_73, %c0_74], %326 {strides = array<i32>} : memref<16x10xf32, #tpu.memory_space<vmem>>, vector<2x10xf32>,
    %328 = vector.extract_strided_slice %264 {offsets = [4, 0], sizes = [2, 30], strides = [1, 1]} : vector<16x30xf32> to vector<2x30xf32>
    %cst_75 = arith.constant dense<0.000000e+00> : vector<2x30xf32>
    %329 = tpu.matmul %326, %258, %cst_75 {dimension_numbers = #tpu.dot_dimension_numbers<[1], [0], [0], [1], [0, 0, 1, 1], [], []>} : vector<2x10xf32>, vector<10x30xf32>, vector<2x30xf32> -> vector<2x30xf32>
    %330 = vector.extract_strided_slice %328 {offsets = [0, 0], sizes = [2, 10], strides = [1, 1]} : vector<2x30xf32> to vector<2x10xf32>
    %331 = vector.extract_strided_slice %329 {offsets = [0, 0], sizes = [2, 10], strides = [1, 1]} : vector<2x30xf32> to vector<2x10xf32>
    %332 = arith.addf %330, %331 : vector<2x10xf32>
    %333 = arith.negf %332 : vector<2x10xf32>
    %334 = math.exp %333 : vector<2x10xf32>
    %cst_76 = arith.constant 1.000000e+00 : f32
    %335 = vector.broadcast %cst_76 : f32 to vector<2x10xf32>
    %336 = arith.addf %335, %334 : vector<2x10xf32>
    %337 = arith.divf %335, %336 : vector<2x10xf32>
    %338 = vector.extract_strided_slice %328 {offsets = [0, 10], sizes = [2, 10], strides = [1, 1]} : vector<2x30xf32> to vector<2x10xf32>
    %339 = vector.extract_strided_slice %329 {offsets = [0, 10], sizes = [2, 10], strides = [1, 1]} : vector<2x30xf32> to vector<2x10xf32>
    %340 = arith.addf %338, %339 : vector<2x10xf32>
    %341 = arith.negf %340 : vector<2x10xf32>
    %342 = math.exp %341 : vector<2x10xf32>
    %cst_77 = arith.constant 1.000000e+00 : f32
    %343 = vector.broadcast %cst_77 : f32 to vector<2x10xf32>
    %344 = arith.addf %343, %342 : vector<2x10xf32>
    %345 = arith.divf %343, %344 : vector<2x10xf32>
    %346 = vector.extract_strided_slice %328 {offsets = [0, 20], sizes = [2, 10], strides = [1, 1]} : vector<2x30xf32> to vector<2x10xf32>
    %347 = vector.extract_strided_slice %329 {offsets = [0, 20], sizes = [2, 10], strides = [1, 1]} : vector<2x30xf32> to vector<2x10xf32>
    %348 = vector.broadcast %260 : vector<1x10xf32> to vector<2x10xf32>
    %349 = arith.addf %347, %348 : vector<2x10xf32>
    %350 = arith.mulf %337, %349 : vector<2x10xf32>
    %351 = arith.addf %346, %350 : vector<2x10xf32>
    %352 = math.tanh %351 : vector<2x10xf32>
    %cst_78 = arith.constant 1.000000e+00 : f32
    %353 = vector.broadcast %cst_78 : f32 to vector<2x10xf32>
    %354 = arith.subf %353, %345 : vector<2x10xf32>
    %355 = arith.mulf %354, %352 : vector<2x10xf32>
    %356 = arith.mulf %345, %326 : vector<2x10xf32>
    %357 = arith.addf %355, %356 : vector<2x10xf32>
    %c4_79 = arith.constant 4 : index
    %c0_80 = arith.constant 0 : index
    %358 = vector.load %arg20[%c4_79, %c0_80] : memref<16x10xf32, #tpu.memory_space<vmem>>, vector<2x10xf32>
    tpu.vector_store %arg20[%c4_79, %c0_80], %357 {strides = array<i32>} : memref<16x10xf32, #tpu.memory_space<vmem>>, vector<2x10xf32>,
    %359 = vector.extract_strided_slice %264 {offsets = [6, 0], sizes = [2, 30], strides = [1, 1]} : vector<16x30xf32> to vector<2x30xf32>
    %cst_81 = arith.constant dense<0.000000e+00> : vector<2x30xf32>
    %360 = tpu.matmul %357, %258, %cst_81 {dimension_numbers = #tpu.dot_dimension_numbers<[1], [0], [0], [1], [0, 0, 1, 1], [], []>} : vector<2x10xf32>, vector<10x30xf32>, vector<2x30xf32> -> vector<2x30xf32>
    %361 = vector.extract_strided_slice %359 {offsets = [0, 0], sizes = [2, 10], strides = [1, 1]} : vector<2x30xf32> to vector<2x10xf32>
    %362 = vector.extract_strided_slice %360 {offsets = [0, 0], sizes = [2, 10], strides = [1, 1]} : vector<2x30xf32> to vector<2x10xf32>
    %363 = arith.addf %361, %362 : vector<2x10xf32>
    %364 = arith.negf %363 : vector<2x10xf32>
    %365 = math.exp %364 : vector<2x10xf32>
    %cst_82 = arith.constant 1.000000e+00 : f32
    %366 = vector.broadcast %cst_82 : f32 to vector<2x10xf32>
    %367 = arith.addf %366, %365 : vector<2x10xf32>
    %368 = arith.divf %366, %367 : vector<2x10xf32>
    %369 = vector.extract_strided_slice %359 {offsets = [0, 10], sizes = [2, 10], strides = [1, 1]} : vector<2x30xf32> to vector<2x10xf32>
    %370 = vector.extract_strided_slice %360 {offsets = [0, 10], sizes = [2, 10], strides = [1, 1]} : vector<2x30xf32> to vector<2x10xf32>
    %371 = arith.addf %369, %370 : vector<2x10xf32>
    %372 = arith.negf %371 : vector<2x10xf32>
    %373 = math.exp %372 : vector<2x10xf32>
    %cst_83 = arith.constant 1.000000e+00 : f32
    %374 = vector.broadcast %cst_83 : f32 to vector<2x10xf32>
    %375 = arith.addf %374, %373 : vector<2x10xf32>
    %376 = arith.divf %374, %375 : vector<2x10xf32>
    %377 = vector.extract_strided_slice %359 {offsets = [0, 20], sizes = [2, 10], strides = [1, 1]} : vector<2x30xf32> to vector<2x10xf32>
    %378 = vector.extract_strided_slice %360 {offsets = [0, 20], sizes = [2, 10], strides = [1, 1]} : vector<2x30xf32> to vector<2x10xf32>
    %379 = vector.broadcast %260 : vector<1x10xf32> to vector<2x10xf32>
    %380 = arith.addf %378, %379 : vector<2x10xf32>
    %381 = arith.mulf %368, %380 : vector<2x10xf32>
    %382 = arith.addf %377, %381 : vector<2x10xf32>
    %383 = math.tanh %382 : vector<2x10xf32>
    %cst_84 = arith.constant 1.000000e+00 : f32
    %384 = vector.broadcast %cst_84 : f32 to vector<2x10xf32>
    %385 = arith.subf %384, %376 : vector<2x10xf32>
    %386 = arith.mulf %385, %383 : vector<2x10xf32>
    %387 = arith.mulf %376, %357 : vector<2x10xf32>
    %388 = arith.addf %386, %387 : vector<2x10xf32>
    %c6_85 = arith.constant 6 : index
    %c0_86 = arith.constant 0 : index
    %389 = vector.load %arg20[%c6_85, %c0_86] : memref<16x10xf32, #tpu.memory_space<vmem>>, vector<2x10xf32>
    tpu.vector_store %arg20[%c6_85, %c0_86], %388 {strides = array<i32>} : memref<16x10xf32, #tpu.memory_space<vmem>>, vector<2x10xf32>,
    %390 = vector.extract_strided_slice %264 {offsets = [8, 0], sizes = [2, 30], strides = [1, 1]} : vector<16x30xf32> to vector<2x30xf32>
    %cst_87 = arith.constant dense<0.000000e+00> : vector<2x30xf32>
    %391 = tpu.matmul %388, %258, %cst_87 {dimension_numbers = #tpu.dot_dimension_numbers<[1], [0], [0], [1], [0, 0, 1, 1], [], []>} : vector<2x10xf32>, vector<10x30xf32>, vector<2x30xf32> -> vector<2x30xf32>
    %392 = vector.extract_strided_slice %390 {offsets = [0, 0], sizes = [2, 10], strides = [1, 1]} : vector<2x30xf32> to vector<2x10xf32>
    %393 = vector.extract_strided_slice %391 {offsets = [0, 0], sizes = [2, 10], strides = [1, 1]} : vector<2x30xf32> to vector<2x10xf32>
    %394 = arith.addf %392, %393 : vector<2x10xf32>
    %395 = arith.negf %394 : vector<2x10xf32>
    %396 = math.exp %395 : vector<2x10xf32>
    %cst_88 = arith.constant 1.000000e+00 : f32
    %397 = vector.broadcast %cst_88 : f32 to vector<2x10xf32>
    %398 = arith.addf %397, %396 : vector<2x10xf32>
    %399 = arith.divf %397, %398 : vector<2x10xf32>
    %400 = vector.extract_strided_slice %390 {offsets = [0, 10], sizes = [2, 10], strides = [1, 1]} : vector<2x30xf32> to vector<2x10xf32>
    %401 = vector.extract_strided_slice %391 {offsets = [0, 10], sizes = [2, 10], strides = [1, 1]} : vector<2x30xf32> to vector<2x10xf32>
    %402 = arith.addf %400, %401 : vector<2x10xf32>
    %403 = arith.negf %402 : vector<2x10xf32>
    %404 = math.exp %403 : vector<2x10xf32>
    %cst_89 = arith.constant 1.000000e+00 : f32
    %405 = vector.broadcast %cst_89 : f32 to vector<2x10xf32>
    %406 = arith.addf %405, %404 : vector<2x10xf32>
    %407 = arith.divf %405, %406 : vector<2x10xf32>
    %408 = vector.extract_strided_slice %390 {offsets = [0, 20], sizes = [2, 10], strides = [1, 1]} : vector<2x30xf32> to vector<2x10xf32>
    %409 = vector.extract_strided_slice %391 {offsets = [0, 20], sizes = [2, 10], strides = [1, 1]} : vector<2x30xf32> to vector<2x10xf32>
    %410 = vector.broadcast %260 : vector<1x10xf32> to vector<2x10xf32>
    %411 = arith.addf %409, %410 : vector<2x10xf32>
    %412 = arith.mulf %399, %411 : vector<2x10xf32>
    %413 = arith.addf %408, %412 : vector<2x10xf32>
    %414 = math.tanh %413 : vector<2x10xf32>
    %cst_90 = arith.constant 1.000000e+00 : f32
    %415 = vector.broadcast %cst_90 : f32 to vector<2x10xf32>
    %416 = arith.subf %415, %407 : vector<2x10xf32>
    %417 = arith.mulf %416, %414 : vector<2x10xf32>
    %418 = arith.mulf %407, %388 : vector<2x10xf32>
    %419 = arith.addf %417, %418 : vector<2x10xf32>
    %c8_91 = arith.constant 8 : index
    %c0_92 = arith.constant 0 : index
    %420 = vector.load %arg20[%c8_91, %c0_92] : memref<16x10xf32, #tpu.memory_space<vmem>>, vector<2x10xf32>
    tpu.vector_store %arg20[%c8_91, %c0_92], %419 {strides = array<i32>} : memref<16x10xf32, #tpu.memory_space<vmem>>, vector<2x10xf32>,
    %421 = vector.extract_strided_slice %264 {offsets = [10, 0], sizes = [2, 30], strides = [1, 1]} : vector<16x30xf32> to vector<2x30xf32>
    %cst_93 = arith.constant dense<0.000000e+00> : vector<2x30xf32>
    %422 = tpu.matmul %419, %258, %cst_93 {dimension_numbers = #tpu.dot_dimension_numbers<[1], [0], [0], [1], [0, 0, 1, 1], [], []>} : vector<2x10xf32>, vector<10x30xf32>, vector<2x30xf32> -> vector<2x30xf32>
    %423 = vector.extract_strided_slice %421 {offsets = [0, 0], sizes = [2, 10], strides = [1, 1]} : vector<2x30xf32> to vector<2x10xf32>
    %424 = vector.extract_strided_slice %422 {offsets = [0, 0], sizes = [2, 10], strides = [1, 1]} : vector<2x30xf32> to vector<2x10xf32>
    %425 = arith.addf %423, %424 : vector<2x10xf32>
    %426 = arith.negf %425 : vector<2x10xf32>
    %427 = math.exp %426 : vector<2x10xf32>
    %cst_94 = arith.constant 1.000000e+00 : f32
    %428 = vector.broadcast %cst_94 : f32 to vector<2x10xf32>
    %429 = arith.addf %428, %427 : vector<2x10xf32>
    %430 = arith.divf %428, %429 : vector<2x10xf32>
    %431 = vector.extract_strided_slice %421 {offsets = [0, 10], sizes = [2, 10], strides = [1, 1]} : vector<2x30xf32> to vector<2x10xf32>
    %432 = vector.extract_strided_slice %422 {offsets = [0, 10], sizes = [2, 10], strides = [1, 1]} : vector<2x30xf32> to vector<2x10xf32>
    %433 = arith.addf %431, %432 : vector<2x10xf32>
    %434 = arith.negf %433 : vector<2x10xf32>
    %435 = math.exp %434 : vector<2x10xf32>
    %cst_95 = arith.constant 1.000000e+00 : f32
    %436 = vector.broadcast %cst_95 : f32 to vector<2x10xf32>
    %437 = arith.addf %436, %435 : vector<2x10xf32>
    %438 = arith.divf %436, %437 : vector<2x10xf32>
    %439 = vector.extract_strided_slice %421 {offsets = [0, 20], sizes = [2, 10], strides = [1, 1]} : vector<2x30xf32> to vector<2x10xf32>
    %440 = vector.extract_strided_slice %422 {offsets = [0, 20], sizes = [2, 10], strides = [1, 1]} : vector<2x30xf32> to vector<2x10xf32>
    %441 = vector.broadcast %260 : vector<1x10xf32> to vector<2x10xf32>
    %442 = arith.addf %440, %441 : vector<2x10xf32>
    %443 = arith.mulf %430, %442 : vector<2x10xf32>
    %444 = arith.addf %439, %443 : vector<2x10xf32>
    %445 = math.tanh %444 : vector<2x10xf32>
    %cst_96 = arith.constant 1.000000e+00 : f32
    %446 = vector.broadcast %cst_96 : f32 to vector<2x10xf32>
    %447 = arith.subf %446, %438 : vector<2x10xf32>
    %448 = arith.mulf %447, %445 : vector<2x10xf32>
    %449 = arith.mulf %438, %419 : vector<2x10xf32>
    %450 = arith.addf %448, %449 : vector<2x10xf32>
    %c10_97 = arith.constant 10 : index
    %c0_98 = arith.constant 0 : index
    %451 = vector.load %arg20[%c10_97, %c0_98] : memref<16x10xf32, #tpu.memory_space<vmem>>, vector<2x10xf32>
    tpu.vector_store %arg20[%c10_97, %c0_98], %450 {strides = array<i32>} : memref<16x10xf32, #tpu.memory_space<vmem>>, vector<2x10xf32>,
    %452 = vector.extract_strided_slice %264 {offsets = [12, 0], sizes = [2, 30], strides = [1, 1]} : vector<16x30xf32> to vector<2x30xf32>
    %cst_99 = arith.constant dense<0.000000e+00> : vector<2x30xf32>
    %453 = tpu.matmul %450, %258, %cst_99 {dimension_numbers = #tpu.dot_dimension_numbers<[1], [0], [0], [1], [0, 0, 1, 1], [], []>} : vector<2x10xf32>, vector<10x30xf32>, vector<2x30xf32> -> vector<2x30xf32>
    %454 = vector.extract_strided_slice %452 {offsets = [0, 0], sizes = [2, 10], strides = [1, 1]} : vector<2x30xf32> to vector<2x10xf32>
    %455 = vector.extract_strided_slice %453 {offsets = [0, 0], sizes = [2, 10], strides = [1, 1]} : vector<2x30xf32> to vector<2x10xf32>
    %456 = arith.addf %454, %455 : vector<2x10xf32>
    %457 = arith.negf %456 : vector<2x10xf32>
    %458 = math.exp %457 : vector<2x10xf32>
    %cst_100 = arith.constant 1.000000e+00 : f32
    %459 = vector.broadcast %cst_100 : f32 to vector<2x10xf32>
    %460 = arith.addf %459, %458 : vector<2x10xf32>
    %461 = arith.divf %459, %460 : vector<2x10xf32>
    %462 = vector.extract_strided_slice %452 {offsets = [0, 10], sizes = [2, 10], strides = [1, 1]} : vector<2x30xf32> to vector<2x10xf32>
    %463 = vector.extract_strided_slice %453 {offsets = [0, 10], sizes = [2, 10], strides = [1, 1]} : vector<2x30xf32> to vector<2x10xf32>
    %464 = arith.addf %462, %463 : vector<2x10xf32>
    %465 = arith.negf %464 : vector<2x10xf32>
    %466 = math.exp %465 : vector<2x10xf32>
    %cst_101 = arith.constant 1.000000e+00 : f32
    %467 = vector.broadcast %cst_101 : f32 to vector<2x10xf32>
    %468 = arith.addf %467, %466 : vector<2x10xf32>
    %469 = arith.divf %467, %468 : vector<2x10xf32>
    %470 = vector.extract_strided_slice %452 {offsets = [0, 20], sizes = [2, 10], strides = [1, 1]} : vector<2x30xf32> to vector<2x10xf32>
    %471 = vector.extract_strided_slice %453 {offsets = [0, 20], sizes = [2, 10], strides = [1, 1]} : vector<2x30xf32> to vector<2x10xf32>
    %472 = vector.broadcast %260 : vector<1x10xf32> to vector<2x10xf32>
    %473 = arith.addf %471, %472 : vector<2x10xf32>
    %474 = arith.mulf %461, %473 : vector<2x10xf32>
    %475 = arith.addf %470, %474 : vector<2x10xf32>
    %476 = math.tanh %475 : vector<2x10xf32>
    %cst_102 = arith.constant 1.000000e+00 : f32
    %477 = vector.broadcast %cst_102 : f32 to vector<2x10xf32>
    %478 = arith.subf %477, %469 : vector<2x10xf32>
    %479 = arith.mulf %478, %476 : vector<2x10xf32>
    %480 = arith.mulf %469, %450 : vector<2x10xf32>
    %481 = arith.addf %479, %480 : vector<2x10xf32>
    %c12_103 = arith.constant 12 : index
    %c0_104 = arith.constant 0 : index
    %482 = vector.load %arg20[%c12_103, %c0_104] : memref<16x10xf32, #tpu.memory_space<vmem>>, vector<2x10xf32>
    tpu.vector_store %arg20[%c12_103, %c0_104], %481 {strides = array<i32>} : memref<16x10xf32, #tpu.memory_space<vmem>>, vector<2x10xf32>,
    %483 = vector.extract_strided_slice %264 {offsets = [14, 0], sizes = [2, 30], strides = [1, 1]} : vector<16x30xf32> to vector<2x30xf32>
    %cst_105 = arith.constant dense<0.000000e+00> : vector<2x30xf32>
    %484 = tpu.matmul %481, %258, %cst_105 {dimension_numbers = #tpu.dot_dimension_numbers<[1], [0], [0], [1], [0, 0, 1, 1], [], []>} : vector<2x10xf32>, vector<10x30xf32>, vector<2x30xf32> -> vector<2x30xf32>
    %485 = vector.extract_strided_slice %483 {offsets = [0, 0], sizes = [2, 10], strides = [1, 1]} : vector<2x30xf32> to vector<2x10xf32>
    %486 = vector.extract_strided_slice %484 {offsets = [0, 0], sizes = [2, 10], strides = [1, 1]} : vector<2x30xf32> to vector<2x10xf32>
    %487 = arith.addf %485, %486 : vector<2x10xf32>
    %488 = arith.negf %487 : vector<2x10xf32>
    %489 = math.exp %488 : vector<2x10xf32>
    %cst_106 = arith.constant 1.000000e+00 : f32
    %490 = vector.broadcast %cst_106 : f32 to vector<2x10xf32>
    %491 = arith.addf %490, %489 : vector<2x10xf32>
    %492 = arith.divf %490, %491 : vector<2x10xf32>
    %493 = vector.extract_strided_slice %483 {offsets = [0, 10], sizes = [2, 10], strides = [1, 1]} : vector<2x30xf32> to vector<2x10xf32>
    %494 = vector.extract_strided_slice %484 {offsets = [0, 10], sizes = [2, 10], strides = [1, 1]} : vector<2x30xf32> to vector<2x10xf32>
    %495 = arith.addf %493, %494 : vector<2x10xf32>
    %496 = arith.negf %495 : vector<2x10xf32>
    %497 = math.exp %496 : vector<2x10xf32>
    %cst_107 = arith.constant 1.000000e+00 : f32
    %498 = vector.broadcast %cst_107 : f32 to vector<2x10xf32>
    %499 = arith.addf %498, %497 : vector<2x10xf32>
    %500 = arith.divf %498, %499 : vector<2x10xf32>
    %501 = vector.extract_strided_slice %483 {offsets = [0, 20], sizes = [2, 10], strides = [1, 1]} : vector<2x30xf32> to vector<2x10xf32>
    %502 = vector.extract_strided_slice %484 {offsets = [0, 20], sizes = [2, 10], strides = [1, 1]} : vector<2x30xf32> to vector<2x10xf32>
    %503 = vector.broadcast %260 : vector<1x10xf32> to vector<2x10xf32>
    %504 = arith.addf %502, %503 : vector<2x10xf32>
    %505 = arith.mulf %492, %504 : vector<2x10xf32>
    %506 = arith.addf %501, %505 : vector<2x10xf32>
    %507 = math.tanh %506 : vector<2x10xf32>
    %cst_108 = arith.constant 1.000000e+00 : f32
    %508 = vector.broadcast %cst_108 : f32 to vector<2x10xf32>
    %509 = arith.subf %508, %500 : vector<2x10xf32>
    %510 = arith.mulf %509, %507 : vector<2x10xf32>
    %511 = arith.mulf %500, %481 : vector<2x10xf32>
    %512 = arith.addf %510, %511 : vector<2x10xf32>
    %c14_109 = arith.constant 14 : index
    %c0_110 = arith.constant 0 : index
    %513 = vector.load %arg20[%c14_109, %c0_110] : memref<16x10xf32, #tpu.memory_space<vmem>>, vector<2x10xf32>
    tpu.vector_store %arg20[%c14_109, %c0_110], %512 {strides = array<i32>} : memref<16x10xf32, #tpu.memory_space<vmem>>, vector<2x10xf32>,
    %c0_111 = arith.constant 0 : index
    %c0_112 = arith.constant 0 : index
    %514 = vector.load %arg9[%c0_111, %c0_112] : memref<10x30xf32, #tpu.memory_space<vmem>>, vector<10x30xf32>
    %c0_113 = arith.constant 0 : index
    %c0_114 = arith.constant 0 : index
    %515 = vector.load %arg10[%c0_113, %c0_114] : memref<10x30xf32, #tpu.memory_space<vmem>>, vector<10x30xf32>
    %c0_115 = arith.constant 0 : index
    %c0_116 = arith.constant 0 : index
    %516 = vector.load %arg11[%c0_115, %c0_116] : memref<1x30xf32, #tpu.memory_space<vmem>>, vector<1x30xf32>
    %c0_117 = arith.constant 0 : index
    %c0_118 = arith.constant 0 : index
    %517 = vector.load %arg12[%c0_117, %c0_118] : memref<1x10xf32, #tpu.memory_space<vmem>>, vector<1x10xf32>
    %c0_119 = arith.constant 0 : index
    %c0_120 = arith.constant 0 : index
    %518 = vector.load %arg20[%c0_119, %c0_120] : memref<16x10xf32, #tpu.memory_space<vmem>>, vector<16x10xf32>
    %cst_121 = arith.constant dense<0.000000e+00> : vector<16x30xf32>
    %519 = tpu.matmul %518, %514, %cst_121 {dimension_numbers = #tpu.dot_dimension_numbers<[1], [0], [0], [1], [0, 0, 1, 1], [], []>} : vector<16x10xf32>, vector<10x30xf32>, vector<16x30xf32> -> vector<16x30xf32>
    %520 = vector.broadcast %516 : vector<1x30xf32> to vector<16x30xf32>
    %521 = arith.addf %519, %520 : vector<16x30xf32>
    %cst_122 = arith.constant 0.000000e+00 : f32
    %522 = vector.broadcast %cst_122 : f32 to vector<2x10xf32>
    %523 = vector.extract_strided_slice %521 {offsets = [0, 0], sizes = [2, 30], strides = [1, 1]} : vector<16x30xf32> to vector<2x30xf32>
    %cst_123 = arith.constant dense<0.000000e+00> : vector<2x30xf32>
    %524 = tpu.matmul %522, %515, %cst_123 {dimension_numbers = #tpu.dot_dimension_numbers<[1], [0], [0], [1], [0, 0, 1, 1], [], []>} : vector<2x10xf32>, vector<10x30xf32>, vector<2x30xf32> -> vector<2x30xf32>
    %525 = vector.extract_strided_slice %523 {offsets = [0, 0], sizes = [2, 10], strides = [1, 1]} : vector<2x30xf32> to vector<2x10xf32>
    %526 = vector.extract_strided_slice %524 {offsets = [0, 0], sizes = [2, 10], strides = [1, 1]} : vector<2x30xf32> to vector<2x10xf32>
    %527 = arith.addf %525, %526 : vector<2x10xf32>
    %528 = arith.negf %527 : vector<2x10xf32>
    %529 = math.exp %528 : vector<2x10xf32>
    %cst_124 = arith.constant 1.000000e+00 : f32
    %530 = vector.broadcast %cst_124 : f32 to vector<2x10xf32>
    %531 = arith.addf %530, %529 : vector<2x10xf32>
    %532 = arith.divf %530, %531 : vector<2x10xf32>
    %533 = vector.extract_strided_slice %523 {offsets = [0, 10], sizes = [2, 10], strides = [1, 1]} : vector<2x30xf32> to vector<2x10xf32>
    %534 = vector.extract_strided_slice %524 {offsets = [0, 10], sizes = [2, 10], strides = [1, 1]} : vector<2x30xf32> to vector<2x10xf32>
    %535 = arith.addf %533, %534 : vector<2x10xf32>
    %536 = arith.negf %535 : vector<2x10xf32>
    %537 = math.exp %536 : vector<2x10xf32>
    %cst_125 = arith.constant 1.000000e+00 : f32
    %538 = vector.broadcast %cst_125 : f32 to vector<2x10xf32>
    %539 = arith.addf %538, %537 : vector<2x10xf32>
    %540 = arith.divf %538, %539 : vector<2x10xf32>
    %541 = vector.extract_strided_slice %523 {offsets = [0, 20], sizes = [2, 10], strides = [1, 1]} : vector<2x30xf32> to vector<2x10xf32>
    %542 = vector.extract_strided_slice %524 {offsets = [0, 20], sizes = [2, 10], strides = [1, 1]} : vector<2x30xf32> to vector<2x10xf32>
    %543 = vector.broadcast %517 : vector<1x10xf32> to vector<2x10xf32>
    %544 = arith.addf %542, %543 : vector<2x10xf32>
    %545 = arith.mulf %532, %544 : vector<2x10xf32>
    %546 = arith.addf %541, %545 : vector<2x10xf32>
    %547 = math.tanh %546 : vector<2x10xf32>
    %cst_126 = arith.constant 1.000000e+00 : f32
    %548 = vector.broadcast %cst_126 : f32 to vector<2x10xf32>
    %549 = arith.subf %548, %540 : vector<2x10xf32>
    %550 = arith.mulf %549, %547 : vector<2x10xf32>
    %551 = arith.mulf %540, %522 : vector<2x10xf32>
    %552 = arith.addf %550, %551 : vector<2x10xf32>
    %553 = vector.extract_strided_slice %521 {offsets = [2, 0], sizes = [2, 30], strides = [1, 1]} : vector<16x30xf32> to vector<2x30xf32>
    %cst_127 = arith.constant dense<0.000000e+00> : vector<2x30xf32>
    %554 = tpu.matmul %552, %515, %cst_127 {dimension_numbers = #tpu.dot_dimension_numbers<[1], [0], [0], [1], [0, 0, 1, 1], [], []>} : vector<2x10xf32>, vector<10x30xf32>, vector<2x30xf32> -> vector<2x30xf32>
    %555 = vector.extract_strided_slice %553 {offsets = [0, 0], sizes = [2, 10], strides = [1, 1]} : vector<2x30xf32> to vector<2x10xf32>
    %556 = vector.extract_strided_slice %554 {offsets = [0, 0], sizes = [2, 10], strides = [1, 1]} : vector<2x30xf32> to vector<2x10xf32>
    %557 = arith.addf %555, %556 : vector<2x10xf32>
    %558 = arith.negf %557 : vector<2x10xf32>
    %559 = math.exp %558 : vector<2x10xf32>
    %cst_128 = arith.constant 1.000000e+00 : f32
    %560 = vector.broadcast %cst_128 : f32 to vector<2x10xf32>
    %561 = arith.addf %560, %559 : vector<2x10xf32>
    %562 = arith.divf %560, %561 : vector<2x10xf32>
    %563 = vector.extract_strided_slice %553 {offsets = [0, 10], sizes = [2, 10], strides = [1, 1]} : vector<2x30xf32> to vector<2x10xf32>
    %564 = vector.extract_strided_slice %554 {offsets = [0, 10], sizes = [2, 10], strides = [1, 1]} : vector<2x30xf32> to vector<2x10xf32>
    %565 = arith.addf %563, %564 : vector<2x10xf32>
    %566 = arith.negf %565 : vector<2x10xf32>
    %567 = math.exp %566 : vector<2x10xf32>
    %cst_129 = arith.constant 1.000000e+00 : f32
    %568 = vector.broadcast %cst_129 : f32 to vector<2x10xf32>
    %569 = arith.addf %568, %567 : vector<2x10xf32>
    %570 = arith.divf %568, %569 : vector<2x10xf32>
    %571 = vector.extract_strided_slice %553 {offsets = [0, 20], sizes = [2, 10], strides = [1, 1]} : vector<2x30xf32> to vector<2x10xf32>
    %572 = vector.extract_strided_slice %554 {offsets = [0, 20], sizes = [2, 10], strides = [1, 1]} : vector<2x30xf32> to vector<2x10xf32>
    %573 = vector.broadcast %517 : vector<1x10xf32> to vector<2x10xf32>
    %574 = arith.addf %572, %573 : vector<2x10xf32>
    %575 = arith.mulf %562, %574 : vector<2x10xf32>
    %576 = arith.addf %571, %575 : vector<2x10xf32>
    %577 = math.tanh %576 : vector<2x10xf32>
    %cst_130 = arith.constant 1.000000e+00 : f32
    %578 = vector.broadcast %cst_130 : f32 to vector<2x10xf32>
    %579 = arith.subf %578, %570 : vector<2x10xf32>
    %580 = arith.mulf %579, %577 : vector<2x10xf32>
    %581 = arith.mulf %570, %552 : vector<2x10xf32>
    %582 = arith.addf %580, %581 : vector<2x10xf32>
    %583 = vector.extract_strided_slice %521 {offsets = [4, 0], sizes = [2, 30], strides = [1, 1]} : vector<16x30xf32> to vector<2x30xf32>
    %cst_131 = arith.constant dense<0.000000e+00> : vector<2x30xf32>
    %584 = tpu.matmul %582, %515, %cst_131 {dimension_numbers = #tpu.dot_dimension_numbers<[1], [0], [0], [1], [0, 0, 1, 1], [], []>} : vector<2x10xf32>, vector<10x30xf32>, vector<2x30xf32> -> vector<2x30xf32>
    %585 = vector.extract_strided_slice %583 {offsets = [0, 0], sizes = [2, 10], strides = [1, 1]} : vector<2x30xf32> to vector<2x10xf32>
    %586 = vector.extract_strided_slice %584 {offsets = [0, 0], sizes = [2, 10], strides = [1, 1]} : vector<2x30xf32> to vector<2x10xf32>
    %587 = arith.addf %585, %586 : vector<2x10xf32>
    %588 = arith.negf %587 : vector<2x10xf32>
    %589 = math.exp %588 : vector<2x10xf32>
    %cst_132 = arith.constant 1.000000e+00 : f32
    %590 = vector.broadcast %cst_132 : f32 to vector<2x10xf32>
    %591 = arith.addf %590, %589 : vector<2x10xf32>
    %592 = arith.divf %590, %591 : vector<2x10xf32>
    %593 = vector.extract_strided_slice %583 {offsets = [0, 10], sizes = [2, 10], strides = [1, 1]} : vector<2x30xf32> to vector<2x10xf32>
    %594 = vector.extract_strided_slice %584 {offsets = [0, 10], sizes = [2, 10], strides = [1, 1]} : vector<2x30xf32> to vector<2x10xf32>
    %595 = arith.addf %593, %594 : vector<2x10xf32>
    %596 = arith.negf %595 : vector<2x10xf32>
    %597 = math.exp %596 : vector<2x10xf32>
    %cst_133 = arith.constant 1.000000e+00 : f32
    %598 = vector.broadcast %cst_133 : f32 to vector<2x10xf32>
    %599 = arith.addf %598, %597 : vector<2x10xf32>
    %600 = arith.divf %598, %599 : vector<2x10xf32>
    %601 = vector.extract_strided_slice %583 {offsets = [0, 20], sizes = [2, 10], strides = [1, 1]} : vector<2x30xf32> to vector<2x10xf32>
    %602 = vector.extract_strided_slice %584 {offsets = [0, 20], sizes = [2, 10], strides = [1, 1]} : vector<2x30xf32> to vector<2x10xf32>
    %603 = vector.broadcast %517 : vector<1x10xf32> to vector<2x10xf32>
    %604 = arith.addf %602, %603 : vector<2x10xf32>
    %605 = arith.mulf %592, %604 : vector<2x10xf32>
    %606 = arith.addf %601, %605 : vector<2x10xf32>
    %607 = math.tanh %606 : vector<2x10xf32>
    %cst_134 = arith.constant 1.000000e+00 : f32
    %608 = vector.broadcast %cst_134 : f32 to vector<2x10xf32>
    %609 = arith.subf %608, %600 : vector<2x10xf32>
    %610 = arith.mulf %609, %607 : vector<2x10xf32>
    %611 = arith.mulf %600, %582 : vector<2x10xf32>
    %612 = arith.addf %610, %611 : vector<2x10xf32>
    %613 = vector.extract_strided_slice %521 {offsets = [6, 0], sizes = [2, 30], strides = [1, 1]} : vector<16x30xf32> to vector<2x30xf32>
    %cst_135 = arith.constant dense<0.000000e+00> : vector<2x30xf32>
    %614 = tpu.matmul %612, %515, %cst_135 {dimension_numbers = #tpu.dot_dimension_numbers<[1], [0], [0], [1], [0, 0, 1, 1], [], []>} : vector<2x10xf32>, vector<10x30xf32>, vector<2x30xf32> -> vector<2x30xf32>
    %615 = vector.extract_strided_slice %613 {offsets = [0, 0], sizes = [2, 10], strides = [1, 1]} : vector<2x30xf32> to vector<2x10xf32>
    %616 = vector.extract_strided_slice %614 {offsets = [0, 0], sizes = [2, 10], strides = [1, 1]} : vector<2x30xf32> to vector<2x10xf32>
    %617 = arith.addf %615, %616 : vector<2x10xf32>
    %618 = arith.negf %617 : vector<2x10xf32>
    %619 = math.exp %618 : vector<2x10xf32>
    %cst_136 = arith.constant 1.000000e+00 : f32
    %620 = vector.broadcast %cst_136 : f32 to vector<2x10xf32>
    %621 = arith.addf %620, %619 : vector<2x10xf32>
    %622 = arith.divf %620, %621 : vector<2x10xf32>
    %623 = vector.extract_strided_slice %613 {offsets = [0, 10], sizes = [2, 10], strides = [1, 1]} : vector<2x30xf32> to vector<2x10xf32>
    %624 = vector.extract_strided_slice %614 {offsets = [0, 10], sizes = [2, 10], strides = [1, 1]} : vector<2x30xf32> to vector<2x10xf32>
    %625 = arith.addf %623, %624 : vector<2x10xf32>
    %626 = arith.negf %625 : vector<2x10xf32>
    %627 = math.exp %626 : vector<2x10xf32>
    %cst_137 = arith.constant 1.000000e+00 : f32
    %628 = vector.broadcast %cst_137 : f32 to vector<2x10xf32>
    %629 = arith.addf %628, %627 : vector<2x10xf32>
    %630 = arith.divf %628, %629 : vector<2x10xf32>
    %631 = vector.extract_strided_slice %613 {offsets = [0, 20], sizes = [2, 10], strides = [1, 1]} : vector<2x30xf32> to vector<2x10xf32>
    %632 = vector.extract_strided_slice %614 {offsets = [0, 20], sizes = [2, 10], strides = [1, 1]} : vector<2x30xf32> to vector<2x10xf32>
    %633 = vector.broadcast %517 : vector<1x10xf32> to vector<2x10xf32>
    %634 = arith.addf %632, %633 : vector<2x10xf32>
    %635 = arith.mulf %622, %634 : vector<2x10xf32>
    %636 = arith.addf %631, %635 : vector<2x10xf32>
    %637 = math.tanh %636 : vector<2x10xf32>
    %cst_138 = arith.constant 1.000000e+00 : f32
    %638 = vector.broadcast %cst_138 : f32 to vector<2x10xf32>
    %639 = arith.subf %638, %630 : vector<2x10xf32>
    %640 = arith.mulf %639, %637 : vector<2x10xf32>
    %641 = arith.mulf %630, %612 : vector<2x10xf32>
    %642 = arith.addf %640, %641 : vector<2x10xf32>
    %643 = vector.extract_strided_slice %521 {offsets = [8, 0], sizes = [2, 30], strides = [1, 1]} : vector<16x30xf32> to vector<2x30xf32>
    %cst_139 = arith.constant dense<0.000000e+00> : vector<2x30xf32>
    %644 = tpu.matmul %642, %515, %cst_139 {dimension_numbers = #tpu.dot_dimension_numbers<[1], [0], [0], [1], [0, 0, 1, 1], [], []>} : vector<2x10xf32>, vector<10x30xf32>, vector<2x30xf32> -> vector<2x30xf32>
    %645 = vector.extract_strided_slice %643 {offsets = [0, 0], sizes = [2, 10], strides = [1, 1]} : vector<2x30xf32> to vector<2x10xf32>
    %646 = vector.extract_strided_slice %644 {offsets = [0, 0], sizes = [2, 10], strides = [1, 1]} : vector<2x30xf32> to vector<2x10xf32>
    %647 = arith.addf %645, %646 : vector<2x10xf32>
    %648 = arith.negf %647 : vector<2x10xf32>
    %649 = math.exp %648 : vector<2x10xf32>
    %cst_140 = arith.constant 1.000000e+00 : f32
    %650 = vector.broadcast %cst_140 : f32 to vector<2x10xf32>
    %651 = arith.addf %650, %649 : vector<2x10xf32>
    %652 = arith.divf %650, %651 : vector<2x10xf32>
    %653 = vector.extract_strided_slice %643 {offsets = [0, 10], sizes = [2, 10], strides = [1, 1]} : vector<2x30xf32> to vector<2x10xf32>
    %654 = vector.extract_strided_slice %644 {offsets = [0, 10], sizes = [2, 10], strides = [1, 1]} : vector<2x30xf32> to vector<2x10xf32>
    %655 = arith.addf %653, %654 : vector<2x10xf32>
    %656 = arith.negf %655 : vector<2x10xf32>
    %657 = math.exp %656 : vector<2x10xf32>
    %cst_141 = arith.constant 1.000000e+00 : f32
    %658 = vector.broadcast %cst_141 : f32 to vector<2x10xf32>
    %659 = arith.addf %658, %657 : vector<2x10xf32>
    %660 = arith.divf %658, %659 : vector<2x10xf32>
    %661 = vector.extract_strided_slice %643 {offsets = [0, 20], sizes = [2, 10], strides = [1, 1]} : vector<2x30xf32> to vector<2x10xf32>
    %662 = vector.extract_strided_slice %644 {offsets = [0, 20], sizes = [2, 10], strides = [1, 1]} : vector<2x30xf32> to vector<2x10xf32>
    %663 = vector.broadcast %517 : vector<1x10xf32> to vector<2x10xf32>
    %664 = arith.addf %662, %663 : vector<2x10xf32>
    %665 = arith.mulf %652, %664 : vector<2x10xf32>
    %666 = arith.addf %661, %665 : vector<2x10xf32>
    %667 = math.tanh %666 : vector<2x10xf32>
    %cst_142 = arith.constant 1.000000e+00 : f32
    %668 = vector.broadcast %cst_142 : f32 to vector<2x10xf32>
    %669 = arith.subf %668, %660 : vector<2x10xf32>
    %670 = arith.mulf %669, %667 : vector<2x10xf32>
    %671 = arith.mulf %660, %642 : vector<2x10xf32>
    %672 = arith.addf %670, %671 : vector<2x10xf32>
    %673 = vector.extract_strided_slice %521 {offsets = [10, 0], sizes = [2, 30], strides = [1, 1]} : vector<16x30xf32> to vector<2x30xf32>
    %cst_143 = arith.constant dense<0.000000e+00> : vector<2x30xf32>
    %674 = tpu.matmul %672, %515, %cst_143 {dimension_numbers = #tpu.dot_dimension_numbers<[1], [0], [0], [1], [0, 0, 1, 1], [], []>} : vector<2x10xf32>, vector<10x30xf32>, vector<2x30xf32> -> vector<2x30xf32>
    %675 = vector.extract_strided_slice %673 {offsets = [0, 0], sizes = [2, 10], strides = [1, 1]} : vector<2x30xf32> to vector<2x10xf32>
    %676 = vector.extract_strided_slice %674 {offsets = [0, 0], sizes = [2, 10], strides = [1, 1]} : vector<2x30xf32> to vector<2x10xf32>
    %677 = arith.addf %675, %676 : vector<2x10xf32>
    %678 = arith.negf %677 : vector<2x10xf32>
    %679 = math.exp %678 : vector<2x10xf32>
    %cst_144 = arith.constant 1.000000e+00 : f32
    %680 = vector.broadcast %cst_144 : f32 to vector<2x10xf32>
    %681 = arith.addf %680, %679 : vector<2x10xf32>
    %682 = arith.divf %680, %681 : vector<2x10xf32>
    %683 = vector.extract_strided_slice %673 {offsets = [0, 10], sizes = [2, 10], strides = [1, 1]} : vector<2x30xf32> to vector<2x10xf32>
    %684 = vector.extract_strided_slice %674 {offsets = [0, 10], sizes = [2, 10], strides = [1, 1]} : vector<2x30xf32> to vector<2x10xf32>
    %685 = arith.addf %683, %684 : vector<2x10xf32>
    %686 = arith.negf %685 : vector<2x10xf32>
    %687 = math.exp %686 : vector<2x10xf32>
    %cst_145 = arith.constant 1.000000e+00 : f32
    %688 = vector.broadcast %cst_145 : f32 to vector<2x10xf32>
    %689 = arith.addf %688, %687 : vector<2x10xf32>
    %690 = arith.divf %688, %689 : vector<2x10xf32>
    %691 = vector.extract_strided_slice %673 {offsets = [0, 20], sizes = [2, 10], strides = [1, 1]} : vector<2x30xf32> to vector<2x10xf32>
    %692 = vector.extract_strided_slice %674 {offsets = [0, 20], sizes = [2, 10], strides = [1, 1]} : vector<2x30xf32> to vector<2x10xf32>
    %693 = vector.broadcast %517 : vector<1x10xf32> to vector<2x10xf32>
    %694 = arith.addf %692, %693 : vector<2x10xf32>
    %695 = arith.mulf %682, %694 : vector<2x10xf32>
    %696 = arith.addf %691, %695 : vector<2x10xf32>
    %697 = math.tanh %696 : vector<2x10xf32>
    %cst_146 = arith.constant 1.000000e+00 : f32
    %698 = vector.broadcast %cst_146 : f32 to vector<2x10xf32>
    %699 = arith.subf %698, %690 : vector<2x10xf32>
    %700 = arith.mulf %699, %697 : vector<2x10xf32>
    %701 = arith.mulf %690, %672 : vector<2x10xf32>
    %702 = arith.addf %700, %701 : vector<2x10xf32>
    %703 = vector.extract_strided_slice %521 {offsets = [12, 0], sizes = [2, 30], strides = [1, 1]} : vector<16x30xf32> to vector<2x30xf32>
    %cst_147 = arith.constant dense<0.000000e+00> : vector<2x30xf32>
    %704 = tpu.matmul %702, %515, %cst_147 {dimension_numbers = #tpu.dot_dimension_numbers<[1], [0], [0], [1], [0, 0, 1, 1], [], []>} : vector<2x10xf32>, vector<10x30xf32>, vector<2x30xf32> -> vector<2x30xf32>
    %705 = vector.extract_strided_slice %703 {offsets = [0, 0], sizes = [2, 10], strides = [1, 1]} : vector<2x30xf32> to vector<2x10xf32>
    %706 = vector.extract_strided_slice %704 {offsets = [0, 0], sizes = [2, 10], strides = [1, 1]} : vector<2x30xf32> to vector<2x10xf32>
    %707 = arith.addf %705, %706 : vector<2x10xf32>
    %708 = arith.negf %707 : vector<2x10xf32>
    %709 = math.exp %708 : vector<2x10xf32>
    %cst_148 = arith.constant 1.000000e+00 : f32
    %710 = vector.broadcast %cst_148 : f32 to vector<2x10xf32>
    %711 = arith.addf %710, %709 : vector<2x10xf32>
    %712 = arith.divf %710, %711 : vector<2x10xf32>
    %713 = vector.extract_strided_slice %703 {offsets = [0, 10], sizes = [2, 10], strides = [1, 1]} : vector<2x30xf32> to vector<2x10xf32>
    %714 = vector.extract_strided_slice %704 {offsets = [0, 10], sizes = [2, 10], strides = [1, 1]} : vector<2x30xf32> to vector<2x10xf32>
    %715 = arith.addf %713, %714 : vector<2x10xf32>
    %716 = arith.negf %715 : vector<2x10xf32>
    %717 = math.exp %716 : vector<2x10xf32>
    %cst_149 = arith.constant 1.000000e+00 : f32
    %718 = vector.broadcast %cst_149 : f32 to vector<2x10xf32>
    %719 = arith.addf %718, %717 : vector<2x10xf32>
    %720 = arith.divf %718, %719 : vector<2x10xf32>
    %721 = vector.extract_strided_slice %703 {offsets = [0, 20], sizes = [2, 10], strides = [1, 1]} : vector<2x30xf32> to vector<2x10xf32>
    %722 = vector.extract_strided_slice %704 {offsets = [0, 20], sizes = [2, 10], strides = [1, 1]} : vector<2x30xf32> to vector<2x10xf32>
    %723 = vector.broadcast %517 : vector<1x10xf32> to vector<2x10xf32>
    %724 = arith.addf %722, %723 : vector<2x10xf32>
    %725 = arith.mulf %712, %724 : vector<2x10xf32>
    %726 = arith.addf %721, %725 : vector<2x10xf32>
    %727 = math.tanh %726 : vector<2x10xf32>
    %cst_150 = arith.constant 1.000000e+00 : f32
    %728 = vector.broadcast %cst_150 : f32 to vector<2x10xf32>
    %729 = arith.subf %728, %720 : vector<2x10xf32>
    %730 = arith.mulf %729, %727 : vector<2x10xf32>
    %731 = arith.mulf %720, %702 : vector<2x10xf32>
    %732 = arith.addf %730, %731 : vector<2x10xf32>
    %733 = vector.extract_strided_slice %521 {offsets = [14, 0], sizes = [2, 30], strides = [1, 1]} : vector<16x30xf32> to vector<2x30xf32>
    %cst_151 = arith.constant dense<0.000000e+00> : vector<2x30xf32>
    %734 = tpu.matmul %732, %515, %cst_151 {dimension_numbers = #tpu.dot_dimension_numbers<[1], [0], [0], [1], [0, 0, 1, 1], [], []>} : vector<2x10xf32>, vector<10x30xf32>, vector<2x30xf32> -> vector<2x30xf32>
    %735 = vector.extract_strided_slice %733 {offsets = [0, 0], sizes = [2, 10], strides = [1, 1]} : vector<2x30xf32> to vector<2x10xf32>
    %736 = vector.extract_strided_slice %734 {offsets = [0, 0], sizes = [2, 10], strides = [1, 1]} : vector<2x30xf32> to vector<2x10xf32>
    %737 = arith.addf %735, %736 : vector<2x10xf32>
    %738 = arith.negf %737 : vector<2x10xf32>
    %739 = math.exp %738 : vector<2x10xf32>
    %cst_152 = arith.constant 1.000000e+00 : f32
    %740 = vector.broadcast %cst_152 : f32 to vector<2x10xf32>
    %741 = arith.addf %740, %739 : vector<2x10xf32>
    %742 = arith.divf %740, %741 : vector<2x10xf32>
    %743 = vector.extract_strided_slice %733 {offsets = [0, 10], sizes = [2, 10], strides = [1, 1]} : vector<2x30xf32> to vector<2x10xf32>
    %744 = vector.extract_strided_slice %734 {offsets = [0, 10], sizes = [2, 10], strides = [1, 1]} : vector<2x30xf32> to vector<2x10xf32>
    %745 = arith.addf %743, %744 : vector<2x10xf32>
    %746 = arith.negf %745 : vector<2x10xf32>
    %747 = math.exp %746 : vector<2x10xf32>
    %cst_153 = arith.constant 1.000000e+00 : f32
    %748 = vector.broadcast %cst_153 : f32 to vector<2x10xf32>
    %749 = arith.addf %748, %747 : vector<2x10xf32>
    %750 = arith.divf %748, %749 : vector<2x10xf32>
    %751 = vector.extract_strided_slice %733 {offsets = [0, 20], sizes = [2, 10], strides = [1, 1]} : vector<2x30xf32> to vector<2x10xf32>
    %752 = vector.extract_strided_slice %734 {offsets = [0, 20], sizes = [2, 10], strides = [1, 1]} : vector<2x30xf32> to vector<2x10xf32>
    %753 = vector.broadcast %517 : vector<1x10xf32> to vector<2x10xf32>
    %754 = arith.addf %752, %753 : vector<2x10xf32>
    %755 = arith.mulf %742, %754 : vector<2x10xf32>
    %756 = arith.addf %751, %755 : vector<2x10xf32>
    %757 = math.tanh %756 : vector<2x10xf32>
    %cst_154 = arith.constant 1.000000e+00 : f32
    %758 = vector.broadcast %cst_154 : f32 to vector<2x10xf32>
    %759 = arith.subf %758, %750 : vector<2x10xf32>
    %760 = arith.mulf %759, %757 : vector<2x10xf32>
    %761 = arith.mulf %750, %732 : vector<2x10xf32>
    %762 = arith.addf %760, %761 : vector<2x10xf32>
    %c0_155 = arith.constant 0 : index
    %c0_156 = arith.constant 0 : index
    %763 = vector.load %arg13[%c0_155, %c0_156] : memref<10x20xf32, #tpu.memory_space<vmem>>, vector<10x20xf32>
    %cst_157 = arith.constant dense<0.000000e+00> : vector<2x20xf32>
    %764 = tpu.matmul %762, %763, %cst_157 {dimension_numbers = #tpu.dot_dimension_numbers<[1], [0], [0], [1], [0, 0, 1, 1], [], []>} : vector<2x10xf32>, vector<10x20xf32>, vector<2x20xf32> -> vector<2x20xf32>
    %c0_158 = arith.constant 0 : index
    %c0_159 = arith.constant 0 : index
    %765 = vector.load %arg14[%c0_158, %c0_159] : memref<1x20xf32, #tpu.memory_space<vmem>>, vector<1x20xf32>
    %766 = vector.broadcast %765 : vector<1x20xf32> to vector<2x20xf32>
    %767 = arith.addf %764, %766 : vector<2x20xf32>
    %cst_160 = arith.constant 0.000000e+00 : f32
    %768 = vector.broadcast %cst_160 : f32 to vector<2x20xf32>
    %769 = arith.maximumf %767, %768 : vector<2x20xf32>
    %c0_161 = arith.constant 0 : index
    %c0_162 = arith.constant 0 : index
    %770 = vector.load %arg15[%c0_161, %c0_162] : memref<20x30xf32, #tpu.memory_space<vmem>>, vector<20x30xf32>
    %cst_163 = arith.constant dense<0.000000e+00> : vector<2x30xf32>
    %771 = tpu.matmul %769, %770, %cst_163 {dimension_numbers = #tpu.dot_dimension_numbers<[1], [0], [0], [1], [0, 0, 1, 1], [], []>} : vector<2x20xf32>, vector<20x30xf32>, vector<2x30xf32> -> vector<2x30xf32>
    %c0_164 = arith.constant 0 : index
    %c0_165 = arith.constant 0 : index
    %772 = vector.load %arg16[%c0_164, %c0_165] : memref<1x30xf32, #tpu.memory_space<vmem>>, vector<1x30xf32>
    %773 = vector.broadcast %772 : vector<1x30xf32> to vector<2x30xf32>
    %774 = arith.addf %771, %773 : vector<2x30xf32>
    %cst_166 = arith.constant 0.000000e+00 : f32
    %775 = vector.broadcast %cst_166 : f32 to vector<2x30xf32>
    %776 = arith.maximumf %774, %775 : vector<2x30xf32>
    %c0_167 = arith.constant 0 : index
    %c0_168 = arith.constant 0 : index
    %777 = vector.load %arg17[%c0_167, %c0_168] : memref<30x6xf32, #tpu.memory_space<vmem>>, vector<30x6xf32>
    %cst_169 = arith.constant dense<0.000000e+00> : vector<2x6xf32>
    %778 = tpu.matmul %776, %777, %cst_169 {dimension_numbers = #tpu.dot_dimension_numbers<[1], [0], [0], [1], [0, 0, 1, 1], [], []>} : vector<2x30xf32>, vector<30x6xf32>, vector<2x6xf32> -> vector<2x6xf32>
    %c0_170 = arith.constant 0 : index
    %c0_171 = arith.constant 0 : index
    %779 = vector.load %arg18[%c0_170, %c0_171] : memref<1x6xf32, #tpu.memory_space<vmem>>, vector<1x6xf32>
    %780 = vector.broadcast %779 : vector<1x6xf32> to vector<2x6xf32>
    %781 = arith.addf %778, %780 : vector<2x6xf32>
    %c0_172 = arith.constant 0 : index
    %c0_173 = arith.constant 0 : index
    %782 = vector.load %arg19[%c0_172, %c0_173] : memref<2x6xf32, #tpu.memory_space<vmem>>, vector<2x6xf32>
    tpu.vector_store %arg19[%c0_172, %c0_173], %781 {strides = array<i32>} : memref<2x6xf32, #tpu.memory_space<vmem>>, vector<2x6xf32>,
    return
  }
}

</mosaic_0001>

<llo_original>
// kernel: tpu_custom_call.1
$region0: #{tpu_custom_call.1}
  #allocation0 [shape = 'u32[]', space=smem, size = 0x4, offset = 0x4, fixed_abs, tag = 'smem constant byte address 0x4 - core index']
  #allocation1 [shape = 'u32[144,128]{1,0:T(1,128)}', space=vmem, size = 0x12000, scoped, tag = 'internal scratch']
  #allocation2 [shape = 'f32[16,10]{1,0:T(8,128)}', space=vmem, size = 0x2000, scoped, tag = 'scratch operand']
  %s0 = inlined_call_operand.vmem [shape: f32[16,4], index: 0, kind: input, shape index: {}]
  %s1 = inlined_call_operand.hbm [shape: f32[4,30], index: 1, kind: input, shape index: {}]
  %s2 = inlined_call_operand.vmem [shape: f32[10,30], index: 2, kind: input, shape index: {}]
  %s3 = inlined_call_operand.vmem [shape: f32[1,30], index: 3, kind: input, shape index: {}]
  %s4 = inlined_call_operand.hbm [shape: f32[1,10], index: 4, kind: input, shape index: {}]
  %s5 = inlined_call_operand.vmem [shape: f32[10,30], index: 5, kind: input, shape index: {}]
  %s6 = inlined_call_operand.vmem [shape: f32[10,30], index: 6, kind: input, shape index: {}]
  %s7 = inlined_call_operand.hbm [shape: f32[1,30], index: 7, kind: input, shape index: {}]
  %s8 = inlined_call_operand.hbm [shape: f32[1,10], index: 8, kind: input, shape index: {}]
  %s9 = inlined_call_operand.vmem [shape: f32[10,30], index: 9, kind: input, shape index: {}]
  %s10 = inlined_call_operand.hbm [shape: f32[10,30], index: 10, kind: input, shape index: {}]
  %s11 = inlined_call_operand.hbm [shape: f32[1,30], index: 11, kind: input, shape index: {}]
  %s12 = inlined_call_operand.hbm [shape: f32[1,10], index: 12, kind: input, shape index: {}]
  %s13 = inlined_call_operand.vmem [shape: f32[10,20], index: 13, kind: input, shape index: {}]
  %s14 = inlined_call_operand.hbm [shape: f32[1,20], index: 14, kind: input, shape index: {}]
  %s15 = inlined_call_operand.vmem [shape: f32[20,30], index: 15, kind: input, shape index: {}]
  %s16 = inlined_call_operand.vmem [shape: f32[1,30], index: 16, kind: input, shape index: {}]
  %s17 = inlined_call_operand.vmem [shape: f32[30,6], index: 17, kind: input, shape index: {}]
  %s18 = inlined_call_operand.vmem [shape: f32[1,6], index: 18, kind: input, shape index: {}]
  %s19 = inlined_call_operand.hbm [shape: f32[2,6], index: 19, kind: output, shape index: {}]
  %s20 = sld [smem:[#allocation0]]
  $region118: #{tpu_custom_call.1} parent=0
    _
  %s22 = ssub.s32 1, %s20
  %s23 = scalar_select 0, %s22, %s20
  $region1: #{tpu_custom_call.1} parent=0
    #allocation3 [shape = 'u8[2048]{0}', space=vmem, size = 0x800, scoped, tag = 'input window, operand 1, single buffered']
    #allocation4 [shape = 's32[1]{0}', space=sflag, size = 0x4, scoped, tag = 'scoped memory for tpu_custom_call.1']
    #allocation5 [shape = 's32[1]{0}', space=sflag, size = 0x4, scoped, tag = 'scoped memory for tpu_custom_call.1']
    #allocation6 [shape = 'u8[512]{0}', space=vmem, size = 0x400, scoped, tag = 'input window, operand 4, single buffered']
    #allocation7 [shape = 's32[1]{0}', space=sflag, size = 0x4, scoped, tag = 'scoped memory for tpu_custom_call.1']
    #allocation8 [shape = 'u8[512]{0}', space=vmem, size = 0x400, scoped, tag = 'input window, operand 7, single buffered']
    #allocation9 [shape = 'u8[512]{0}', space=vmem, size = 0x400, scoped, tag = 'input window, operand 8, single buffered']
    #allocation10 [shape = 's32[1]{0}', space=sflag, size = 0x4, scoped, tag = 'scoped memory for tpu_custom_call.1']
    #allocation11 [shape = 'u8[8192]{0}', space=vmem, size = 0x2000, scoped, tag = 'input window, operand 10, single buffered']
    #allocation12 [shape = 'u8[512]{0}', space=vmem, size = 0x400, scoped, tag = 'input window, operand 11, single buffered']
    #allocation13 [shape = 's32[1]{0}', space=sflag, size = 0x4, scoped, tag = 'scoped memory for tpu_custom_call.1']
    #allocation14 [shape = 'u8[512]{0}', space=vmem, size = 0x400, scoped, tag = 'input window, operand 12, single buffered']
    #allocation15 [shape = 'u8[512]{0}', space=vmem, size = 0x400, scoped, tag = 'input window, operand 14, single buffered']
    #allocation16 [shape = 's32[1]{0}', space=sflag, size = 0x4, scoped, tag = 'scoped memory for tpu_custom_call.1']
    #allocation17 [shape = 'u8[1024]{0}', space=vmem, size = 0x400, scoped, tag = 'output window, operand 0, single buffered']
    %24 = vsyncpa [#allocation4], 0
    %25 = vsyncpa [#allocation7], 0
    %26 = vsyncpa [#allocation10], 0
    %27 = vsyncpa [#allocation13], 0
    %28 = vsyncpa [#allocation16], 0
    %29 = vsyncpa [#allocation5], 0
    // Predicated region
    $region2: #{tpu_custom_call.1} parent=1 // pred_check
      _
    $region3: #{tpu_custom_call.1} parent=1 // pred_check_branch
      %31 = sbr.rel (0) target = $region5
    $region4: #{tpu_custom_call.1} parent=1 // pred_region
      _
    $region5: #{tpu_custom_call.1} parent=1 // pred_fallthru
      _
    // Predicated region
    $region6: #{tpu_custom_call.1} parent=1 // pred_check
      _
    $region7: #{tpu_custom_call.1} parent=1 // pred_check_branch
      %33 = sbr.rel (0) target = $region9
    $region8: #{tpu_custom_call.1} parent=1 // pred_region
      %s35 = ssub.s32 64, 64
      %36 = vsyncadd [#allocation4], %s35
      %s38 = sshll.u32 [#allocation3], 4
      %s39 = int_to_ptr.vmem [resolvable:$true] %s38
      %41 = dma.hbm_to_vmem [thread:$0]  %s1, 64, %s39, [#allocation4]
    $region9: #{tpu_custom_call.1} parent=1 // pred_fallthru
      _
    // Predicated region
    $region10: #{tpu_custom_call.1} parent=1 // pred_check
      _
    $region11: #{tpu_custom_call.1} parent=1 // pred_check_branch
      %43 = sbr.rel (0) target = $region13
    $region12: #{tpu_custom_call.1} parent=1 // pred_region
      _
    $region13: #{tpu_custom_call.1} parent=1 // pred_fallthru
      _
    // Predicated region
    $region14: #{tpu_custom_call.1} parent=1 // pred_check
      _
    $region15: #{tpu_custom_call.1} parent=1 // pred_check_branch
      %45 = sbr.rel (0) target = $region17
    $region16: #{tpu_custom_call.1} parent=1 // pred_region
      _
    $region17: #{tpu_custom_call.1} parent=1 // pred_fallthru
      _
    // Predicated region
    $region18: #{tpu_custom_call.1} parent=1 // pred_check
      _
    $region19: #{tpu_custom_call.1} parent=1 // pred_check_branch
      %47 = sbr.rel (0) target = $region21
    $region20: #{tpu_custom_call.1} parent=1 // pred_region
      %s49 = ssub.s32 16, 16
      %50 = vsyncadd [#allocation7], %s49
      %s52 = sshll.u32 [#allocation6], 4
      %s53 = int_to_ptr.vmem [resolvable:$true] %s52
      %55 = dma.hbm_to_vmem [thread:$0]  %s4, 16, %s53, [#allocation7]
    $region21: #{tpu_custom_call.1} parent=1 // pred_fallthru
      _
    // Predicated region
    $region22: #{tpu_custom_call.1} parent=1 // pred_check
      _
    $region23: #{tpu_custom_call.1} parent=1 // pred_check_branch
      %57 = sbr.rel (0) target = $region25
    $region24: #{tpu_custom_call.1} parent=1 // pred_region
      _
    $region25: #{tpu_custom_call.1} parent=1 // pred_fallthru
      _
    // Predicated region
    $region26: #{tpu_custom_call.1} parent=1 // pred_check
      _
    $region27: #{tpu_custom_call.1} parent=1 // pred_check_branch
      %59 = sbr.rel (0) target = $region29
    $region28: #{tpu_custom_call.1} parent=1 // pred_region
      _
    $region29: #{tpu_custom_call.1} parent=1 // pred_fallthru
      _
    // Predicated region
    $region30: #{tpu_custom_call.1} parent=1 // pred_check
      _
    $region31: #{tpu_custom_call.1} parent=1 // pred_check_branch
      %61 = sbr.rel (0) target = $region33
    $region32: #{tpu_custom_call.1} parent=1 // pred_region
      %s63 = ssub.s32 16, 16
      %64 = vsyncadd [#allocation7], %s63
      %s66 = sshll.u32 [#allocation8], 4
      %s67 = int_to_ptr.vmem [resolvable:$true] %s66
      %69 = dma.hbm_to_vmem [thread:$0]  %s7, 16, %s67, [#allocation7]
    $region33: #{tpu_custom_call.1} parent=1 // pred_fallthru
      _
    // Predicated region
    $region34: #{tpu_custom_call.1} parent=1 // pred_check
      _
    $region35: #{tpu_custom_call.1} parent=1 // pred_check_branch
      %71 = sbr.rel (0) target = $region37
    $region36: #{tpu_custom_call.1} parent=1 // pred_region
      %s73 = ssub.s32 16, 16
      %74 = vsyncadd [#allocation10], %s73
      %s76 = sshll.u32 [#allocation9], 4
      %s77 = int_to_ptr.vmem [resolvable:$true] %s76
      %79 = dma.hbm_to_vmem [thread:$0]  %s8, 16, %s77, [#allocation10]
    $region37: #{tpu_custom_call.1} parent=1 // pred_fallthru
      _
    // Predicated region
    $region38: #{tpu_custom_call.1} parent=1 // pred_check
      _
    $region39: #{tpu_custom_call.1} parent=1 // pred_check_branch
      %81 = sbr.rel (0) target = $region41
    $region40: #{tpu_custom_call.1} parent=1 // pred_region
      _
    $region41: #{tpu_custom_call.1} parent=1 // pred_fallthru
      _
    // Predicated region
    $region42: #{tpu_custom_call.1} parent=1 // pred_check
      _
    $region43: #{tpu_custom_call.1} parent=1 // pred_check_branch
      %83 = sbr.rel (0) target = $region45
    $region44: #{tpu_custom_call.1} parent=1 // pred_region
      %s85 = ssub.s32 256, 256
      %86 = vsyncadd [#allocation10], %s85
      %s87 = sshll.u32 [#allocation11], 4
      %s88 = int_to_ptr.vmem [resolvable:$true] %s87
      %93 = dma.hbm_to_vmem [thread:$0]  %s10, 256, %s88, [#allocation10], 128, 128, 8
    $region45: #{tpu_custom_call.1} parent=1 // pred_fallthru
      _
    // Predicated region
    $region46: #{tpu_custom_call.1} parent=1 // pred_check
      _
    $region47: #{tpu_custom_call.1} parent=1 // pred_check_branch
      %95 = sbr.rel (0) target = $region49
    $region48: #{tpu_custom_call.1} parent=1 // pred_region
      %s97 = ssub.s32 16, 16
      %98 = vsyncadd [#allocation13], %s97
      %s100 = sshll.u32 [#allocation12], 4
      %s101 = int_to_ptr.vmem [resolvable:$true] %s100
      %103 = dma.hbm_to_vmem [thread:$0]  %s11, 16, %s101, [#allocation13]
    $region49: #{tpu_custom_call.1} parent=1 // pred_fallthru
      _
    // Predicated region
    $region50: #{tpu_custom_call.1} parent=1 // pred_check
      _
    $region51: #{tpu_custom_call.1} parent=1 // pred_check_branch
      %105 = sbr.rel (0) target = $region53
    $region52: #{tpu_custom_call.1} parent=1 // pred_region
      %s107 = ssub.s32 16, 16
      %108 = vsyncadd [#allocation13], %s107
      %s110 = sshll.u32 [#allocation14], 4
      %s111 = int_to_ptr.vmem [resolvable:$true] %s110
      %113 = dma.hbm_to_vmem [thread:$0]  %s12, 16, %s111, [#allocation13]
    $region53: #{tpu_custom_call.1} parent=1 // pred_fallthru
      _
    // Predicated region
    $region54: #{tpu_custom_call.1} parent=1 // pred_check
      _
    $region55: #{tpu_custom_call.1} parent=1 // pred_check_branch
      %115 = sbr.rel (0) target = $region57
    $region56: #{tpu_custom_call.1} parent=1 // pred_region
      _
    $region57: #{tpu_custom_call.1} parent=1 // pred_fallthru
      _
    // Predicated region
    $region58: #{tpu_custom_call.1} parent=1 // pred_check
      _
    $region59: #{tpu_custom_call.1} parent=1 // pred_check_branch
      %117 = sbr.rel (0) target = $region61
    $region60: #{tpu_custom_call.1} parent=1 // pred_region
      %s119 = ssub.s32 16, 16
      %120 = vsyncadd [#allocation16], %s119
      %s122 = sshll.u32 [#allocation15], 4
      %s123 = int_to_ptr.vmem [resolvable:$true] %s122
      %125 = dma.hbm_to_vmem [thread:$0]  %s14, 16, %s123, [#allocation16]
    $region61: #{tpu_custom_call.1} parent=1 // pred_fallthru
      _
    // Predicated region
    $region62: #{tpu_custom_call.1} parent=1 // pred_check
      _
    $region63: #{tpu_custom_call.1} parent=1 // pred_check_branch
      %127 = sbr.rel (0) target = $region65
    $region64: #{tpu_custom_call.1} parent=1 // pred_region
      _
    $region65: #{tpu_custom_call.1} parent=1 // pred_fallthru
      _
    // Predicated region
    $region66: #{tpu_custom_call.1} parent=1 // pred_check
      _
    $region67: #{tpu_custom_call.1} parent=1 // pred_check_branch
      %129 = sbr.rel (0) target = $region69
    $region68: #{tpu_custom_call.1} parent=1 // pred_region
      _
    $region69: #{tpu_custom_call.1} parent=1 // pred_fallthru
      _
    // Predicated region
    $region70: #{tpu_custom_call.1} parent=1 // pred_check
      _
    $region71: #{tpu_custom_call.1} parent=1 // pred_check_branch
      %131 = sbr.rel (0) target = $region73
    $region72: #{tpu_custom_call.1} parent=1 // pred_region
      _
    $region73: #{tpu_custom_call.1} parent=1 // pred_fallthru
      _
    // Predicated region
    $region74: #{tpu_custom_call.1} parent=1 // pred_check
      _
    $region75: #{tpu_custom_call.1} parent=1 // pred_check_branch
      %133 = sbr.rel (0) target = $region77
    $region76: #{tpu_custom_call.1} parent=1 // pred_region
      _
    $region77: #{tpu_custom_call.1} parent=1 // pred_fallthru
      _
    // Predicated region
    $region78: #{tpu_custom_call.1} parent=1 // pred_check
      _
    $region79: #{tpu_custom_call.1} parent=1 // pred_check_branch
      %135 = sbr.rel (0) target = $region81
    $region80: #{tpu_custom_call.1} parent=1 // pred_region
      %136 = dma.done [#allocation4], 64
    $region81: #{tpu_custom_call.1} parent=1 // pred_fallthru
      _
    // Predicated region
    $region82: #{tpu_custom_call.1} parent=1 // pred_check
      _
    $region83: #{tpu_custom_call.1} parent=1 // pred_check_branch
      %138 = sbr.rel (0) target = $region85
    $region84: #{tpu_custom_call.1} parent=1 // pred_region
      %139 = dma.done [#allocation7], 16
    $region85: #{tpu_custom_call.1} parent=1 // pred_fallthru
      _
    // Predicated region
    $region86: #{tpu_custom_call.1} parent=1 // pred_check
      _
    $region87: #{tpu_custom_call.1} parent=1 // pred_check_branch
      %141 = sbr.rel (0) target = $region89
    $region88: #{tpu_custom_call.1} parent=1 // pred_region
      %142 = dma.done [#allocation7], 16
    $region89: #{tpu_custom_call.1} parent=1 // pred_fallthru
      _
    // Predicated region
    $region90: #{tpu_custom_call.1} parent=1 // pred_check
      _
    $region91: #{tpu_custom_call.1} parent=1 // pred_check_branch
      %144 = sbr.rel (0) target = $region93
    $region92: #{tpu_custom_call.1} parent=1 // pred_region
      %145 = dma.done [#allocation10], 16
    $region93: #{tpu_custom_call.1} parent=1 // pred_fallthru
      _
    // Predicated region
    $region94: #{tpu_custom_call.1} parent=1 // pred_check
      _
    $region95: #{tpu_custom_call.1} parent=1 // pred_check_branch
      %147 = sbr.rel (0) target = $region97
    $region96: #{tpu_custom_call.1} parent=1 // pred_region
      %148 = dma.done [#allocation10], 256
    $region97: #{tpu_custom_call.1} parent=1 // pred_fallthru
      _
    // Predicated region
    $region98: #{tpu_custom_call.1} parent=1 // pred_check
      _
    $region99: #{tpu_custom_call.1} parent=1 // pred_check_branch
      %150 = sbr.rel (0) target = $region101
    $region100: #{tpu_custom_call.1} parent=1 // pred_region
      %151 = dma.done [#allocation13], 16
    $region101: #{tpu_custom_call.1} parent=1 // pred_fallthru
      _
    // Predicated region
    $region102: #{tpu_custom_call.1} parent=1 // pred_check
      _
    $region103: #{tpu_custom_call.1} parent=1 // pred_check_branch
      %153 = sbr.rel (0) target = $region105
    $region104: #{tpu_custom_call.1} parent=1 // pred_region
      %154 = dma.done [#allocation13], 16
    $region105: #{tpu_custom_call.1} parent=1 // pred_fallthru
      _
    // Predicated region
    $region106: #{tpu_custom_call.1} parent=1 // pred_check
      _
    $region107: #{tpu_custom_call.1} parent=1 // pred_check_branch
      %156 = sbr.rel (0) target = $region109
    $region108: #{tpu_custom_call.1} parent=1 // pred_region
      %157 = dma.done [#allocation16], 16
    $region109: #{tpu_custom_call.1} parent=1 // pred_fallthru
      _
    %v158 = vld [vmem:[#allocation3] sm:$0xf]
    %v159 = vld [vmem:[%s2] sm:$0xff]
    %v160 = vld [vmem:[%s2 + $0x8] sm:$0x3]
    %v161 = vld [vmem:[%s3] sm:$0x1]
    %v162 = vld [vmem:[#allocation6] sm:$0x1]
    %v163 = vld [vmem:[%s0] sm:$0xff]
    %v164 = vld [vmem:[%s0 + $0x8] sm:$0xff]
    %v166 = vlaneseq
    %v167 = vshrl.u32 %v166, 7
    %v168 = vsub.s32 0, %v167
    %v169 = vrot.slane %v161, %v168
    %vm171 = vcmask 31744
    %v173 = vsel %vm171, %v163, 0
    %v176 = vsel %vm171, %v164, 0
    %vm178 = vcmask 1043456
    %v180 = vsel %vm178, %v158, 0
    %182 = vmatprep.subr.mxu0 0.0
    %183 = vmatpush1.msra.mxu0 %v180
    %184 = vmatprep.subr.mxu0 0.0
    %185 = vmatpush1.msra.mxu0 0.0
    %186 = vmatprep.subr.mxu0 0.0
    %187 = vmatpush1.msra.mxu0 0.0
    %188 = vmatprep.subr.mxu0 0.0
    %189 = vmatpush1.msra.mxu0 0.0
    %190 = vmatprep.subr.mxu0 0.0
    %191 = vmatpush1.msra.mxu0 0.0
    %192 = vmatprep.subr.mxu0 0.0
    %193 = vmatpush1.msra.mxu0 0.0
    %194 = vmatprep.subr.mxu0 0.0
    %195 = vmatpush1.msra.mxu0 0.0
    %196 = vmatprep.subr.mxu0 0.0
    %197 = vmatpush1.msra.mxu0 0.0
    %198 = vmatprep.subr.mxu0 0.0
    %199 = vmatpush1.msra.mxu0 0.0
    %200 = vmatprep.subr.mxu0 0.0
    %201 = vmatpush1.msra.mxu0 0.0
    %202 = vmatprep.subr.mxu0 0.0
    %203 = vmatpush1.msra.mxu0 0.0
    %204 = vmatprep.subr.mxu0 0.0
    %205 = vmatpush1.msra.mxu0 0.0
    %206 = vmatprep.subr.mxu0 0.0
    %207 = vmatpush1.msra.mxu0 0.0
    %208 = vmatprep.subr.mxu0 0.0
    %209 = vmatpush1.msra.mxu0 0.0
    %210 = vmatprep.subr.mxu0 0.0
    %211 = vmatpush1.msra.mxu0 0.0
    %212 = vmatprep.subr.mxu0 0.0
    %213 = vmatpush1.msra.mxu0 0.0
    %214 = vmatprep.subr.mxu0 0.0
    %215 = vmatpush1.msra.mxu0 0.0
    %216 = vmatprep.subr.mxu0 0.0
    %217 = vmatpush1.msra.mxu0 0.0
    %218 = vmatprep.subr.mxu0 0.0
    %219 = vmatpush1.msra.mxu0 0.0
    %220 = vmatprep.subr.mxu0 0.0
    %221 = vmatpush1.msra.mxu0 0.0
    %222 = vmatprep.subr.mxu0 0.0
    %223 = vmatpush1.msra.mxu0 0.0
    %224 = vmatprep.subr.mxu0 0.0
    %225 = vmatpush1.msra.mxu0 0.0
    %226 = vmatprep.subr.mxu0 0.0
    %227 = vmatpush1.msra.mxu0 0.0
    %228 = vmatprep.subr.mxu0 0.0
    %229 = vmatpush1.msra.mxu0 0.0
    %230 = vmatprep.subr.mxu0 0.0
    %231 = vmatpush1.msra.mxu0 0.0
    %232 = vmatprep.subr.mxu0 0.0
    %233 = vmatpush1.msra.mxu0 0.0
    %234 = vmatprep.subr.mxu0 0.0
    %235 = vmatpush1.msra.mxu0 0.0
    %236 = vmatprep.subr.mxu0 0.0
    %237 = vmatpush1.msra.mxu0 0.0
    %238 = vmatprep.subr.mxu0 0.0
    %239 = vmatpush1.msra.mxu0 0.0
    %240 = vmatprep.subr.mxu0 0.0
    %241 = vmatpush1.msra.mxu0 0.0
    %242 = vmatprep.subr.mxu0 0.0
    %243 = vmatpush1.msra.mxu0 0.0
    %244 = vmatprep.subr.mxu0 0.0
    %245 = vmatpush1.msra.mxu0 0.0
    %246 = vmatprep.mubr.f32.mxu0 0.0
    %247 = vmatmul.mubr.f32.gmra.mrb[0].mxu0 %v173
    %v248 = vpop.f32.mrb[0].mxu0
    %v249 = vadd.f32 %v169, %v248
    %v250 = vpop.f32.mrb[0].mxu0
    %251 = vmatprep.mubr.f32.mxu0 0.0
    %252 = vmatmul.mubr.f32.gmra.mrb[0].mxu0 %v176
    %v253 = vpop.f32.mrb[0].mxu0
    %v254 = vadd.f32 %v169, %v253
    %v255 = vpop.f32.mrb[0].mxu0
    %256 = vdwg.mxu0
    %vm257 = vcmask 80896
    %v259 = vsel %vm257, 0.0, 0
    %vm261 = vcmask 1041408
    %v263 = vsel %vm261, %v160, 0
    %265 = vmatprep.subr.mxu0 0.0
    %266 = vmatpush1.msra.mxu0 %v159
    %267 = vmatprep.subr.mxu0 0.0
    %268 = vmatpush1.msra.mxu0 %v263
    %269 = vmatprep.subr.mxu0 0.0
    %270 = vmatpush1.msra.mxu0 0.0
    %271 = vmatprep.subr.mxu0 0.0
    %272 = vmatpush1.msra.mxu0 0.0
    %273 = vmatprep.subr.mxu0 0.0
    %274 = vmatpush1.msra.mxu0 0.0
    %275 = vmatprep.subr.mxu0 0.0
    %276 = vmatpush1.msra.mxu0 0.0
    %277 = vmatprep.subr.mxu0 0.0
    %278 = vmatpush1.msra.mxu0 0.0
    %279 = vmatprep.subr.mxu0 0.0
    %280 = vmatpush1.msra.mxu0 0.0
    %281 = vmatprep.subr.mxu0 0.0
    %282 = vmatpush1.msra.mxu0 0.0
    %283 = vmatprep.subr.mxu0 0.0
    %284 = vmatpush1.msra.mxu0 0.0
    %285 = vmatprep.subr.mxu0 0.0
    %286 = vmatpush1.msra.mxu0 0.0
    %287 = vmatprep.subr.mxu0 0.0
    %288 = vmatpush1.msra.mxu0 0.0
    %289 = vmatprep.subr.mxu0 0.0
    %290 = vmatpush1.msra.mxu0 0.0
    %291 = vmatprep.subr.mxu0 0.0
    %292 = vmatpush1.msra.mxu0 0.0
    %293 = vmatprep.subr.mxu0 0.0
    %294 = vmatpush1.msra.mxu0 0.0
    %295 = vmatprep.subr.mxu0 0.0
    %296 = vmatpush1.msra.mxu0 0.0
    %297 = vmatprep.subr.mxu0 0.0
    %298 = vmatpush1.msra.mxu0 0.0
    %299 = vmatprep.subr.mxu0 0.0
    %300 = vmatpush1.msra.mxu0 0.0
    %301 = vmatprep.subr.mxu0 0.0
    %302 = vmatpush1.msra.mxu0 0.0
    %303 = vmatprep.subr.mxu0 0.0
    %304 = vmatpush1.msra.mxu0 0.0
    %305 = vmatprep.subr.mxu0 0.0
    %306 = vmatpush1.msra.mxu0 0.0
    %307 = vmatprep.subr.mxu0 0.0
    %308 = vmatpush1.msra.mxu0 0.0
    %309 = vmatprep.subr.mxu0 0.0
    %310 = vmatpush1.msra.mxu0 0.0
    %311 = vmatprep.subr.mxu0 0.0
    %312 = vmatpush1.msra.mxu0 0.0
    %313 = vmatprep.subr.mxu0 0.0
    %314 = vmatpush1.msra.mxu0 0.0
    %315 = vmatprep.subr.mxu0 0.0
    %316 = vmatpush1.msra.mxu0 0.0
    %317 = vmatprep.subr.mxu0 0.0
    %318 = vmatpush1.msra.mxu0 0.0
    %319 = vmatprep.subr.mxu0 0.0
    %320 = vmatpush1.msra.mxu0 0.0
    %321 = vmatprep.subr.mxu0 0.0
    %322 = vmatpush1.msra.mxu0 0.0
    %323 = vmatprep.subr.mxu0 0.0
    %324 = vmatpush1.msra.mxu0 0.0
    %325 = vmatprep.subr.mxu0 0.0
    %326 = vmatpush1.msra.mxu0 0.0
    %327 = vmatprep.subr.mxu0 0.0
    %328 = vmatpush1.msra.mxu0 0.0
    %329 = vmatprep.mubr.f32.mxu0 0.0
    %330 = vmatmul.mubr.f32.gmra.mrb[0].mxu0 %v259
    %v331 = vpop.f32.mrb[0].mxu0
    %v332 = vadd.f32 0.0, %v331
    %v333 = vpop.f32.mrb[0].mxu0
    %334 = vdwg.mxu0
    %v335 = vadd.f32 %v249, %v332
    %v336 = vxor.u32 %v335, 2147483648
    %v337 = vmul.f32 %v336, 1.442695
    %v338 = vpow.pop %v337
    %v339 = vadd.f32 %v338, 1.0
    %v340 = vrcp.pop %v339
    %v341 = vmul.f32 1.0, %v340
    %v343 = vlaneseq
    %v344 = vshrl.u32 %v343, 7
    %v345 = vsub.s32 0, %v344
    %v346 = vrot.slane %v162, %v345
    %347 = vrot.lane.b32.xlu0 %v346, 20
    %v348 = vpop.permute.xlu0 %347
    %v350 = vadd.f32 %v332, %v348
    %352 = vrot.lane.b32.xlu0 %v350, 108
    %v353 = vpop.permute.xlu0 %352
    %v355 = vmul.f32 %v341, %v353
    %357 = vrot.lane.b32.xlu0 %v355, 20
    %v358 = vpop.permute.xlu0 %357
    %v360 = vadd.f32 %v249, %v358
    %v361 = vtanh.pop %v360
    %v362 = vsub.f32 1.0, %v341
    %364 = vrot.lane.b32.xlu0 %v361, 118
    %v365 = vpop.permute.xlu0 %364
    %v367 = vmul.f32 %v362, %v365
    %v368 = vmul.f32 %v341, 0.0
    %v369 = vadd.f32 %v367, %v368
    %371 = vrot.lane.b32.xlu0 %v369, 118
    %v372 = vpop.permute.xlu0 %371
    %vm374 = vcmask 74752
    %375 = vst.msk [vmem:[#allocation2] sm:$0x3] %vm374, %v372
    %v376 = vsel %vm257, %v372, 0
    %378 = vmatprep.subr.mxu0 0.0
    %379 = vmatpush1.msra.mxu0 %v159
    %380 = vmatprep.subr.mxu0 0.0
    %381 = vmatpush1.msra.mxu0 %v263
    %382 = vmatprep.subr.mxu0 0.0
    %383 = vmatpush1.msra.mxu0 0.0
    %384 = vmatprep.subr.mxu0 0.0
    %385 = vmatpush1.msra.mxu0 0.0
    %386 = vmatprep.subr.mxu0 0.0
    %387 = vmatpush1.msra.mxu0 0.0
    %388 = vmatprep.subr.mxu0 0.0
    %389 = vmatpush1.msra.mxu0 0.0
    %390 = vmatprep.subr.mxu0 0.0
    %391 = vmatpush1.msra.mxu0 0.0
    %392 = vmatprep.subr.mxu0 0.0
    %393 = vmatpush1.msra.mxu0 0.0
    %394 = vmatprep.subr.mxu0 0.0
    %395 = vmatpush1.msra.mxu0 0.0
    %396 = vmatprep.subr.mxu0 0.0
    %397 = vmatpush1.msra.mxu0 0.0
    %398 = vmatprep.subr.mxu0 0.0
    %399 = vmatpush1.msra.mxu0 0.0
    %400 = vmatprep.subr.mxu0 0.0
    %401 = vmatpush1.msra.mxu0 0.0
    %402 = vmatprep.subr.mxu0 0.0
    %403 = vmatpush1.msra.mxu0 0.0
    %404 = vmatprep.subr.mxu0 0.0
    %405 = vmatpush1.msra.mxu0 0.0
    %406 = vmatprep.subr.mxu0 0.0
    %407 = vmatpush1.msra.mxu0 0.0
    %408 = vmatprep.subr.mxu0 0.0
    %409 = vmatpush1.msra.mxu0 0.0
    %410 = vmatprep.subr.mxu0 0.0
    %411 = vmatpush1.msra.mxu0 0.0
    %412 = vmatprep.subr.mxu0 0.0
    %413 = vmatpush1.msra.mxu0 0.0
    %414 = vmatprep.subr.mxu0 0.0
    %415 = vmatpush1.msra.mxu0 0.0
    %416 = vmatprep.subr.mxu0 0.0
    %417 = vmatpush1.msra.mxu0 0.0
    %418 = vmatprep.subr.mxu0 0.0
    %419 = vmatpush1.msra.mxu0 0.0
    %420 = vmatprep.subr.mxu0 0.0
    %421 = vmatpush1.msra.mxu0 0.0
    %422 = vmatprep.subr.mxu0 0.0
    %423 = vmatpush1.msra.mxu0 0.0
    %424 = vmatprep.subr.mxu0 0.0
    %425 = vmatpush1.msra.mxu0 0.0
    %426 = vmatprep.subr.mxu0 0.0
    %427 = vmatpush1.msra.mxu0 0.0
    %428 = vmatprep.subr.mxu0 0.0
    %429 = vmatpush1.msra.mxu0 0.0
    %430 = vmatprep.subr.mxu0 0.0
    %431 = vmatpush1.msra.mxu0 0.0
    %432 = vmatprep.subr.mxu0 0.0
    %433 = vmatpush1.msra.mxu0 0.0
    %434 = vmatprep.subr.mxu0 0.0
    %435 = vmatpush1.msra.mxu0 0.0
    %436 = vmatprep.subr.mxu0 0.0
    %437 = vmatpush1.msra.mxu0 0.0
    %438 = vmatprep.subr.mxu0 0.0
    %439 = vmatpush1.msra.mxu0 0.0
    %440 = vmatprep.subr.mxu0 0.0
    %441 = vmatpush1.msra.mxu0 0.0
    %442 = vmatprep.mubr.f32.mxu0 0.0
    %443 = vmatmul.mubr.f32.gmra.mrb[0].mxu0 %v376
    %v444 = vpop.f32.mrb[0].mxu0
    %v445 = vadd.f32 0.0, %v444
    %v446 = vpop.f32.mrb[0].mxu0
    %447 = vdwg.mxu0
    %v449 = vrot.slane %v445, 6
    %v451 = vadd.f32 %v249, %v449
    %v452 = vxor.u32 %v451, 2147483648
    %v453 = vmul.f32 %v452, 1.442695
    %v454 = vpow.pop %v453
    %v455 = vadd.f32 %v454, 1.0
    %v456 = vrcp.pop %v455
    %v457 = vmul.f32 1.0, %v456
    %v458 = vadd.f32 %v445, %v348
    %v460 = vrot.slane %v458, 6
    %461 = vrot.lane.b32.xlu0 %v460, 108
    %v462 = vpop.permute.xlu0 %461
    %v464 = vmul.f32 %v457, %v462
    %466 = vrot.lane.b32.xlu0 %v464, 20
    %v467 = vpop.permute.xlu0 %466
    %v469 = vadd.f32 %v249, %v467
    %v470 = vtanh.pop %v469
    %v471 = vsub.f32 1.0, %v457
    %473 = vrot.lane.b32.xlu0 %v470, 118
    %v474 = vpop.permute.xlu0 %473
    %v476 = vmul.f32 %v471, %v474
    %v477 = vrot.slane %v369, 6
    %v479 = vmul.f32 %v457, %v477
    %v480 = vadd.f32 %v476, %v479
    %482 = vrot.lane.b32.xlu0 %v480, 118
    %v483 = vpop.permute.xlu0 %482
    %vm485 = vcmask 76802
    %486 = vst.msk [vmem:[#allocation2] sm:$0xc] %vm485, %v483
    %v487 = vrot.slane %v480, 2
    %488 = vrot.lane.b32.xlu0 %v487, 118
    %v489 = vpop.permute.xlu0 %488
    %v490 = vsel %vm257, %v489, 0
    %492 = vmatprep.subr.mxu0 0.0
    %493 = vmatpush1.msra.mxu0 %v159
    %494 = vmatprep.subr.mxu0 0.0
    %495 = vmatpush1.msra.mxu0 %v263
    %496 = vmatprep.subr.mxu0 0.0
    %497 = vmatpush1.msra.mxu0 0.0
    %498 = vmatprep.subr.mxu0 0.0
    %499 = vmatpush1.msra.mxu0 0.0
    %500 = vmatprep.subr.mxu0 0.0
    %501 = vmatpush1.msra.mxu0 0.0
    %502 = vmatprep.subr.mxu0 0.0
    %503 = vmatpush1.msra.mxu0 0.0
    %504 = vmatprep.subr.mxu0 0.0
    %505 = vmatpush1.msra.mxu0 0.0
    %506 = vmatprep.subr.mxu0 0.0
    %507 = vmatpush1.msra.mxu0 0.0
    %508 = vmatprep.subr.mxu0 0.0
    %509 = vmatpush1.msra.mxu0 0.0
    %510 = vmatprep.subr.mxu0 0.0
    %511 = vmatpush1.msra.mxu0 0.0
    %512 = vmatprep.subr.mxu0 0.0
    %513 = vmatpush1.msra.mxu0 0.0
    %514 = vmatprep.subr.mxu0 0.0
    %515 = vmatpush1.msra.mxu0 0.0
    %516 = vmatprep.subr.mxu0 0.0
    %517 = vmatpush1.msra.mxu0 0.0
    %518 = vmatprep.subr.mxu0 0.0
    %519 = vmatpush1.msra.mxu0 0.0
    %520 = vmatprep.subr.mxu0 0.0
    %521 = vmatpush1.msra.mxu0 0.0
    %522 = vmatprep.subr.mxu0 0.0
    %523 = vmatpush1.msra.mxu0 0.0
    %524 = vmatprep.subr.mxu0 0.0
    %525 = vmatpush1.msra.mxu0 0.0
    %526 = vmatprep.subr.mxu0 0.0
    %527 = vmatpush1.msra.mxu0 0.0
    %528 = vmatprep.subr.mxu0 0.0
    %529 = vmatpush1.msra.mxu0 0.0
    %530 = vmatprep.subr.mxu0 0.0
    %531 = vmatpush1.msra.mxu0 0.0
    %532 = vmatprep.subr.mxu0 0.0
    %533 = vmatpush1.msra.mxu0 0.0
    %534 = vmatprep.subr.mxu0 0.0
    %535 = vmatpush1.msra.mxu0 0.0
    %536 = vmatprep.subr.mxu0 0.0
    %537 = vmatpush1.msra.mxu0 0.0
    %538 = vmatprep.subr.mxu0 0.0
    %539 = vmatpush1.msra.mxu0 0.0
    %540 = vmatprep.subr.mxu0 0.0
    %541 = vmatpush1.msra.mxu0 0.0
    %542 = vmatprep.subr.mxu0 0.0
    %543 = vmatpush1.msra.mxu0 0.0
    %544 = vmatprep.subr.mxu0 0.0
    %545 = vmatpush1.msra.mxu0 0.0
    %546 = vmatprep.subr.mxu0 0.0
    %547 = vmatpush1.msra.mxu0 0.0
    %548 = vmatprep.subr.mxu0 0.0
    %549 = vmatpush1.msra.mxu0 0.0
    %550 = vmatprep.subr.mxu0 0.0
    %551 = vmatpush1.msra.mxu0 0.0
    %552 = vmatprep.subr.mxu0 0.0
    %553 = vmatpush1.msra.mxu0 0.0
    %554 = vmatprep.subr.mxu0 0.0
    %555 = vmatpush1.msra.mxu0 0.0
    %556 = vmatprep.mubr.f32.mxu0 0.0
    %557 = vmatmul.mubr.f32.gmra.mrb[0].mxu0 %v490
    %v558 = vpop.f32.mrb[0].mxu0
    %v559 = vadd.f32 0.0, %v558
    %v560 = vpop.f32.mrb[0].mxu0
    %561 = vdwg.mxu0
    %v563 = vrot.slane %v559, 4
    %v565 = vadd.f32 %v249, %v563
    %v566 = vxor.u32 %v565, 2147483648
    %v567 = vmul.f32 %v566, 1.442695
    %v568 = vpow.pop %v567
    %v569 = vadd.f32 %v568, 1.0
    %v570 = vrcp.pop %v569
    %v571 = vmul.f32 1.0, %v570
    %v572 = vadd.f32 %v559, %v348
    %v574 = vrot.slane %v572, 4
    %575 = vrot.lane.b32.xlu0 %v574, 108
    %v576 = vpop.permute.xlu0 %575
    %v578 = vmul.f32 %v571, %v576
    %580 = vrot.lane.b32.xlu0 %v578, 20
    %v581 = vpop.permute.xlu0 %580
    %v583 = vadd.f32 %v249, %v581
    %v584 = vtanh.pop %v583
    %v585 = vsub.f32 1.0, %v571
    %587 = vrot.lane.b32.xlu0 %v584, 118
    %v588 = vpop.permute.xlu0 %587
    %v590 = vmul.f32 %v585, %v588
    %v591 = vrot.slane %v480, 6
    %v593 = vmul.f32 %v571, %v591
    %v594 = vadd.f32 %v590, %v593
    %596 = vrot.lane.b32.xlu0 %v594, 118
    %v597 = vpop.permute.xlu0 %596
    %vm599 = vcmask 78852
    %600 = vst.msk [vmem:[#allocation2] sm:$0x30] %vm599, %v597
    %v601 = vrot.slane %v594, 4
    %602 = vrot.lane.b32.xlu0 %v601, 118
    %v603 = vpop.permute.xlu0 %602
    %v604 = vsel %vm257, %v603, 0
    %606 = vmatprep.subr.mxu0 0.0
    %607 = vmatpush1.msra.mxu0 %v159
    %608 = vmatprep.subr.mxu0 0.0
    %609 = vmatpush1.msra.mxu0 %v263
    %610 = vmatprep.subr.mxu0 0.0
    %611 = vmatpush1.msra.mxu0 0.0
    %612 = vmatprep.subr.mxu0 0.0
    %613 = vmatpush1.msra.mxu0 0.0
    %614 = vmatprep.subr.mxu0 0.0
    %615 = vmatpush1.msra.mxu0 0.0
    %616 = vmatprep.subr.mxu0 0.0
    %617 = vmatpush1.msra.mxu0 0.0
    %618 = vmatprep.subr.mxu0 0.0
    %619 = vmatpush1.msra.mxu0 0.0
    %620 = vmatprep.subr.mxu0 0.0
    %621 = vmatpush1.msra.mxu0 0.0
    %622 = vmatprep.subr.mxu0 0.0
    %623 = vmatpush1.msra.mxu0 0.0
    %624 = vmatprep.subr.mxu0 0.0
    %625 = vmatpush1.msra.mxu0 0.0
    %626 = vmatprep.subr.mxu0 0.0
    %627 = vmatpush1.msra.mxu0 0.0
    %628 = vmatprep.subr.mxu0 0.0
    %629 = vmatpush1.msra.mxu0 0.0
    %630 = vmatprep.subr.mxu0 0.0
    %631 = vmatpush1.msra.mxu0 0.0
    %632 = vmatprep.subr.mxu0 0.0
    %633 = vmatpush1.msra.mxu0 0.0
    %634 = vmatprep.subr.mxu0 0.0
    %635 = vmatpush1.msra.mxu0 0.0
    %636 = vmatprep.subr.mxu0 0.0
    %637 = vmatpush1.msra.mxu0 0.0
    %638 = vmatprep.subr.mxu0 0.0
    %639 = vmatpush1.msra.mxu0 0.0
    %640 = vmatprep.subr.mxu0 0.0
    %641 = vmatpush1.msra.mxu0 0.0
    %642 = vmatprep.subr.mxu0 0.0
    %643 = vmatpush1.msra.mxu0 0.0
    %644 = vmatprep.subr.mxu0 0.0
    %645 = vmatpush1.msra.mxu0 0.0
    %646 = vmatprep.subr.mxu0 0.0
    %647 = vmatpush1.msra.mxu0 0.0
    %648 = vmatprep.subr.mxu0 0.0
    %649 = vmatpush1.msra.mxu0 0.0
    %650 = vmatprep.subr.mxu0 0.0
    %651 = vmatpush1.msra.mxu0 0.0
    %652 = vmatprep.subr.mxu0 0.0
    %653 = vmatpush1.msra.mxu0 0.0
    %654 = vmatprep.subr.mxu0 0.0
    %655 = vmatpush1.msra.mxu0 0.0
    %656 = vmatprep.subr.mxu0 0.0
    %657 = vmatpush1.msra.mxu0 0.0
    %658 = vmatprep.subr.mxu0 0.0
    %659 = vmatpush1.msra.mxu0 0.0
    %660 = vmatprep.subr.mxu0 0.0
    %661 = vmatpush1.msra.mxu0 0.0
    %662 = vmatprep.subr.mxu0 0.0
    %663 = vmatpush1.msra.mxu0 0.0
    %664 = vmatprep.subr.mxu0 0.0
    %665 = vmatpush1.msra.mxu0 0.0
    %666 = vmatprep.subr.mxu0 0.0
    %667 = vmatpush1.msra.mxu0 0.0
    %668 = vmatprep.subr.mxu0 0.0
    %669 = vmatpush1.msra.mxu0 0.0
    %670 = vmatprep.mubr.f32.mxu0 0.0
    %671 = vmatmul.mubr.f32.gmra.mrb[0].mxu0 %v604
    %v672 = vpop.f32.mrb[0].mxu0
    %v673 = vadd.f32 0.0, %v672
    %v674 = vpop.f32.mrb[0].mxu0
    %675 = vdwg.mxu0
    %v677 = vrot.slane %v673, 2
    %v679 = vadd.f32 %v249, %v677
    %v680 = vxor.u32 %v679, 2147483648
    %v681 = vmul.f32 %v680, 1.442695
    %v682 = vpow.pop %v681
    %v683 = vadd.f32 %v682, 1.0
    %v684 = vrcp.pop %v683
    %v685 = vmul.f32 1.0, %v684
    %v686 = vadd.f32 %v673, %v348
    %v688 = vrot.slane %v686, 2
    %689 = vrot.lane.b32.xlu0 %v688, 108
    %v690 = vpop.permute.xlu0 %689
    %v692 = vmul.f32 %v685, %v690
    %694 = vrot.lane.b32.xlu0 %v692, 20
    %v695 = vpop.permute.xlu0 %694
    %v697 = vadd.f32 %v249, %v695
    %v698 = vtanh.pop %v697
    %v699 = vsub.f32 1.0, %v685
    %701 = vrot.lane.b32.xlu0 %v698, 118
    %v702 = vpop.permute.xlu0 %701
    %v704 = vmul.f32 %v699, %v702
    %v705 = vrot.slane %v594, 6
    %v707 = vmul.f32 %v685, %v705
    %v708 = vadd.f32 %v704, %v707
    %710 = vrot.lane.b32.xlu0 %v708, 118
    %v711 = vpop.permute.xlu0 %710
    %vm713 = vcmask 80902
    %714 = vst.msk [vmem:[#allocation2] sm:$0xc0] %vm713, %v711
    %v715 = vrot.slane %v708, 6
    %716 = vrot.lane.b32.xlu0 %v715, 118
    %v717 = vpop.permute.xlu0 %716
    %v718 = vsel %vm257, %v717, 0
    %720 = vmatprep.subr.mxu0 0.0
    %721 = vmatpush1.msra.mxu0 %v159
    %722 = vmatprep.subr.mxu0 0.0
    %723 = vmatpush1.msra.mxu0 %v263
    %724 = vmatprep.subr.mxu0 0.0
    %725 = vmatpush1.msra.mxu0 0.0
    %726 = vmatprep.subr.mxu0 0.0
    %727 = vmatpush1.msra.mxu0 0.0
    %728 = vmatprep.subr.mxu0 0.0
    %729 = vmatpush1.msra.mxu0 0.0
    %730 = vmatprep.subr.mxu0 0.0
    %731 = vmatpush1.msra.mxu0 0.0
    %732 = vmatprep.subr.mxu0 0.0
    %733 = vmatpush1.msra.mxu0 0.0
    %734 = vmatprep.subr.mxu0 0.0
    %735 = vmatpush1.msra.mxu0 0.0
    %736 = vmatprep.subr.mxu0 0.0
    %737 = vmatpush1.msra.mxu0 0.0
    %738 = vmatprep.subr.mxu0 0.0
    %739 = vmatpush1.msra.mxu0 0.0
    %740 = vmatprep.subr.mxu0 0.0
    %741 = vmatpush1.msra.mxu0 0.0
    %742 = vmatprep.subr.mxu0 0.0
    %743 = vmatpush1.msra.mxu0 0.0
    %744 = vmatprep.subr.mxu0 0.0
    %745 = vmatpush1.msra.mxu0 0.0
    %746 = vmatprep.subr.mxu0 0.0
    %747 = vmatpush1.msra.mxu0 0.0
    %748 = vmatprep.subr.mxu0 0.0
    %749 = vmatpush1.msra.mxu0 0.0
    %750 = vmatprep.subr.mxu0 0.0
    %751 = vmatpush1.msra.mxu0 0.0
    %752 = vmatprep.subr.mxu0 0.0
    %753 = vmatpush1.msra.mxu0 0.0
    %754 = vmatprep.subr.mxu0 0.0
    %755 = vmatpush1.msra.mxu0 0.0
    %756 = vmatprep.subr.mxu0 0.0
    %757 = vmatpush1.msra.mxu0 0.0
    %758 = vmatprep.subr.mxu0 0.0
    %759 = vmatpush1.msra.mxu0 0.0
    %760 = vmatprep.subr.mxu0 0.0
    %761 = vmatpush1.msra.mxu0 0.0
    %762 = vmatprep.subr.mxu0 0.0
    %763 = vmatpush1.msra.mxu0 0.0
    %764 = vmatprep.subr.mxu0 0.0
    %765 = vmatpush1.msra.mxu0 0.0
    %766 = vmatprep.subr.mxu0 0.0
    %767 = vmatpush1.msra.mxu0 0.0
    %768 = vmatprep.subr.mxu0 0.0
    %769 = vmatpush1.msra.mxu0 0.0
    %770 = vmatprep.subr.mxu0 0.0
    %771 = vmatpush1.msra.mxu0 0.0
    %772 = vmatprep.subr.mxu0 0.0
    %773 = vmatpush1.msra.mxu0 0.0
    %774 = vmatprep.subr.mxu0 0.0
    %775 = vmatpush1.msra.mxu0 0.0
    %776 = vmatprep.subr.mxu0 0.0
    %777 = vmatpush1.msra.mxu0 0.0
    %778 = vmatprep.subr.mxu0 0.0
    %779 = vmatpush1.msra.mxu0 0.0
    %780 = vmatprep.subr.mxu0 0.0
    %781 = vmatpush1.msra.mxu0 0.0
    %782 = vmatprep.subr.mxu0 0.0
    %783 = vmatpush1.msra.mxu0 0.0
    %784 = vmatprep.mubr.f32.mxu0 0.0
    %785 = vmatmul.mubr.f32.gmra.mrb[0].mxu0 %v718
    %v786 = vpop.f32.mrb[0].mxu0
    %v787 = vadd.f32 0.0, %v786
    %v788 = vpop.f32.mrb[0].mxu0
    %789 = vdwg.mxu0
    %v790 = vadd.f32 %v254, %v787
    %v791 = vxor.u32 %v790, 2147483648
    %v792 = vmul.f32 %v791, 1.442695
    %v793 = vpow.pop %v792
    %v794 = vadd.f32 %v793, 1.0
    %v795 = vrcp.pop %v794
    %v796 = vmul.f32 1.0, %v795
    %v797 = vadd.f32 %v787, %v348
    %799 = vrot.lane.b32.xlu0 %v797, 108
    %v800 = vpop.permute.xlu0 %799
    %v802 = vmul.f32 %v796, %v800
    %804 = vrot.lane.b32.xlu0 %v802, 20
    %v805 = vpop.permute.xlu0 %804
    %v807 = vadd.f32 %v254, %v805
    %v808 = vtanh.pop %v807
    %v809 = vsub.f32 1.0, %v796
    %811 = vrot.lane.b32.xlu0 %v808, 118
    %v812 = vpop.permute.xlu0 %811
    %v814 = vmul.f32 %v809, %v812
    %v816 = vmul.f32 %v796, %v715
    %v817 = vadd.f32 %v814, %v816
    %819 = vrot.lane.b32.xlu0 %v817, 118
    %v820 = vpop.permute.xlu0 %819
    %822 = vst.msk [vmem:[#allocation2 + $0x8] sm:$0x3] %vm374, %v820
    %v823 = vsel %vm257, %v820, 0
    %825 = vmatprep.subr.mxu0 0.0
    %826 = vmatpush1.msra.mxu0 %v159
    %827 = vmatprep.subr.mxu0 0.0
    %828 = vmatpush1.msra.mxu0 %v263
    %829 = vmatprep.subr.mxu0 0.0
    %830 = vmatpush1.msra.mxu0 0.0
    %831 = vmatprep.subr.mxu0 0.0
    %832 = vmatpush1.msra.mxu0 0.0
    %833 = vmatprep.subr.mxu0 0.0
    %834 = vmatpush1.msra.mxu0 0.0
    %835 = vmatprep.subr.mxu0 0.0
    %836 = vmatpush1.msra.mxu0 0.0
    %837 = vmatprep.subr.mxu0 0.0
    %838 = vmatpush1.msra.mxu0 0.0
    %839 = vmatprep.subr.mxu0 0.0
    %840 = vmatpush1.msra.mxu0 0.0
    %841 = vmatprep.subr.mxu0 0.0
    %842 = vmatpush1.msra.mxu0 0.0
    %843 = vmatprep.subr.mxu0 0.0
    %844 = vmatpush1.msra.mxu0 0.0
    %845 = vmatprep.subr.mxu0 0.0
    %846 = vmatpush1.msra.mxu0 0.0
    %847 = vmatprep.subr.mxu0 0.0
    %848 = vmatpush1.msra.mxu0 0.0
    %849 = vmatprep.subr.mxu0 0.0
    %850 = vmatpush1.msra.mxu0 0.0
    %851 = vmatprep.subr.mxu0 0.0
    %852 = vmatpush1.msra.mxu0 0.0
    %853 = vmatprep.subr.mxu0 0.0
    %854 = vmatpush1.msra.mxu0 0.0
    %855 = vmatprep.subr.mxu0 0.0
    %856 = vmatpush1.msra.mxu0 0.0
    %857 = vmatprep.subr.mxu0 0.0
    %858 = vmatpush1.msra.mxu0 0.0
    %859 = vmatprep.subr.mxu0 0.0
    %860 = vmatpush1.msra.mxu0 0.0
    %861 = vmatprep.subr.mxu0 0.0
    %862 = vmatpush1.msra.mxu0 0.0
    %863 = vmatprep.subr.mxu0 0.0
    %864 = vmatpush1.msra.mxu0 0.0
    %865 = vmatprep.subr.mxu0 0.0
    %866 = vmatpush1.msra.mxu0 0.0
    %867 = vmatprep.subr.mxu0 0.0
    %868 = vmatpush1.msra.mxu0 0.0
    %869 = vmatprep.subr.mxu0 0.0
    %870 = vmatpush1.msra.mxu0 0.0
    %871 = vmatprep.subr.mxu0 0.0
    %872 = vmatpush1.msra.mxu0 0.0
    %873 = vmatprep.subr.mxu0 0.0
    %874 = vmatpush1.msra.mxu0 0.0
    %875 = vmatprep.subr.mxu0 0.0
    %876 = vmatpush1.msra.mxu0 0.0
    %877 = vmatprep.subr.mxu0 0.0
    %878 = vmatpush1.msra.mxu0 0.0
    %879 = vmatprep.subr.mxu0 0.0
    %880 = vmatpush1.msra.mxu0 0.0
    %881 = vmatprep.subr.mxu0 0.0
    %882 = vmatpush1.msra.mxu0 0.0
    %883 = vmatprep.subr.mxu0 0.0
    %884 = vmatpush1.msra.mxu0 0.0
    %885 = vmatprep.subr.mxu0 0.0
    %886 = vmatpush1.msra.mxu0 0.0
    %887 = vmatprep.subr.mxu0 0.0
    %888 = vmatpush1.msra.mxu0 0.0
    %889 = vmatprep.mubr.f32.mxu0 0.0
    %890 = vmatmul.mubr.f32.gmra.mrb[0].mxu0 %v823
    %v891 = vpop.f32.mrb[0].mxu0
    %v892 = vadd.f32 0.0, %v891
    %v893 = vpop.f32.mrb[0].mxu0
    %894 = vdwg.mxu0
    %v896 = vrot.slane %v892, 6
    %v898 = vadd.f32 %v254, %v896
    %v899 = vxor.u32 %v898, 2147483648
    %v900 = vmul.f32 %v899, 1.442695
    %v901 = vpow.pop %v900
    %v902 = vadd.f32 %v901, 1.0
    %v903 = vrcp.pop %v902
    %v904 = vmul.f32 1.0, %v903
    %v905 = vadd.f32 %v892, %v348
    %v907 = vrot.slane %v905, 6
    %908 = vrot.lane.b32.xlu0 %v907, 108
    %v909 = vpop.permute.xlu0 %908
    %v911 = vmul.f32 %v904, %v909
    %913 = vrot.lane.b32.xlu0 %v911, 20
    %v914 = vpop.permute.xlu0 %913
    %v916 = vadd.f32 %v254, %v914
    %v917 = vtanh.pop %v916
    %v918 = vsub.f32 1.0, %v904
    %920 = vrot.lane.b32.xlu0 %v917, 118
    %v921 = vpop.permute.xlu0 %920
    %v923 = vmul.f32 %v918, %v921
    %v924 = vrot.slane %v817, 6
    %v926 = vmul.f32 %v904, %v924
    %v927 = vadd.f32 %v923, %v926
    %929 = vrot.lane.b32.xlu0 %v927, 118
    %v930 = vpop.permute.xlu0 %929
    %932 = vst.msk [vmem:[#allocation2 + $0x8] sm:$0xc] %vm485, %v930
    %v933 = vrot.slane %v927, 2
    %934 = vrot.lane.b32.xlu0 %v933, 118
    %v935 = vpop.permute.xlu0 %934
    %v936 = vsel %vm257, %v935, 0
    %938 = vmatprep.subr.mxu0 0.0
    %939 = vmatpush1.msra.mxu0 %v159
    %940 = vmatprep.subr.mxu0 0.0
    %941 = vmatpush1.msra.mxu0 %v263
    %942 = vmatprep.subr.mxu0 0.0
    %943 = vmatpush1.msra.mxu0 0.0
    %944 = vmatprep.subr.mxu0 0.0
    %945 = vmatpush1.msra.mxu0 0.0
    %946 = vmatprep.subr.mxu0 0.0
    %947 = vmatpush1.msra.mxu0 0.0
    %948 = vmatprep.subr.mxu0 0.0
    %949 = vmatpush1.msra.mxu0 0.0
    %950 = vmatprep.subr.mxu0 0.0
    %951 = vmatpush1.msra.mxu0 0.0
    %952 = vmatprep.subr.mxu0 0.0
    %953 = vmatpush1.msra.mxu0 0.0
    %954 = vmatprep.subr.mxu0 0.0
    %955 = vmatpush1.msra.mxu0 0.0
    %956 = vmatprep.subr.mxu0 0.0
    %957 = vmatpush1.msra.mxu0 0.0
    %958 = vmatprep.subr.mxu0 0.0
    %959 = vmatpush1.msra.mxu0 0.0
    %960 = vmatprep.subr.mxu0 0.0
    %961 = vmatpush1.msra.mxu0 0.0
    %962 = vmatprep.subr.mxu0 0.0
    %963 = vmatpush1.msra.mxu0 0.0
    %964 = vmatprep.subr.mxu0 0.0
    %965 = vmatpush1.msra.mxu0 0.0
    %966 = vmatprep.subr.mxu0 0.0
    %967 = vmatpush1.msra.mxu0 0.0
    %968 = vmatprep.subr.mxu0 0.0
    %969 = vmatpush1.msra.mxu0 0.0
    %970 = vmatprep.subr.mxu0 0.0
    %971 = vmatpush1.msra.mxu0 0.0
    %972 = vmatprep.subr.mxu0 0.0
    %973 = vmatpush1.msra.mxu0 0.0
    %974 = vmatprep.subr.mxu0 0.0
    %975 = vmatpush1.msra.mxu0 0.0
    %976 = vmatprep.subr.mxu0 0.0
    %977 = vmatpush1.msra.mxu0 0.0
    %978 = vmatprep.subr.mxu0 0.0
    %979 = vmatpush1.msra.mxu0 0.0
    %980 = vmatprep.subr.mxu0 0.0
    %981 = vmatpush1.msra.mxu0 0.0
    %982 = vmatprep.subr.mxu0 0.0
    %983 = vmatpush1.msra.mxu0 0.0
    %984 = vmatprep.subr.mxu0 0.0
    %985 = vmatpush1.msra.mxu0 0.0
    %986 = vmatprep.subr.mxu0 0.0
    %987 = vmatpush1.msra.mxu0 0.0
    %988 = vmatprep.subr.mxu0 0.0
    %989 = vmatpush1.msra.mxu0 0.0
    %990 = vmatprep.subr.mxu0 0.0
    %991 = vmatpush1.msra.mxu0 0.0
    %992 = vmatprep.subr.mxu0 0.0
    %993 = vmatpush1.msra.mxu0 0.0
    %994 = vmatprep.subr.mxu0 0.0
    %995 = vmatpush1.msra.mxu0 0.0
    %996 = vmatprep.subr.mxu0 0.0
    %997 = vmatpush1.msra.mxu0 0.0
    %998 = vmatprep.subr.mxu0 0.0
    %999 = vmatpush1.msra.mxu0 0.0
    %1000 = vmatprep.subr.mxu0 0.0
    %1001 = vmatpush1.msra.mxu0 0.0
    %1002 = vmatprep.mubr.f32.mxu0 0.0
    %1003 = vmatmul.mubr.f32.gmra.mrb[0].mxu0 %v936
    %v1004 = vpop.f32.mrb[0].mxu0
    %v1005 = vadd.f32 0.0, %v1004
    %v1006 = vpop.f32.mrb[0].mxu0
    %1007 = vdwg.mxu0
    %v1009 = vrot.slane %v1005, 4
    %v1011 = vadd.f32 %v254, %v1009
    %v1012 = vxor.u32 %v1011, 2147483648
    %v1013 = vmul.f32 %v1012, 1.442695
    %v1014 = vpow.pop %v1013
    %v1015 = vadd.f32 %v1014, 1.0
    %v1016 = vrcp.pop %v1015
    %v1017 = vmul.f32 1.0, %v1016
    %v1018 = vadd.f32 %v1005, %v348
    %v1020 = vrot.slane %v1018, 4
    %1021 = vrot.lane.b32.xlu0 %v1020, 108
    %v1022 = vpop.permute.xlu0 %1021
    %v1024 = vmul.f32 %v1017, %v1022
    %1026 = vrot.lane.b32.xlu0 %v1024, 20
    %v1027 = vpop.permute.xlu0 %1026
    %v1029 = vadd.f32 %v254, %v1027
    %v1030 = vtanh.pop %v1029
    %v1031 = vsub.f32 1.0, %v1017
    %1033 = vrot.lane.b32.xlu0 %v1030, 118
    %v1034 = vpop.permute.xlu0 %1033
    %v1036 = vmul.f32 %v1031, %v1034
    %v1037 = vrot.slane %v927, 6
    %v1039 = vmul.f32 %v1017, %v1037
    %v1040 = vadd.f32 %v1036, %v1039
    %1042 = vrot.lane.b32.xlu0 %v1040, 118
    %v1043 = vpop.permute.xlu0 %1042
    %1045 = vst.msk [vmem:[#allocation2 + $0x8] sm:$0x30] %vm599, %v1043
    %v1046 = vrot.slane %v1040, 4
    %1047 = vrot.lane.b32.xlu0 %v1046, 118
    %v1048 = vpop.permute.xlu0 %1047
    %v1049 = vsel %vm257, %v1048, 0
    %1051 = vmatprep.subr.mxu0 0.0
    %1052 = vmatpush1.msra.mxu0 %v159
    %1053 = vmatprep.subr.mxu0 0.0
    %1054 = vmatpush1.msra.mxu0 %v263
    %1055 = vmatprep.subr.mxu0 0.0
    %1056 = vmatpush1.msra.mxu0 0.0
    %1057 = vmatprep.subr.mxu0 0.0
    %1058 = vmatpush1.msra.mxu0 0.0
    %1059 = vmatprep.subr.mxu0 0.0
    %1060 = vmatpush1.msra.mxu0 0.0
    %1061 = vmatprep.subr.mxu0 0.0
    %1062 = vmatpush1.msra.mxu0 0.0
    %1063 = vmatprep.subr.mxu0 0.0
    %1064 = vmatpush1.msra.mxu0 0.0
    %1065 = vmatprep.subr.mxu0 0.0
    %1066 = vmatpush1.msra.mxu0 0.0
    %1067 = vmatprep.subr.mxu0 0.0
    %1068 = vmatpush1.msra.mxu0 0.0
    %1069 = vmatprep.subr.mxu0 0.0
    %1070 = vmatpush1.msra.mxu0 0.0
    %1071 = vmatprep.subr.mxu0 0.0
    %1072 = vmatpush1.msra.mxu0 0.0
    %1073 = vmatprep.subr.mxu0 0.0
    %1074 = vmatpush1.msra.mxu0 0.0
    %1075 = vmatprep.subr.mxu0 0.0
    %1076 = vmatpush1.msra.mxu0 0.0
    %1077 = vmatprep.subr.mxu0 0.0
    %1078 = vmatpush1.msra.mxu0 0.0
    %1079 = vmatprep.subr.mxu0 0.0
    %1080 = vmatpush1.msra.mxu0 0.0
    %1081 = vmatprep.subr.mxu0 0.0
    %1082 = vmatpush1.msra.mxu0 0.0
    %1083 = vmatprep.subr.mxu0 0.0
    %1084 = vmatpush1.msra.mxu0 0.0
    %1085 = vmatprep.subr.mxu0 0.0
    %1086 = vmatpush1.msra.mxu0 0.0
    %1087 = vmatprep.subr.mxu0 0.0
    %1088 = vmatpush1.msra.mxu0 0.0
    %1089 = vmatprep.subr.mxu0 0.0
    %1090 = vmatpush1.msra.mxu0 0.0
    %1091 = vmatprep.subr.mxu0 0.0
    %1092 = vmatpush1.msra.mxu0 0.0
    %1093 = vmatprep.subr.mxu0 0.0
    %1094 = vmatpush1.msra.mxu0 0.0
    %1095 = vmatprep.subr.mxu0 0.0
    %1096 = vmatpush1.msra.mxu0 0.0
    %1097 = vmatprep.subr.mxu0 0.0
    %1098 = vmatpush1.msra.mxu0 0.0
    %1099 = vmatprep.subr.mxu0 0.0
    %1100 = vmatpush1.msra.mxu0 0.0
    %1101 = vmatprep.subr.mxu0 0.0
    %1102 = vmatpush1.msra.mxu0 0.0
    %1103 = vmatprep.subr.mxu0 0.0
    %1104 = vmatpush1.msra.mxu0 0.0
    %1105 = vmatprep.subr.mxu0 0.0
    %1106 = vmatpush1.msra.mxu0 0.0
    %1107 = vmatprep.subr.mxu0 0.0
    %1108 = vmatpush1.msra.mxu0 0.0
    %1109 = vmatprep.subr.mxu0 0.0
    %1110 = vmatpush1.msra.mxu0 0.0
    %1111 = vmatprep.subr.mxu0 0.0
    %1112 = vmatpush1.msra.mxu0 0.0
    %1113 = vmatprep.subr.mxu0 0.0
    %1114 = vmatpush1.msra.mxu0 0.0
    %1115 = vmatprep.mubr.f32.mxu0 0.0
    %1116 = vmatmul.mubr.f32.gmra.mrb[0].mxu0 %v1049
    %v1117 = vpop.f32.mrb[0].mxu0
    %v1118 = vadd.f32 0.0, %v1117
    %v1119 = vpop.f32.mrb[0].mxu0
    %1120 = vdwg.mxu0
    %v1122 = vrot.slane %v1118, 2
    %v1124 = vadd.f32 %v254, %v1122
    %v1125 = vxor.u32 %v1124, 2147483648
    %v1126 = vmul.f32 %v1125, 1.442695
    %v1127 = vpow.pop %v1126
    %v1128 = vadd.f32 %v1127, 1.0
    %v1129 = vrcp.pop %v1128
    %v1130 = vmul.f32 1.0, %v1129
    %v1131 = vadd.f32 %v1118, %v348
    %v1133 = vrot.slane %v1131, 2
    %1134 = vrot.lane.b32.xlu0 %v1133, 108
    %v1135 = vpop.permute.xlu0 %1134
    %v1137 = vmul.f32 %v1130, %v1135
    %1139 = vrot.lane.b32.xlu0 %v1137, 20
    %v1140 = vpop.permute.xlu0 %1139
    %v1142 = vadd.f32 %v254, %v1140
    %v1143 = vtanh.pop %v1142
    %v1144 = vsub.f32 1.0, %v1130
    %1146 = vrot.lane.b32.xlu0 %v1143, 118
    %v1147 = vpop.permute.xlu0 %1146
    %v1149 = vmul.f32 %v1144, %v1147
    %v1150 = vrot.slane %v1040, 6
    %v1152 = vmul.f32 %v1130, %v1150
    %v1153 = vadd.f32 %v1149, %v1152
    %1155 = vrot.lane.b32.xlu0 %v1153, 118
    %v1156 = vpop.permute.xlu0 %1155
    %1158 = vst.msk [vmem:[#allocation2 + $0x8] sm:$0xc0] %vm713, %v1156
    %v1159 = vld [vmem:[%s5] sm:$0xff]
    %v1160 = vld [vmem:[%s5 + $0x8] sm:$0x3]
    %v1161 = vld [vmem:[%s6] sm:$0xff]
    %v1162 = vld [vmem:[%s6 + $0x8] sm:$0x3]
    %v1163 = vld [vmem:[#allocation8] sm:$0x1]
    %v1164 = vld [vmem:[#allocation9] sm:$0x1]
    %v1165 = vld [vmem:[#allocation2] sm:$0xff]
    %v1166 = vld [vmem:[#allocation2 + $0x8] sm:$0xff]
    %v1168 = vlaneseq
    %v1169 = vshrl.u32 %v1168, 7
    %v1170 = vsub.s32 0, %v1169
    %v1171 = vrot.slane %v1163, %v1170
    %v1174 = vsel %vm257, %v1165, 0
    %v1177 = vsel %vm257, %v1166, 0
    %v1180 = vsel %vm261, %v1160, 0
    %1182 = vmatprep.subr.mxu0 0.0
    %1183 = vmatpush1.msra.mxu0 %v1159
    %1184 = vmatprep.subr.mxu0 0.0
    %1185 = vmatpush1.msra.mxu0 %v1180
    %1186 = vmatprep.subr.mxu0 0.0
    %1187 = vmatpush1.msra.mxu0 0.0
    %1188 = vmatprep.subr.mxu0 0.0
    %1189 = vmatpush1.msra.mxu0 0.0
    %1190 = vmatprep.subr.mxu0 0.0
    %1191 = vmatpush1.msra.mxu0 0.0
    %1192 = vmatprep.subr.mxu0 0.0
    %1193 = vmatpush1.msra.mxu0 0.0
    %1194 = vmatprep.subr.mxu0 0.0
    %1195 = vmatpush1.msra.mxu0 0.0
    %1196 = vmatprep.subr.mxu0 0.0
    %1197 = vmatpush1.msra.mxu0 0.0
    %1198 = vmatprep.subr.mxu0 0.0
    %1199 = vmatpush1.msra.mxu0 0.0
    %1200 = vmatprep.subr.mxu0 0.0
    %1201 = vmatpush1.msra.mxu0 0.0
    %1202 = vmatprep.subr.mxu0 0.0
    %1203 = vmatpush1.msra.mxu0 0.0
    %1204 = vmatprep.subr.mxu0 0.0
    %1205 = vmatpush1.msra.mxu0 0.0
    %1206 = vmatprep.subr.mxu0 0.0
    %1207 = vmatpush1.msra.mxu0 0.0
    %1208 = vmatprep.subr.mxu0 0.0
    %1209 = vmatpush1.msra.mxu0 0.0
    %1210 = vmatprep.subr.mxu0 0.0
    %1211 = vmatpush1.msra.mxu0 0.0
    %1212 = vmatprep.subr.mxu0 0.0
    %1213 = vmatpush1.msra.mxu0 0.0
    %1214 = vmatprep.subr.mxu0 0.0
    %1215 = vmatpush1.msra.mxu0 0.0
    %1216 = vmatprep.subr.mxu0 0.0
    %1217 = vmatpush1.msra.mxu0 0.0
    %1218 = vmatprep.subr.mxu0 0.0
    %1219 = vmatpush1.msra.mxu0 0.0
    %1220 = vmatprep.subr.mxu0 0.0
    %1221 = vmatpush1.msra.mxu0 0.0
    %1222 = vmatprep.subr.mxu0 0.0
    %1223 = vmatpush1.msra.mxu0 0.0
    %1224 = vmatprep.subr.mxu0 0.0
    %1225 = vmatpush1.msra.mxu0 0.0
    %1226 = vmatprep.subr.mxu0 0.0
    %1227 = vmatpush1.msra.mxu0 0.0
    %1228 = vmatprep.subr.mxu0 0.0
    %1229 = vmatpush1.msra.mxu0 0.0
    %1230 = vmatprep.subr.mxu0 0.0
    %1231 = vmatpush1.msra.mxu0 0.0
    %1232 = vmatprep.subr.mxu0 0.0
    %1233 = vmatpush1.msra.mxu0 0.0
    %1234 = vmatprep.subr.mxu0 0.0
    %1235 = vmatpush1.msra.mxu0 0.0
    %1236 = vmatprep.subr.mxu0 0.0
    %1237 = vmatpush1.msra.mxu0 0.0
    %1238 = vmatprep.subr.mxu0 0.0
    %1239 = vmatpush1.msra.mxu0 0.0
    %1240 = vmatprep.subr.mxu0 0.0
    %1241 = vmatpush1.msra.mxu0 0.0
    %1242 = vmatprep.subr.mxu0 0.0
    %1243 = vmatpush1.msra.mxu0 0.0
    %1244 = vmatprep.subr.mxu0 0.0
    %1245 = vmatpush1.msra.mxu0 0.0
    %1246 = vmatprep.mubr.f32.mxu0 0.0
    %1247 = vmatmul.mubr.f32.gmra.mrb[0].mxu0 %v1174
    %v1248 = vpop.f32.mrb[0].mxu0
    %v1249 = vadd.f32 %v1171, %v1248
    %v1250 = vpop.f32.mrb[0].mxu0
    %1251 = vmatprep.mubr.f32.mxu0 0.0
    %1252 = vmatmul.mubr.f32.gmra.mrb[0].mxu0 %v1177
    %v1253 = vpop.f32.mrb[0].mxu0
    %v1254 = vadd.f32 %v1171, %v1253
    %v1255 = vpop.f32.mrb[0].mxu0
    %1256 = vdwg.mxu0
    %v1258 = vsel %vm261, %v1162, 0
    %1260 = vmatprep.subr.mxu0 0.0
    %1261 = vmatpush1.msra.mxu0 %v1161
    %1262 = vmatprep.subr.mxu0 0.0
    %1263 = vmatpush1.msra.mxu0 %v1258
    %1264 = vmatprep.subr.mxu0 0.0
    %1265 = vmatpush1.msra.mxu0 0.0
    %1266 = vmatprep.subr.mxu0 0.0
    %1267 = vmatpush1.msra.mxu0 0.0
    %1268 = vmatprep.subr.mxu0 0.0
    %1269 = vmatpush1.msra.mxu0 0.0
    %1270 = vmatprep.subr.mxu0 0.0
    %1271 = vmatpush1.msra.mxu0 0.0
    %1272 = vmatprep.subr.mxu0 0.0
    %1273 = vmatpush1.msra.mxu0 0.0
    %1274 = vmatprep.subr.mxu0 0.0
    %1275 = vmatpush1.msra.mxu0 0.0
    %1276 = vmatprep.subr.mxu0 0.0
    %1277 = vmatpush1.msra.mxu0 0.0
    %1278 = vmatprep.subr.mxu0 0.0
    %1279 = vmatpush1.msra.mxu0 0.0
    %1280 = vmatprep.subr.mxu0 0.0
    %1281 = vmatpush1.msra.mxu0 0.0
    %1282 = vmatprep.subr.mxu0 0.0
    %1283 = vmatpush1.msra.mxu0 0.0
    %1284 = vmatprep.subr.mxu0 0.0
    %1285 = vmatpush1.msra.mxu0 0.0
    %1286 = vmatprep.subr.mxu0 0.0
    %1287 = vmatpush1.msra.mxu0 0.0
    %1288 = vmatprep.subr.mxu0 0.0
    %1289 = vmatpush1.msra.mxu0 0.0
    %1290 = vmatprep.subr.mxu0 0.0
    %1291 = vmatpush1.msra.mxu0 0.0
    %1292 = vmatprep.subr.mxu0 0.0
    %1293 = vmatpush1.msra.mxu0 0.0
    %1294 = vmatprep.subr.mxu0 0.0
    %1295 = vmatpush1.msra.mxu0 0.0
    %1296 = vmatprep.subr.mxu0 0.0
    %1297 = vmatpush1.msra.mxu0 0.0
    %1298 = vmatprep.subr.mxu0 0.0
    %1299 = vmatpush1.msra.mxu0 0.0
    %1300 = vmatprep.subr.mxu0 0.0
    %1301 = vmatpush1.msra.mxu0 0.0
    %1302 = vmatprep.subr.mxu0 0.0
    %1303 = vmatpush1.msra.mxu0 0.0
    %1304 = vmatprep.subr.mxu0 0.0
    %1305 = vmatpush1.msra.mxu0 0.0
    %1306 = vmatprep.subr.mxu0 0.0
    %1307 = vmatpush1.msra.mxu0 0.0
    %1308 = vmatprep.subr.mxu0 0.0
    %1309 = vmatpush1.msra.mxu0 0.0
    %1310 = vmatprep.subr.mxu0 0.0
    %1311 = vmatpush1.msra.mxu0 0.0
    %1312 = vmatprep.subr.mxu0 0.0
    %1313 = vmatpush1.msra.mxu0 0.0
    %1314 = vmatprep.subr.mxu0 0.0
    %1315 = vmatpush1.msra.mxu0 0.0
    %1316 = vmatprep.subr.mxu0 0.0
    %1317 = vmatpush1.msra.mxu0 0.0
    %1318 = vmatprep.subr.mxu0 0.0
    %1319 = vmatpush1.msra.mxu0 0.0
    %1320 = vmatprep.subr.mxu0 0.0
    %1321 = vmatpush1.msra.mxu0 0.0
    %1322 = vmatprep.subr.mxu0 0.0
    %1323 = vmatpush1.msra.mxu0 0.0
    %1324 = vmatprep.mubr.f32.mxu0 0.0
    %1325 = vmatmul.mubr.f32.gmra.mrb[0].mxu0 %v259
    %v1326 = vpop.f32.mrb[0].mxu0
    %v1327 = vadd.f32 0.0, %v1326
    %v1328 = vpop.f32.mrb[0].mxu0
    %1329 = vdwg.mxu0
    %v1330 = vadd.f32 %v1249, %v1327
    %v1331 = vxor.u32 %v1330, 2147483648
    %v1332 = vmul.f32 %v1331, 1.442695
    %v1333 = vpow.pop %v1332
    %v1334 = vadd.f32 %v1333, 1.0
    %v1335 = vrcp.pop %v1334
    %v1336 = vmul.f32 1.0, %v1335
    %v1338 = vlaneseq
    %v1339 = vshrl.u32 %v1338, 7
    %v1340 = vsub.s32 0, %v1339
    %v1341 = vrot.slane %v1164, %v1340
    %1342 = vrot.lane.b32.xlu0 %v1341, 20
    %v1343 = vpop.permute.xlu0 %1342
    %v1345 = vadd.f32 %v1327, %v1343
    %1347 = vrot.lane.b32.xlu0 %v1345, 108
    %v1348 = vpop.permute.xlu0 %1347
    %v1350 = vmul.f32 %v1336, %v1348
    %1352 = vrot.lane.b32.xlu0 %v1350, 20
    %v1353 = vpop.permute.xlu0 %1352
    %v1355 = vadd.f32 %v1249, %v1353
    %v1356 = vtanh.pop %v1355
    %v1357 = vsub.f32 1.0, %v1336
    %1359 = vrot.lane.b32.xlu0 %v1356, 118
    %v1360 = vpop.permute.xlu0 %1359
    %v1362 = vmul.f32 %v1357, %v1360
    %v1363 = vmul.f32 %v1336, 0.0
    %v1364 = vadd.f32 %v1362, %v1363
    %1366 = vrot.lane.b32.xlu0 %v1364, 118
    %v1367 = vpop.permute.xlu0 %1366
    %1369 = vst.msk [vmem:[#allocation2] sm:$0x3] %vm374, %v1367
    %v1370 = vsel %vm257, %v1367, 0
    %1372 = vmatprep.subr.mxu0 0.0
    %1373 = vmatpush1.msra.mxu0 %v1161
    %1374 = vmatprep.subr.mxu0 0.0
    %1375 = vmatpush1.msra.mxu0 %v1258
    %1376 = vmatprep.subr.mxu0 0.0
    %1377 = vmatpush1.msra.mxu0 0.0
    %1378 = vmatprep.subr.mxu0 0.0
    %1379 = vmatpush1.msra.mxu0 0.0
    %1380 = vmatprep.subr.mxu0 0.0
    %1381 = vmatpush1.msra.mxu0 0.0
    %1382 = vmatprep.subr.mxu0 0.0
    %1383 = vmatpush1.msra.mxu0 0.0
    %1384 = vmatprep.subr.mxu0 0.0
    %1385 = vmatpush1.msra.mxu0 0.0
    %1386 = vmatprep.subr.mxu0 0.0
    %1387 = vmatpush1.msra.mxu0 0.0
    %1388 = vmatprep.subr.mxu0 0.0
    %1389 = vmatpush1.msra.mxu0 0.0
    %1390 = vmatprep.subr.mxu0 0.0
    %1391 = vmatpush1.msra.mxu0 0.0
    %1392 = vmatprep.subr.mxu0 0.0
    %1393 = vmatpush1.msra.mxu0 0.0
    %1394 = vmatprep.subr.mxu0 0.0
    %1395 = vmatpush1.msra.mxu0 0.0
    %1396 = vmatprep.subr.mxu0 0.0
    %1397 = vmatpush1.msra.mxu0 0.0
    %1398 = vmatprep.subr.mxu0 0.0
    %1399 = vmatpush1.msra.mxu0 0.0
    %1400 = vmatprep.subr.mxu0 0.0
    %1401 = vmatpush1.msra.mxu0 0.0
    %1402 = vmatprep.subr.mxu0 0.0
    %1403 = vmatpush1.msra.mxu0 0.0
    %1404 = vmatprep.subr.mxu0 0.0
    %1405 = vmatpush1.msra.mxu0 0.0
    %1406 = vmatprep.subr.mxu0 0.0
    %1407 = vmatpush1.msra.mxu0 0.0
    %1408 = vmatprep.subr.mxu0 0.0
    %1409 = vmatpush1.msra.mxu0 0.0
    %1410 = vmatprep.subr.mxu0 0.0
    %1411 = vmatpush1.msra.mxu0 0.0
    %1412 = vmatprep.subr.mxu0 0.0
    %1413 = vmatpush1.msra.mxu0 0.0
    %1414 = vmatprep.subr.mxu0 0.0
    %1415 = vmatpush1.msra.mxu0 0.0
    %1416 = vmatprep.subr.mxu0 0.0
    %1417 = vmatpush1.msra.mxu0 0.0
    %1418 = vmatprep.subr.mxu0 0.0
    %1419 = vmatpush1.msra.mxu0 0.0
    %1420 = vmatprep.subr.mxu0 0.0
    %1421 = vmatpush1.msra.mxu0 0.0
    %1422 = vmatprep.subr.mxu0 0.0
    %1423 = vmatpush1.msra.mxu0 0.0
    %1424 = vmatprep.subr.mxu0 0.0
    %1425 = vmatpush1.msra.mxu0 0.0
    %1426 = vmatprep.subr.mxu0 0.0
    %1427 = vmatpush1.msra.mxu0 0.0
    %1428 = vmatprep.subr.mxu0 0.0
    %1429 = vmatpush1.msra.mxu0 0.0
    %1430 = vmatprep.subr.mxu0 0.0
    %1431 = vmatpush1.msra.mxu0 0.0
    %1432 = vmatprep.subr.mxu0 0.0
    %1433 = vmatpush1.msra.mxu0 0.0
    %1434 = vmatprep.subr.mxu0 0.0
    %1435 = vmatpush1.msra.mxu0 0.0
    %1436 = vmatprep.mubr.f32.mxu0 0.0
    %1437 = vmatmul.mubr.f32.gmra.mrb[0].mxu0 %v1370
    %v1438 = vpop.f32.mrb[0].mxu0
    %v1439 = vadd.f32 0.0, %v1438
    %v1440 = vpop.f32.mrb[0].mxu0
    %1441 = vdwg.mxu0
    %v1443 = vrot.slane %v1439, 6
    %v1445 = vadd.f32 %v1249, %v1443
    %v1446 = vxor.u32 %v1445, 2147483648
    %v1447 = vmul.f32 %v1446, 1.442695
    %v1448 = vpow.pop %v1447
    %v1449 = vadd.f32 %v1448, 1.0
    %v1450 = vrcp.pop %v1449
    %v1451 = vmul.f32 1.0, %v1450
    %v1452 = vadd.f32 %v1439, %v1343
    %v1454 = vrot.slane %v1452, 6
    %1455 = vrot.lane.b32.xlu0 %v1454, 108
    %v1456 = vpop.permute.xlu0 %1455
    %v1458 = vmul.f32 %v1451, %v1456
    %1460 = vrot.lane.b32.xlu0 %v1458, 20
    %v1461 = vpop.permute.xlu0 %1460
    %v1463 = vadd.f32 %v1249, %v1461
    %v1464 = vtanh.pop %v1463
    %v1465 = vsub.f32 1.0, %v1451
    %1467 = vrot.lane.b32.xlu0 %v1464, 118
    %v1468 = vpop.permute.xlu0 %1467
    %v1470 = vmul.f32 %v1465, %v1468
    %v1471 = vrot.slane %v1364, 6
    %v1473 = vmul.f32 %v1451, %v1471
    %v1474 = vadd.f32 %v1470, %v1473
    %1476 = vrot.lane.b32.xlu0 %v1474, 118
    %v1477 = vpop.permute.xlu0 %1476
    %1479 = vst.msk [vmem:[#allocation2] sm:$0xc] %vm485, %v1477
    %v1480 = vrot.slane %v1474, 2
    %1481 = vrot.lane.b32.xlu0 %v1480, 118
    %v1482 = vpop.permute.xlu0 %1481
    %v1483 = vsel %vm257, %v1482, 0
    %1485 = vmatprep.subr.mxu0 0.0
    %1486 = vmatpush1.msra.mxu0 %v1161
    %1487 = vmatprep.subr.mxu0 0.0
    %1488 = vmatpush1.msra.mxu0 %v1258
    %1489 = vmatprep.subr.mxu0 0.0
    %1490 = vmatpush1.msra.mxu0 0.0
    %1491 = vmatprep.subr.mxu0 0.0
    %1492 = vmatpush1.msra.mxu0 0.0
    %1493 = vmatprep.subr.mxu0 0.0
    %1494 = vmatpush1.msra.mxu0 0.0
    %1495 = vmatprep.subr.mxu0 0.0
    %1496 = vmatpush1.msra.mxu0 0.0
    %1497 = vmatprep.subr.mxu0 0.0
    %1498 = vmatpush1.msra.mxu0 0.0
    %1499 = vmatprep.subr.mxu0 0.0
    %1500 = vmatpush1.msra.mxu0 0.0
    %1501 = vmatprep.subr.mxu0 0.0
    %1502 = vmatpush1.msra.mxu0 0.0
    %1503 = vmatprep.subr.mxu0 0.0
    %1504 = vmatpush1.msra.mxu0 0.0
    %1505 = vmatprep.subr.mxu0 0.0
    %1506 = vmatpush1.msra.mxu0 0.0
    %1507 = vmatprep.subr.mxu0 0.0
    %1508 = vmatpush1.msra.mxu0 0.0
    %1509 = vmatprep.subr.mxu0 0.0
    %1510 = vmatpush1.msra.mxu0 0.0
    %1511 = vmatprep.subr.mxu0 0.0
    %1512 = vmatpush1.msra.mxu0 0.0
    %1513 = vmatprep.subr.mxu0 0.0
    %1514 = vmatpush1.msra.mxu0 0.0
    %1515 = vmatprep.subr.mxu0 0.0
    %1516 = vmatpush1.msra.mxu0 0.0
    %1517 = vmatprep.subr.mxu0 0.0
    %1518 = vmatpush1.msra.mxu0 0.0
    %1519 = vmatprep.subr.mxu0 0.0
    %1520 = vmatpush1.msra.mxu0 0.0
    %1521 = vmatprep.subr.mxu0 0.0
    %1522 = vmatpush1.msra.mxu0 0.0
    %1523 = vmatprep.subr.mxu0 0.0
    %1524 = vmatpush1.msra.mxu0 0.0
    %1525 = vmatprep.subr.mxu0 0.0
    %1526 = vmatpush1.msra.mxu0 0.0
    %1527 = vmatprep.subr.mxu0 0.0
    %1528 = vmatpush1.msra.mxu0 0.0
    %1529 = vmatprep.subr.mxu0 0.0
    %1530 = vmatpush1.msra.mxu0 0.0
    %1531 = vmatprep.subr.mxu0 0.0
    %1532 = vmatpush1.msra.mxu0 0.0
    %1533 = vmatprep.subr.mxu0 0.0
    %1534 = vmatpush1.msra.mxu0 0.0
    %1535 = vmatprep.subr.mxu0 0.0
    %1536 = vmatpush1.msra.mxu0 0.0
    %1537 = vmatprep.subr.mxu0 0.0
    %1538 = vmatpush1.msra.mxu0 0.0
    %1539 = vmatprep.subr.mxu0 0.0
    %1540 = vmatpush1.msra.mxu0 0.0
    %1541 = vmatprep.subr.mxu0 0.0
    %1542 = vmatpush1.msra.mxu0 0.0
    %1543 = vmatprep.subr.mxu0 0.0
    %1544 = vmatpush1.msra.mxu0 0.0
    %1545 = vmatprep.subr.mxu0 0.0
    %1546 = vmatpush1.msra.mxu0 0.0
    %1547 = vmatprep.subr.mxu0 0.0
    %1548 = vmatpush1.msra.mxu0 0.0
    %1549 = vmatprep.mubr.f32.mxu0 0.0
    %1550 = vmatmul.mubr.f32.gmra.mrb[0].mxu0 %v1483
    %v1551 = vpop.f32.mrb[0].mxu0
    %v1552 = vadd.f32 0.0, %v1551
    %v1553 = vpop.f32.mrb[0].mxu0
    %1554 = vdwg.mxu0
    %v1556 = vrot.slane %v1552, 4
    %v1558 = vadd.f32 %v1249, %v1556
    %v1559 = vxor.u32 %v1558, 2147483648
    %v1560 = vmul.f32 %v1559, 1.442695
    %v1561 = vpow.pop %v1560
    %v1562 = vadd.f32 %v1561, 1.0
    %v1563 = vrcp.pop %v1562
    %v1564 = vmul.f32 1.0, %v1563
    %v1565 = vadd.f32 %v1552, %v1343
    %v1567 = vrot.slane %v1565, 4
    %1568 = vrot.lane.b32.xlu0 %v1567, 108
    %v1569 = vpop.permute.xlu0 %1568
    %v1571 = vmul.f32 %v1564, %v1569
    %1573 = vrot.lane.b32.xlu0 %v1571, 20
    %v1574 = vpop.permute.xlu0 %1573
    %v1576 = vadd.f32 %v1249, %v1574
    %v1577 = vtanh.pop %v1576
    %v1578 = vsub.f32 1.0, %v1564
    %1580 = vrot.lane.b32.xlu0 %v1577, 118
    %v1581 = vpop.permute.xlu0 %1580
    %v1583 = vmul.f32 %v1578, %v1581
    %v1584 = vrot.slane %v1474, 6
    %v1586 = vmul.f32 %v1564, %v1584
    %v1587 = vadd.f32 %v1583, %v1586
    %1589 = vrot.lane.b32.xlu0 %v1587, 118
    %v1590 = vpop.permute.xlu0 %1589
    %1592 = vst.msk [vmem:[#allocation2] sm:$0x30] %vm599, %v1590
    %v1593 = vrot.slane %v1587, 4
    %1594 = vrot.lane.b32.xlu0 %v1593, 118
    %v1595 = vpop.permute.xlu0 %1594
    %v1596 = vsel %vm257, %v1595, 0
    %1598 = vmatprep.subr.mxu0 0.0
    %1599 = vmatpush1.msra.mxu0 %v1161
    %1600 = vmatprep.subr.mxu0 0.0
    %1601 = vmatpush1.msra.mxu0 %v1258
    %1602 = vmatprep.subr.mxu0 0.0
    %1603 = vmatpush1.msra.mxu0 0.0
    %1604 = vmatprep.subr.mxu0 0.0
    %1605 = vmatpush1.msra.mxu0 0.0
    %1606 = vmatprep.subr.mxu0 0.0
    %1607 = vmatpush1.msra.mxu0 0.0
    %1608 = vmatprep.subr.mxu0 0.0
    %1609 = vmatpush1.msra.mxu0 0.0
    %1610 = vmatprep.subr.mxu0 0.0
    %1611 = vmatpush1.msra.mxu0 0.0
    %1612 = vmatprep.subr.mxu0 0.0
    %1613 = vmatpush1.msra.mxu0 0.0
    %1614 = vmatprep.subr.mxu0 0.0
    %1615 = vmatpush1.msra.mxu0 0.0
    %1616 = vmatprep.subr.mxu0 0.0
    %1617 = vmatpush1.msra.mxu0 0.0
    %1618 = vmatprep.subr.mxu0 0.0
    %1619 = vmatpush1.msra.mxu0 0.0
    %1620 = vmatprep.subr.mxu0 0.0
    %1621 = vmatpush1.msra.mxu0 0.0
    %1622 = vmatprep.subr.mxu0 0.0
    %1623 = vmatpush1.msra.mxu0 0.0
    %1624 = vmatprep.subr.mxu0 0.0
    %1625 = vmatpush1.msra.mxu0 0.0
    %1626 = vmatprep.subr.mxu0 0.0
    %1627 = vmatpush1.msra.mxu0 0.0
    %1628 = vmatprep.subr.mxu0 0.0
    %1629 = vmatpush1.msra.mxu0 0.0
    %1630 = vmatprep.subr.mxu0 0.0
    %1631 = vmatpush1.msra.mxu0 0.0
    %1632 = vmatprep.subr.mxu0 0.0
    %1633 = vmatpush1.msra.mxu0 0.0
    %1634 = vmatprep.subr.mxu0 0.0
    %1635 = vmatpush1.msra.mxu0 0.0
    %1636 = vmatprep.subr.mxu0 0.0
    %1637 = vmatpush1.msra.mxu0 0.0
    %1638 = vmatprep.subr.mxu0 0.0
    %1639 = vmatpush1.msra.mxu0 0.0
    %1640 = vmatprep.subr.mxu0 0.0
    %1641 = vmatpush1.msra.mxu0 0.0
    %1642 = vmatprep.subr.mxu0 0.0
    %1643 = vmatpush1.msra.mxu0 0.0
    %1644 = vmatprep.subr.mxu0 0.0
    %1645 = vmatpush1.msra.mxu0 0.0
    %1646 = vmatprep.subr.mxu0 0.0
    %1647 = vmatpush1.msra.mxu0 0.0
    %1648 = vmatprep.subr.mxu0 0.0
    %1649 = vmatpush1.msra.mxu0 0.0
    %1650 = vmatprep.subr.mxu0 0.0
    %1651 = vmatpush1.msra.mxu0 0.0
    %1652 = vmatprep.subr.mxu0 0.0
    %1653 = vmatpush1.msra.mxu0 0.0
    %1654 = vmatprep.subr.mxu0 0.0
    %1655 = vmatpush1.msra.mxu0 0.0
    %1656 = vmatprep.subr.mxu0 0.0
    %1657 = vmatpush1.msra.mxu0 0.0
    %1658 = vmatprep.subr.mxu0 0.0
    %1659 = vmatpush1.msra.mxu0 0.0
    %1660 = vmatprep.subr.mxu0 0.0
    %1661 = vmatpush1.msra.mxu0 0.0
    %1662 = vmatprep.mubr.f32.mxu0 0.0
    %1663 = vmatmul.mubr.f32.gmra.mrb[0].mxu0 %v1596
    %v1664 = vpop.f32.mrb[0].mxu0
    %v1665 = vadd.f32 0.0, %v1664
    %v1666 = vpop.f32.mrb[0].mxu0
    %1667 = vdwg.mxu0
    %v1669 = vrot.slane %v1665, 2
    %v1671 = vadd.f32 %v1249, %v1669
    %v1672 = vxor.u32 %v1671, 2147483648
    %v1673 = vmul.f32 %v1672, 1.442695
    %v1674 = vpow.pop %v1673
    %v1675 = vadd.f32 %v1674, 1.0
    %v1676 = vrcp.pop %v1675
    %v1677 = vmul.f32 1.0, %v1676
    %v1678 = vadd.f32 %v1665, %v1343
    %v1680 = vrot.slane %v1678, 2
    %1681 = vrot.lane.b32.xlu0 %v1680, 108
    %v1682 = vpop.permute.xlu0 %1681
    %v1684 = vmul.f32 %v1677, %v1682
    %1686 = vrot.lane.b32.xlu0 %v1684, 20
    %v1687 = vpop.permute.xlu0 %1686
    %v1689 = vadd.f32 %v1249, %v1687
    %v1690 = vtanh.pop %v1689
    %v1691 = vsub.f32 1.0, %v1677
    %1693 = vrot.lane.b32.xlu0 %v1690, 118
    %v1694 = vpop.permute.xlu0 %1693
    %v1696 = vmul.f32 %v1691, %v1694
    %v1697 = vrot.slane %v1587, 6
    %v1699 = vmul.f32 %v1677, %v1697
    %v1700 = vadd.f32 %v1696, %v1699
    %1702 = vrot.lane.b32.xlu0 %v1700, 118
    %v1703 = vpop.permute.xlu0 %1702
    %1705 = vst.msk [vmem:[#allocation2] sm:$0xc0] %vm713, %v1703
    %v1706 = vrot.slane %v1700, 6
    %1707 = vrot.lane.b32.xlu0 %v1706, 118
    %v1708 = vpop.permute.xlu0 %1707
    %v1709 = vsel %vm257, %v1708, 0
    %1711 = vmatprep.subr.mxu0 0.0
    %1712 = vmatpush1.msra.mxu0 %v1161
    %1713 = vmatprep.subr.mxu0 0.0
    %1714 = vmatpush1.msra.mxu0 %v1258
    %1715 = vmatprep.subr.mxu0 0.0
    %1716 = vmatpush1.msra.mxu0 0.0
    %1717 = vmatprep.subr.mxu0 0.0
    %1718 = vmatpush1.msra.mxu0 0.0
    %1719 = vmatprep.subr.mxu0 0.0
    %1720 = vmatpush1.msra.mxu0 0.0
    %1721 = vmatprep.subr.mxu0 0.0
    %1722 = vmatpush1.msra.mxu0 0.0
    %1723 = vmatprep.subr.mxu0 0.0
    %1724 = vmatpush1.msra.mxu0 0.0
    %1725 = vmatprep.subr.mxu0 0.0
    %1726 = vmatpush1.msra.mxu0 0.0
    %1727 = vmatprep.subr.mxu0 0.0
    %1728 = vmatpush1.msra.mxu0 0.0
    %1729 = vmatprep.subr.mxu0 0.0
    %1730 = vmatpush1.msra.mxu0 0.0
    %1731 = vmatprep.subr.mxu0 0.0
    %1732 = vmatpush1.msra.mxu0 0.0
    %1733 = vmatprep.subr.mxu0 0.0
    %1734 = vmatpush1.msra.mxu0 0.0
    %1735 = vmatprep.subr.mxu0 0.0
    %1736 = vmatpush1.msra.mxu0 0.0
    %1737 = vmatprep.subr.mxu0 0.0
    %1738 = vmatpush1.msra.mxu0 0.0
    %1739 = vmatprep.subr.mxu0 0.0
    %1740 = vmatpush1.msra.mxu0 0.0
    %1741 = vmatprep.subr.mxu0 0.0
    %1742 = vmatpush1.msra.mxu0 0.0
    %1743 = vmatprep.subr.mxu0 0.0
    %1744 = vmatpush1.msra.mxu0 0.0
    %1745 = vmatprep.subr.mxu0 0.0
    %1746 = vmatpush1.msra.mxu0 0.0
    %1747 = vmatprep.subr.mxu0 0.0
    %1748 = vmatpush1.msra.mxu0 0.0
    %1749 = vmatprep.subr.mxu0 0.0
    %1750 = vmatpush1.msra.mxu0 0.0
    %1751 = vmatprep.subr.mxu0 0.0
    %1752 = vmatpush1.msra.mxu0 0.0
    %1753 = vmatprep.subr.mxu0 0.0
    %1754 = vmatpush1.msra.mxu0 0.0
    %1755 = vmatprep.subr.mxu0 0.0
    %1756 = vmatpush1.msra.mxu0 0.0
    %1757 = vmatprep.subr.mxu0 0.0
    %1758 = vmatpush1.msra.mxu0 0.0
    %1759 = vmatprep.subr.mxu0 0.0
    %1760 = vmatpush1.msra.mxu0 0.0
    %1761 = vmatprep.subr.mxu0 0.0
    %1762 = vmatpush1.msra.mxu0 0.0
    %1763 = vmatprep.subr.mxu0 0.0
    %1764 = vmatpush1.msra.mxu0 0.0
    %1765 = vmatprep.subr.mxu0 0.0
    %1766 = vmatpush1.msra.mxu0 0.0
    %1767 = vmatprep.subr.mxu0 0.0
    %1768 = vmatpush1.msra.mxu0 0.0
    %1769 = vmatprep.subr.mxu0 0.0
    %1770 = vmatpush1.msra.mxu0 0.0
    %1771 = vmatprep.subr.mxu0 0.0
    %1772 = vmatpush1.msra.mxu0 0.0
    %1773 = vmatprep.subr.mxu0 0.0
    %1774 = vmatpush1.msra.mxu0 0.0
    %1775 = vmatprep.mubr.f32.mxu0 0.0
    %1776 = vmatmul.mubr.f32.gmra.mrb[0].mxu0 %v1709
    %v1777 = vpop.f32.mrb[0].mxu0
    %v1778 = vadd.f32 0.0, %v1777
    %v1779 = vpop.f32.mrb[0].mxu0
    %1780 = vdwg.mxu0
    %v1781 = vadd.f32 %v1254, %v1778
    %v1782 = vxor.u32 %v1781, 2147483648
    %v1783 = vmul.f32 %v1782, 1.442695
    %v1784 = vpow.pop %v1783
    %v1785 = vadd.f32 %v1784, 1.0
    %v1786 = vrcp.pop %v1785
    %v1787 = vmul.f32 1.0, %v1786
    %v1788 = vadd.f32 %v1778, %v1343
    %1790 = vrot.lane.b32.xlu0 %v1788, 108
    %v1791 = vpop.permute.xlu0 %1790
    %v1793 = vmul.f32 %v1787, %v1791
    %1795 = vrot.lane.b32.xlu0 %v1793, 20
    %v1796 = vpop.permute.xlu0 %1795
    %v1798 = vadd.f32 %v1254, %v1796
    %v1799 = vtanh.pop %v1798
    %v1800 = vsub.f32 1.0, %v1787
    %1802 = vrot.lane.b32.xlu0 %v1799, 118
    %v1803 = vpop.permute.xlu0 %1802
    %v1805 = vmul.f32 %v1800, %v1803
    %v1807 = vmul.f32 %v1787, %v1706
    %v1808 = vadd.f32 %v1805, %v1807
    %1810 = vrot.lane.b32.xlu0 %v1808, 118
    %v1811 = vpop.permute.xlu0 %1810
    %1813 = vst.msk [vmem:[#allocation2 + $0x8] sm:$0x3] %vm374, %v1811
    %v1814 = vsel %vm257, %v1811, 0
    %1816 = vmatprep.subr.mxu0 0.0
    %1817 = vmatpush1.msra.mxu0 %v1161
    %1818 = vmatprep.subr.mxu0 0.0
    %1819 = vmatpush1.msra.mxu0 %v1258
    %1820 = vmatprep.subr.mxu0 0.0
    %1821 = vmatpush1.msra.mxu0 0.0
    %1822 = vmatprep.subr.mxu0 0.0
    %1823 = vmatpush1.msra.mxu0 0.0
    %1824 = vmatprep.subr.mxu0 0.0
    %1825 = vmatpush1.msra.mxu0 0.0
    %1826 = vmatprep.subr.mxu0 0.0
    %1827 = vmatpush1.msra.mxu0 0.0
    %1828 = vmatprep.subr.mxu0 0.0
    %1829 = vmatpush1.msra.mxu0 0.0
    %1830 = vmatprep.subr.mxu0 0.0
    %1831 = vmatpush1.msra.mxu0 0.0
    %1832 = vmatprep.subr.mxu0 0.0
    %1833 = vmatpush1.msra.mxu0 0.0
    %1834 = vmatprep.subr.mxu0 0.0
    %1835 = vmatpush1.msra.mxu0 0.0
    %1836 = vmatprep.subr.mxu0 0.0
    %1837 = vmatpush1.msra.mxu0 0.0
    %1838 = vmatprep.subr.mxu0 0.0
    %1839 = vmatpush1.msra.mxu0 0.0
    %1840 = vmatprep.subr.mxu0 0.0
    %1841 = vmatpush1.msra.mxu0 0.0
    %1842 = vmatprep.subr.mxu0 0.0
    %1843 = vmatpush1.msra.mxu0 0.0
    %1844 = vmatprep.subr.mxu0 0.0
    %1845 = vmatpush1.msra.mxu0 0.0
    %1846 = vmatprep.subr.mxu0 0.0
    %1847 = vmatpush1.msra.mxu0 0.0
    %1848 = vmatprep.subr.mxu0 0.0
    %1849 = vmatpush1.msra.mxu0 0.0
    %1850 = vmatprep.subr.mxu0 0.0
    %1851 = vmatpush1.msra.mxu0 0.0
    %1852 = vmatprep.subr.mxu0 0.0
    %1853 = vmatpush1.msra.mxu0 0.0
    %1854 = vmatprep.subr.mxu0 0.0
    %1855 = vmatpush1.msra.mxu0 0.0
    %1856 = vmatprep.subr.mxu0 0.0
    %1857 = vmatpush1.msra.mxu0 0.0
    %1858 = vmatprep.subr.mxu0 0.0
    %1859 = vmatpush1.msra.mxu0 0.0
    %1860 = vmatprep.subr.mxu0 0.0
    %1861 = vmatpush1.msra.mxu0 0.0
    %1862 = vmatprep.subr.mxu0 0.0
    %1863 = vmatpush1.msra.mxu0 0.0
    %1864 = vmatprep.subr.mxu0 0.0
    %1865 = vmatpush1.msra.mxu0 0.0
    %1866 = vmatprep.subr.mxu0 0.0
    %1867 = vmatpush1.msra.mxu0 0.0
    %1868 = vmatprep.subr.mxu0 0.0
    %1869 = vmatpush1.msra.mxu0 0.0
    %1870 = vmatprep.subr.mxu0 0.0
    %1871 = vmatpush1.msra.mxu0 0.0
    %1872 = vmatprep.subr.mxu0 0.0
    %1873 = vmatpush1.msra.mxu0 0.0
    %1874 = vmatprep.subr.mxu0 0.0
    %1875 = vmatpush1.msra.mxu0 0.0
    %1876 = vmatprep.subr.mxu0 0.0
    %1877 = vmatpush1.msra.mxu0 0.0
    %1878 = vmatprep.subr.mxu0 0.0
    %1879 = vmatpush1.msra.mxu0 0.0
    %1880 = vmatprep.mubr.f32.mxu0 0.0
    %1881 = vmatmul.mubr.f32.gmra.mrb[0].mxu0 %v1814
    %v1882 = vpop.f32.mrb[0].mxu0
    %v1883 = vadd.f32 0.0, %v1882
    %v1884 = vpop.f32.mrb[0].mxu0
    %1885 = vdwg.mxu0
    %v1887 = vrot.slane %v1883, 6
    %v1889 = vadd.f32 %v1254, %v1887
    %v1890 = vxor.u32 %v1889, 2147483648
    %v1891 = vmul.f32 %v1890, 1.442695
    %v1892 = vpow.pop %v1891
    %v1893 = vadd.f32 %v1892, 1.0
    %v1894 = vrcp.pop %v1893
    %v1895 = vmul.f32 1.0, %v1894
    %v1896 = vadd.f32 %v1883, %v1343
    %v1898 = vrot.slane %v1896, 6
    %1899 = vrot.lane.b32.xlu0 %v1898, 108
    %v1900 = vpop.permute.xlu0 %1899
    %v1902 = vmul.f32 %v1895, %v1900
    %1904 = vrot.lane.b32.xlu0 %v1902, 20
    %v1905 = vpop.permute.xlu0 %1904
    %v1907 = vadd.f32 %v1254, %v1905
    %v1908 = vtanh.pop %v1907
    %v1909 = vsub.f32 1.0, %v1895
    %1911 = vrot.lane.b32.xlu0 %v1908, 118
    %v1912 = vpop.permute.xlu0 %1911
    %v1914 = vmul.f32 %v1909, %v1912
    %v1915 = vrot.slane %v1808, 6
    %v1917 = vmul.f32 %v1895, %v1915
    %v1918 = vadd.f32 %v1914, %v1917
    %1920 = vrot.lane.b32.xlu0 %v1918, 118
    %v1921 = vpop.permute.xlu0 %1920
    %1923 = vst.msk [vmem:[#allocation2 + $0x8] sm:$0xc] %vm485, %v1921
    %v1924 = vrot.slane %v1918, 2
    %1925 = vrot.lane.b32.xlu0 %v1924, 118
    %v1926 = vpop.permute.xlu0 %1925
    %v1927 = vsel %vm257, %v1926, 0
    %1929 = vmatprep.subr.mxu0 0.0
    %1930 = vmatpush1.msra.mxu0 %v1161
    %1931 = vmatprep.subr.mxu0 0.0
    %1932 = vmatpush1.msra.mxu0 %v1258
    %1933 = vmatprep.subr.mxu0 0.0
    %1934 = vmatpush1.msra.mxu0 0.0
    %1935 = vmatprep.subr.mxu0 0.0
    %1936 = vmatpush1.msra.mxu0 0.0
    %1937 = vmatprep.subr.mxu0 0.0
    %1938 = vmatpush1.msra.mxu0 0.0
    %1939 = vmatprep.subr.mxu0 0.0
    %1940 = vmatpush1.msra.mxu0 0.0
    %1941 = vmatprep.subr.mxu0 0.0
    %1942 = vmatpush1.msra.mxu0 0.0
    %1943 = vmatprep.subr.mxu0 0.0
    %1944 = vmatpush1.msra.mxu0 0.0
    %1945 = vmatprep.subr.mxu0 0.0
    %1946 = vmatpush1.msra.mxu0 0.0
    %1947 = vmatprep.subr.mxu0 0.0
    %1948 = vmatpush1.msra.mxu0 0.0
    %1949 = vmatprep.subr.mxu0 0.0
    %1950 = vmatpush1.msra.mxu0 0.0
    %1951 = vmatprep.subr.mxu0 0.0
    %1952 = vmatpush1.msra.mxu0 0.0
    %1953 = vmatprep.subr.mxu0 0.0
    %1954 = vmatpush1.msra.mxu0 0.0
    %1955 = vmatprep.subr.mxu0 0.0
    %1956 = vmatpush1.msra.mxu0 0.0
    %1957 = vmatprep.subr.mxu0 0.0
    %1958 = vmatpush1.msra.mxu0 0.0
    %1959 = vmatprep.subr.mxu0 0.0
    %1960 = vmatpush1.msra.mxu0 0.0
    %1961 = vmatprep.subr.mxu0 0.0
    %1962 = vmatpush1.msra.mxu0 0.0
    %1963 = vmatprep.subr.mxu0 0.0
    %1964 = vmatpush1.msra.mxu0 0.0
    %1965 = vmatprep.subr.mxu0 0.0
    %1966 = vmatpush1.msra.mxu0 0.0
    %1967 = vmatprep.subr.mxu0 0.0
    %1968 = vmatpush1.msra.mxu0 0.0
    %1969 = vmatprep.subr.mxu0 0.0
    %1970 = vmatpush1.msra.mxu0 0.0
    %1971 = vmatprep.subr.mxu0 0.0
    %1972 = vmatpush1.msra.mxu0 0.0
    %1973 = vmatprep.subr.mxu0 0.0
    %1974 = vmatpush1.msra.mxu0 0.0
    %1975 = vmatprep.subr.mxu0 0.0
    %1976 = vmatpush1.msra.mxu0 0.0
    %1977 = vmatprep.subr.mxu0 0.0
    %1978 = vmatpush1.msra.mxu0 0.0
    %1979 = vmatprep.subr.mxu0 0.0
    %1980 = vmatpush1.msra.mxu0 0.0
    %1981 = vmatprep.subr.mxu0 0.0
    %1982 = vmatpush1.msra.mxu0 0.0
    %1983 = vmatprep.subr.mxu0 0.0
    %1984 = vmatpush1.msra.mxu0 0.0
    %1985 = vmatprep.subr.mxu0 0.0
    %1986 = vmatpush1.msra.mxu0 0.0
    %1987 = vmatprep.subr.mxu0 0.0
    %1988 = vmatpush1.msra.mxu0 0.0
    %1989 = vmatprep.subr.mxu0 0.0
    %1990 = vmatpush1.msra.mxu0 0.0
    %1991 = vmatprep.subr.mxu0 0.0
    %1992 = vmatpush1.msra.mxu0 0.0
    %1993 = vmatprep.mubr.f32.mxu0 0.0
    %1994 = vmatmul.mubr.f32.gmra.mrb[0].mxu0 %v1927
    %v1995 = vpop.f32.mrb[0].mxu0
    %v1996 = vadd.f32 0.0, %v1995
    %v1997 = vpop.f32.mrb[0].mxu0
    %1998 = vdwg.mxu0
    %v2000 = vrot.slane %v1996, 4
    %v2002 = vadd.f32 %v1254, %v2000
    %v2003 = vxor.u32 %v2002, 2147483648
    %v2004 = vmul.f32 %v2003, 1.442695
    %v2005 = vpow.pop %v2004
    %v2006 = vadd.f32 %v2005, 1.0
    %v2007 = vrcp.pop %v2006
    %v2008 = vmul.f32 1.0, %v2007
    %v2009 = vadd.f32 %v1996, %v1343
    %v2011 = vrot.slane %v2009, 4
    %2012 = vrot.lane.b32.xlu0 %v2011, 108
    %v2013 = vpop.permute.xlu0 %2012
    %v2015 = vmul.f32 %v2008, %v2013
    %2017 = vrot.lane.b32.xlu0 %v2015, 20
    %v2018 = vpop.permute.xlu0 %2017
    %v2020 = vadd.f32 %v1254, %v2018
    %v2021 = vtanh.pop %v2020
    %v2022 = vsub.f32 1.0, %v2008
    %2024 = vrot.lane.b32.xlu0 %v2021, 118
    %v2025 = vpop.permute.xlu0 %2024
    %v2027 = vmul.f32 %v2022, %v2025
    %v2028 = vrot.slane %v1918, 6
    %v2030 = vmul.f32 %v2008, %v2028
    %v2031 = vadd.f32 %v2027, %v2030
    %2033 = vrot.lane.b32.xlu0 %v2031, 118
    %v2034 = vpop.permute.xlu0 %2033
    %2036 = vst.msk [vmem:[#allocation2 + $0x8] sm:$0x30] %vm599, %v2034
    %v2037 = vrot.slane %v2031, 4
    %2038 = vrot.lane.b32.xlu0 %v2037, 118
    %v2039 = vpop.permute.xlu0 %2038
    %v2040 = vsel %vm257, %v2039, 0
    %2042 = vmatprep.subr.mxu0 0.0
    %2043 = vmatpush1.msra.mxu0 %v1161
    %2044 = vmatprep.subr.mxu0 0.0
    %2045 = vmatpush1.msra.mxu0 %v1258
    %2046 = vmatprep.subr.mxu0 0.0
    %2047 = vmatpush1.msra.mxu0 0.0
    %2048 = vmatprep.subr.mxu0 0.0
    %2049 = vmatpush1.msra.mxu0 0.0
    %2050 = vmatprep.subr.mxu0 0.0
    %2051 = vmatpush1.msra.mxu0 0.0
    %2052 = vmatprep.subr.mxu0 0.0
    %2053 = vmatpush1.msra.mxu0 0.0
    %2054 = vmatprep.subr.mxu0 0.0
    %2055 = vmatpush1.msra.mxu0 0.0
    %2056 = vmatprep.subr.mxu0 0.0
    %2057 = vmatpush1.msra.mxu0 0.0
    %2058 = vmatprep.subr.mxu0 0.0
    %2059 = vmatpush1.msra.mxu0 0.0
    %2060 = vmatprep.subr.mxu0 0.0
    %2061 = vmatpush1.msra.mxu0 0.0
    %2062 = vmatprep.subr.mxu0 0.0
    %2063 = vmatpush1.msra.mxu0 0.0
    %2064 = vmatprep.subr.mxu0 0.0
    %2065 = vmatpush1.msra.mxu0 0.0
    %2066 = vmatprep.subr.mxu0 0.0
    %2067 = vmatpush1.msra.mxu0 0.0
    %2068 = vmatprep.subr.mxu0 0.0
    %2069 = vmatpush1.msra.mxu0 0.0
    %2070 = vmatprep.subr.mxu0 0.0
    %2071 = vmatpush1.msra.mxu0 0.0
    %2072 = vmatprep.subr.mxu0 0.0
    %2073 = vmatpush1.msra.mxu0 0.0
    %2074 = vmatprep.subr.mxu0 0.0
    %2075 = vmatpush1.msra.mxu0 0.0
    %2076 = vmatprep.subr.mxu0 0.0
    %2077 = vmatpush1.msra.mxu0 0.0
    %2078 = vmatprep.subr.mxu0 0.0
    %2079 = vmatpush1.msra.mxu0 0.0
    %2080 = vmatprep.subr.mxu0 0.0
    %2081 = vmatpush1.msra.mxu0 0.0
    %2082 = vmatprep.subr.mxu0 0.0
    %2083 = vmatpush1.msra.mxu0 0.0
    %2084 = vmatprep.subr.mxu0 0.0
    %2085 = vmatpush1.msra.mxu0 0.0
    %2086 = vmatprep.subr.mxu0 0.0
    %2087 = vmatpush1.msra.mxu0 0.0
    %2088 = vmatprep.subr.mxu0 0.0
    %2089 = vmatpush1.msra.mxu0 0.0
    %2090 = vmatprep.subr.mxu0 0.0
    %2091 = vmatpush1.msra.mxu0 0.0
    %2092 = vmatprep.subr.mxu0 0.0
    %2093 = vmatpush1.msra.mxu0 0.0
    %2094 = vmatprep.subr.mxu0 0.0
    %2095 = vmatpush1.msra.mxu0 0.0
    %2096 = vmatprep.subr.mxu0 0.0
    %2097 = vmatpush1.msra.mxu0 0.0
    %2098 = vmatprep.subr.mxu0 0.0
    %2099 = vmatpush1.msra.mxu0 0.0
    %2100 = vmatprep.subr.mxu0 0.0
    %2101 = vmatpush1.msra.mxu0 0.0
    %2102 = vmatprep.subr.mxu0 0.0
    %2103 = vmatpush1.msra.mxu0 0.0
    %2104 = vmatprep.subr.mxu0 0.0
    %2105 = vmatpush1.msra.mxu0 0.0
    %2106 = vmatprep.mubr.f32.mxu0 0.0
    %2107 = vmatmul.mubr.f32.gmra.mrb[0].mxu0 %v2040
    %v2108 = vpop.f32.mrb[0].mxu0
    %v2109 = vadd.f32 0.0, %v2108
    %v2110 = vpop.f32.mrb[0].mxu0
    %2111 = vdwg.mxu0
    %v2113 = vrot.slane %v2109, 2
    %v2115 = vadd.f32 %v1254, %v2113
    %v2116 = vxor.u32 %v2115, 2147483648
    %v2117 = vmul.f32 %v2116, 1.442695
    %v2118 = vpow.pop %v2117
    %v2119 = vadd.f32 %v2118, 1.0
    %v2120 = vrcp.pop %v2119
    %v2121 = vmul.f32 1.0, %v2120
    %v2122 = vadd.f32 %v2109, %v1343
    %v2124 = vrot.slane %v2122, 2
    %2125 = vrot.lane.b32.xlu0 %v2124, 108
    %v2126 = vpop.permute.xlu0 %2125
    %v2128 = vmul.f32 %v2121, %v2126
    %2130 = vrot.lane.b32.xlu0 %v2128, 20
    %v2131 = vpop.permute.xlu0 %2130
    %v2133 = vadd.f32 %v1254, %v2131
    %v2134 = vtanh.pop %v2133
    %v2135 = vsub.f32 1.0, %v2121
    %2137 = vrot.lane.b32.xlu0 %v2134, 118
    %v2138 = vpop.permute.xlu0 %2137
    %v2140 = vmul.f32 %v2135, %v2138
    %v2141 = vrot.slane %v2031, 6
    %v2143 = vmul.f32 %v2121, %v2141
    %v2144 = vadd.f32 %v2140, %v2143
    %2146 = vrot.lane.b32.xlu0 %v2144, 118
    %v2147 = vpop.permute.xlu0 %2146
    %2149 = vst.msk [vmem:[#allocation2 + $0x8] sm:$0xc0] %vm713, %v2147
    %v2150 = vld [vmem:[%s9] sm:$0xff]
    %v2151 = vld [vmem:[%s9 + $0x8] sm:$0x3]
    %v2152 = vld [vmem:[#allocation11] sm:$0xff]
    %v2153 = vld [vmem:[#allocation11 + $0x8] sm:$0x3]
    %v2154 = vld [vmem:[#allocation12] sm:$0x1]
    %v2155 = vld [vmem:[#allocation14] sm:$0x1]
    %v2156 = vld [vmem:[#allocation2] sm:$0xff]
    %v2157 = vld [vmem:[#allocation2 + $0x8] sm:$0xff]
    %v2159 = vlaneseq
    %v2160 = vshrl.u32 %v2159, 7
    %v2161 = vsub.s32 0, %v2160
    %v2162 = vrot.slane %v2154, %v2161
    %v2165 = vsel %vm257, %v2156, 0
    %v2168 = vsel %vm257, %v2157, 0
    %v2171 = vsel %vm261, %v2151, 0
    %2173 = vmatprep.subr.mxu0 0.0
    %2174 = vmatpush1.msra.mxu0 %v2150
    %2175 = vmatprep.subr.mxu0 0.0
    %2176 = vmatpush1.msra.mxu0 %v2171
    %2177 = vmatprep.subr.mxu0 0.0
    %2178 = vmatpush1.msra.mxu0 0.0
    %2179 = vmatprep.subr.mxu0 0.0
    %2180 = vmatpush1.msra.mxu0 0.0
    %2181 = vmatprep.subr.mxu0 0.0
    %2182 = vmatpush1.msra.mxu0 0.0
    %2183 = vmatprep.subr.mxu0 0.0
    %2184 = vmatpush1.msra.mxu0 0.0
    %2185 = vmatprep.subr.mxu0 0.0
    %2186 = vmatpush1.msra.mxu0 0.0
    %2187 = vmatprep.subr.mxu0 0.0
    %2188 = vmatpush1.msra.mxu0 0.0
    %2189 = vmatprep.subr.mxu0 0.0
    %2190 = vmatpush1.msra.mxu0 0.0
    %2191 = vmatprep.subr.mxu0 0.0
    %2192 = vmatpush1.msra.mxu0 0.0
    %2193 = vmatprep.subr.mxu0 0.0
    %2194 = vmatpush1.msra.mxu0 0.0
    %2195 = vmatprep.subr.mxu0 0.0
    %2196 = vmatpush1.msra.mxu0 0.0
    %2197 = vmatprep.subr.mxu0 0.0
    %2198 = vmatpush1.msra.mxu0 0.0
    %2199 = vmatprep.subr.mxu0 0.0
    %2200 = vmatpush1.msra.mxu0 0.0
    %2201 = vmatprep.subr.mxu0 0.0
    %2202 = vmatpush1.msra.mxu0 0.0
    %2203 = vmatprep.subr.mxu0 0.0
    %2204 = vmatpush1.msra.mxu0 0.0
    %2205 = vmatprep.subr.mxu0 0.0
    %2206 = vmatpush1.msra.mxu0 0.0
    %2207 = vmatprep.subr.mxu0 0.0
    %2208 = vmatpush1.msra.mxu0 0.0
    %2209 = vmatprep.subr.mxu0 0.0
    %2210 = vmatpush1.msra.mxu0 0.0
    %2211 = vmatprep.subr.mxu0 0.0
    %2212 = vmatpush1.msra.mxu0 0.0
    %2213 = vmatprep.subr.mxu0 0.0
    %2214 = vmatpush1.msra.mxu0 0.0
    %2215 = vmatprep.subr.mxu0 0.0
    %2216 = vmatpush1.msra.mxu0 0.0
    %2217 = vmatprep.subr.mxu0 0.0
    %2218 = vmatpush1.msra.mxu0 0.0
    %2219 = vmatprep.subr.mxu0 0.0
    %2220 = vmatpush1.msra.mxu0 0.0
    %2221 = vmatprep.subr.mxu0 0.0
    %2222 = vmatpush1.msra.mxu0 0.0
    %2223 = vmatprep.subr.mxu0 0.0
    %2224 = vmatpush1.msra.mxu0 0.0
    %2225 = vmatprep.subr.mxu0 0.0
    %2226 = vmatpush1.msra.mxu0 0.0
    %2227 = vmatprep.subr.mxu0 0.0
    %2228 = vmatpush1.msra.mxu0 0.0
    %2229 = vmatprep.subr.mxu0 0.0
    %2230 = vmatpush1.msra.mxu0 0.0
    %2231 = vmatprep.subr.mxu0 0.0
    %2232 = vmatpush1.msra.mxu0 0.0
    %2233 = vmatprep.subr.mxu0 0.0
    %2234 = vmatpush1.msra.mxu0 0.0
    %2235 = vmatprep.subr.mxu0 0.0
    %2236 = vmatpush1.msra.mxu0 0.0
    %2237 = vmatprep.mubr.f32.mxu0 0.0
    %2238 = vmatmul.mubr.f32.gmra.mrb[0].mxu0 %v2165
    %v2239 = vpop.f32.mrb[0].mxu0
    %v2240 = vadd.f32 %v2162, %v2239
    %v2241 = vpop.f32.mrb[0].mxu0
    %2242 = vmatprep.mubr.f32.mxu0 0.0
    %2243 = vmatmul.mubr.f32.gmra.mrb[0].mxu0 %v2168
    %v2244 = vpop.f32.mrb[0].mxu0
    %v2245 = vadd.f32 %v2162, %v2244
    %v2246 = vpop.f32.mrb[0].mxu0
    %2247 = vdwg.mxu0
    %v2249 = vsel %vm261, %v2153, 0
    %2251 = vmatprep.subr.mxu0 0.0
    %2252 = vmatpush1.msra.mxu0 %v2152
    %2253 = vmatprep.subr.mxu0 0.0
    %2254 = vmatpush1.msra.mxu0 %v2249
    %2255 = vmatprep.subr.mxu0 0.0
    %2256 = vmatpush1.msra.mxu0 0.0
    %2257 = vmatprep.subr.mxu0 0.0
    %2258 = vmatpush1.msra.mxu0 0.0
    %2259 = vmatprep.subr.mxu0 0.0
    %2260 = vmatpush1.msra.mxu0 0.0
    %2261 = vmatprep.subr.mxu0 0.0
    %2262 = vmatpush1.msra.mxu0 0.0
    %2263 = vmatprep.subr.mxu0 0.0
    %2264 = vmatpush1.msra.mxu0 0.0
    %2265 = vmatprep.subr.mxu0 0.0
    %2266 = vmatpush1.msra.mxu0 0.0
    %2267 = vmatprep.subr.mxu0 0.0
    %2268 = vmatpush1.msra.mxu0 0.0
    %2269 = vmatprep.subr.mxu0 0.0
    %2270 = vmatpush1.msra.mxu0 0.0
    %2271 = vmatprep.subr.mxu0 0.0
    %2272 = vmatpush1.msra.mxu0 0.0
    %2273 = vmatprep.subr.mxu0 0.0
    %2274 = vmatpush1.msra.mxu0 0.0
    %2275 = vmatprep.subr.mxu0 0.0
    %2276 = vmatpush1.msra.mxu0 0.0
    %2277 = vmatprep.subr.mxu0 0.0
    %2278 = vmatpush1.msra.mxu0 0.0
    %2279 = vmatprep.subr.mxu0 0.0
    %2280 = vmatpush1.msra.mxu0 0.0
    %2281 = vmatprep.subr.mxu0 0.0
    %2282 = vmatpush1.msra.mxu0 0.0
    %2283 = vmatprep.subr.mxu0 0.0
    %2284 = vmatpush1.msra.mxu0 0.0
    %2285 = vmatprep.subr.mxu0 0.0
    %2286 = vmatpush1.msra.mxu0 0.0
    %2287 = vmatprep.subr.mxu0 0.0
    %2288 = vmatpush1.msra.mxu0 0.0
    %2289 = vmatprep.subr.mxu0 0.0
    %2290 = vmatpush1.msra.mxu0 0.0
    %2291 = vmatprep.subr.mxu0 0.0
    %2292 = vmatpush1.msra.mxu0 0.0
    %2293 = vmatprep.subr.mxu0 0.0
    %2294 = vmatpush1.msra.mxu0 0.0
    %2295 = vmatprep.subr.mxu0 0.0
    %2296 = vmatpush1.msra.mxu0 0.0
    %2297 = vmatprep.subr.mxu0 0.0
    %2298 = vmatpush1.msra.mxu0 0.0
    %2299 = vmatprep.subr.mxu0 0.0
    %2300 = vmatpush1.msra.mxu0 0.0
    %2301 = vmatprep.subr.mxu0 0.0
    %2302 = vmatpush1.msra.mxu0 0.0
    %2303 = vmatprep.subr.mxu0 0.0
    %2304 = vmatpush1.msra.mxu0 0.0
    %2305 = vmatprep.subr.mxu0 0.0
    %2306 = vmatpush1.msra.mxu0 0.0
    %2307 = vmatprep.subr.mxu0 0.0
    %2308 = vmatpush1.msra.mxu0 0.0
    %2309 = vmatprep.subr.mxu0 0.0
    %2310 = vmatpush1.msra.mxu0 0.0
    %2311 = vmatprep.subr.mxu0 0.0
    %2312 = vmatpush1.msra.mxu0 0.0
    %2313 = vmatprep.subr.mxu0 0.0
    %2314 = vmatpush1.msra.mxu0 0.0
    %2315 = vmatprep.mubr.f32.mxu0 0.0
    %2316 = vmatmul.mubr.f32.gmra.mrb[0].mxu0 %v259
    %v2317 = vpop.f32.mrb[0].mxu0
    %v2318 = vadd.f32 0.0, %v2317
    %v2319 = vpop.f32.mrb[0].mxu0
    %2320 = vdwg.mxu0
    %v2321 = vadd.f32 %v2240, %v2318
    %v2322 = vxor.u32 %v2321, 2147483648
    %v2323 = vmul.f32 %v2322, 1.442695
    %v2324 = vpow.pop %v2323
    %v2325 = vadd.f32 %v2324, 1.0
    %v2326 = vrcp.pop %v2325
    %v2327 = vmul.f32 1.0, %v2326
    %v2329 = vlaneseq
    %v2330 = vshrl.u32 %v2329, 7
    %v2331 = vsub.s32 0, %v2330
    %v2332 = vrot.slane %v2155, %v2331
    %2333 = vrot.lane.b32.xlu0 %v2332, 20
    %v2334 = vpop.permute.xlu0 %2333
    %v2336 = vadd.f32 %v2318, %v2334
    %2338 = vrot.lane.b32.xlu0 %v2336, 108
    %v2339 = vpop.permute.xlu0 %2338
    %v2341 = vmul.f32 %v2327, %v2339
    %2343 = vrot.lane.b32.xlu0 %v2341, 20
    %v2344 = vpop.permute.xlu0 %2343
    %v2346 = vadd.f32 %v2240, %v2344
    %v2347 = vtanh.pop %v2346
    %v2348 = vsub.f32 1.0, %v2327
    %2350 = vrot.lane.b32.xlu0 %v2347, 118
    %v2351 = vpop.permute.xlu0 %2350
    %v2353 = vmul.f32 %v2348, %v2351
    %v2354 = vmul.f32 %v2327, 0.0
    %v2355 = vadd.f32 %v2353, %v2354
    %2357 = vrot.lane.b32.xlu0 %v2355, 118
    %v2358 = vpop.permute.xlu0 %2357
    %v2359 = vsel %vm257, %v2358, 0
    %2361 = vmatprep.subr.mxu0 0.0
    %2362 = vmatpush1.msra.mxu0 %v2152
    %2363 = vmatprep.subr.mxu0 0.0
    %2364 = vmatpush1.msra.mxu0 %v2249
    %2365 = vmatprep.subr.mxu0 0.0
    %2366 = vmatpush1.msra.mxu0 0.0
    %2367 = vmatprep.subr.mxu0 0.0
    %2368 = vmatpush1.msra.mxu0 0.0
    %2369 = vmatprep.subr.mxu0 0.0
    %2370 = vmatpush1.msra.mxu0 0.0
    %2371 = vmatprep.subr.mxu0 0.0
    %2372 = vmatpush1.msra.mxu0 0.0
    %2373 = vmatprep.subr.mxu0 0.0
    %2374 = vmatpush1.msra.mxu0 0.0
    %2375 = vmatprep.subr.mxu0 0.0
    %2376 = vmatpush1.msra.mxu0 0.0
    %2377 = vmatprep.subr.mxu0 0.0
    %2378 = vmatpush1.msra.mxu0 0.0
    %2379 = vmatprep.subr.mxu0 0.0
    %2380 = vmatpush1.msra.mxu0 0.0
    %2381 = vmatprep.subr.mxu0 0.0
    %2382 = vmatpush1.msra.mxu0 0.0
    %2383 = vmatprep.subr.mxu0 0.0
    %2384 = vmatpush1.msra.mxu0 0.0
    %2385 = vmatprep.subr.mxu0 0.0
    %2386 = vmatpush1.msra.mxu0 0.0
    %2387 = vmatprep.subr.mxu0 0.0
    %2388 = vmatpush1.msra.mxu0 0.0
    %2389 = vmatprep.subr.mxu0 0.0
    %2390 = vmatpush1.msra.mxu0 0.0
    %2391 = vmatprep.subr.mxu0 0.0
    %2392 = vmatpush1.msra.mxu0 0.0
    %2393 = vmatprep.subr.mxu0 0.0
    %2394 = vmatpush1.msra.mxu0 0.0
    %2395 = vmatprep.subr.mxu0 0.0
    %2396 = vmatpush1.msra.mxu0 0.0
    %2397 = vmatprep.subr.mxu0 0.0
    %2398 = vmatpush1.msra.mxu0 0.0
    %2399 = vmatprep.subr.mxu0 0.0
    %2400 = vmatpush1.msra.mxu0 0.0
    %2401 = vmatprep.subr.mxu0 0.0
    %2402 = vmatpush1.msra.mxu0 0.0
    %2403 = vmatprep.subr.mxu0 0.0
    %2404 = vmatpush1.msra.mxu0 0.0
    %2405 = vmatprep.subr.mxu0 0.0
    %2406 = vmatpush1.msra.mxu0 0.0
    %2407 = vmatprep.subr.mxu0 0.0
    %2408 = vmatpush1.msra.mxu0 0.0
    %2409 = vmatprep.subr.mxu0 0.0
    %2410 = vmatpush1.msra.mxu0 0.0
    %2411 = vmatprep.subr.mxu0 0.0
    %2412 = vmatpush1.msra.mxu0 0.0
    %2413 = vmatprep.subr.mxu0 0.0
    %2414 = vmatpush1.msra.mxu0 0.0
    %2415 = vmatprep.subr.mxu0 0.0
    %2416 = vmatpush1.msra.mxu0 0.0
    %2417 = vmatprep.subr.mxu0 0.0
    %2418 = vmatpush1.msra.mxu0 0.0
    %2419 = vmatprep.subr.mxu0 0.0
    %2420 = vmatpush1.msra.mxu0 0.0
    %2421 = vmatprep.subr.mxu0 0.0
    %2422 = vmatpush1.msra.mxu0 0.0
    %2423 = vmatprep.subr.mxu0 0.0
    %2424 = vmatpush1.msra.mxu0 0.0
    %2425 = vmatprep.mubr.f32.mxu0 0.0
    %2426 = vmatmul.mubr.f32.gmra.mrb[0].mxu0 %v2359
    %v2427 = vpop.f32.mrb[0].mxu0
    %v2428 = vadd.f32 0.0, %v2427
    %v2429 = vpop.f32.mrb[0].mxu0
    %2430 = vdwg.mxu0
    %v2432 = vrot.slane %v2428, 6
    %v2434 = vadd.f32 %v2240, %v2432
    %v2435 = vxor.u32 %v2434, 2147483648
    %v2436 = vmul.f32 %v2435, 1.442695
    %v2437 = vpow.pop %v2436
    %v2438 = vadd.f32 %v2437, 1.0
    %v2439 = vrcp.pop %v2438
    %v2440 = vmul.f32 1.0, %v2439
    %v2441 = vadd.f32 %v2428, %v2334
    %v2443 = vrot.slane %v2441, 6
    %2444 = vrot.lane.b32.xlu0 %v2443, 108
    %v2445 = vpop.permute.xlu0 %2444
    %v2447 = vmul.f32 %v2440, %v2445
    %2449 = vrot.lane.b32.xlu0 %v2447, 20
    %v2450 = vpop.permute.xlu0 %2449
    %v2452 = vadd.f32 %v2240, %v2450
    %v2453 = vtanh.pop %v2452
    %v2454 = vsub.f32 1.0, %v2440
    %2456 = vrot.lane.b32.xlu0 %v2453, 118
    %v2457 = vpop.permute.xlu0 %2456
    %v2459 = vmul.f32 %v2454, %v2457
    %v2460 = vrot.slane %v2355, 6
    %v2462 = vmul.f32 %v2440, %v2460
    %v2463 = vadd.f32 %v2459, %v2462
    %v2465 = vrot.slane %v2463, 2
    %2466 = vrot.lane.b32.xlu0 %v2465, 118
    %v2467 = vpop.permute.xlu0 %2466
    %v2468 = vsel %vm257, %v2467, 0
    %2470 = vmatprep.subr.mxu0 0.0
    %2471 = vmatpush1.msra.mxu0 %v2152
    %2472 = vmatprep.subr.mxu0 0.0
    %2473 = vmatpush1.msra.mxu0 %v2249
    %2474 = vmatprep.subr.mxu0 0.0
    %2475 = vmatpush1.msra.mxu0 0.0
    %2476 = vmatprep.subr.mxu0 0.0
    %2477 = vmatpush1.msra.mxu0 0.0
    %2478 = vmatprep.subr.mxu0 0.0
    %2479 = vmatpush1.msra.mxu0 0.0
    %2480 = vmatprep.subr.mxu0 0.0
    %2481 = vmatpush1.msra.mxu0 0.0
    %2482 = vmatprep.subr.mxu0 0.0
    %2483 = vmatpush1.msra.mxu0 0.0
    %2484 = vmatprep.subr.mxu0 0.0
    %2485 = vmatpush1.msra.mxu0 0.0
    %2486 = vmatprep.subr.mxu0 0.0
    %2487 = vmatpush1.msra.mxu0 0.0
    %2488 = vmatprep.subr.mxu0 0.0
    %2489 = vmatpush1.msra.mxu0 0.0
    %2490 = vmatprep.subr.mxu0 0.0
    %2491 = vmatpush1.msra.mxu0 0.0
    %2492 = vmatprep.subr.mxu0 0.0
    %2493 = vmatpush1.msra.mxu0 0.0
    %2494 = vmatprep.subr.mxu0 0.0
    %2495 = vmatpush1.msra.mxu0 0.0
    %2496 = vmatprep.subr.mxu0 0.0
    %2497 = vmatpush1.msra.mxu0 0.0
    %2498 = vmatprep.subr.mxu0 0.0
    %2499 = vmatpush1.msra.mxu0 0.0
    %2500 = vmatprep.subr.mxu0 0.0
    %2501 = vmatpush1.msra.mxu0 0.0
    %2502 = vmatprep.subr.mxu0 0.0
    %2503 = vmatpush1.msra.mxu0 0.0
    %2504 = vmatprep.subr.mxu0 0.0
    %2505 = vmatpush1.msra.mxu0 0.0
    %2506 = vmatprep.subr.mxu0 0.0
    %2507 = vmatpush1.msra.mxu0 0.0
    %2508 = vmatprep.subr.mxu0 0.0
    %2509 = vmatpush1.msra.mxu0 0.0
    %2510 = vmatprep.subr.mxu0 0.0
    %2511 = vmatpush1.msra.mxu0 0.0
    %2512 = vmatprep.subr.mxu0 0.0
    %2513 = vmatpush1.msra.mxu0 0.0
    %2514 = vmatprep.subr.mxu0 0.0
    %2515 = vmatpush1.msra.mxu0 0.0
    %2516 = vmatprep.subr.mxu0 0.0
    %2517 = vmatpush1.msra.mxu0 0.0
    %2518 = vmatprep.subr.mxu0 0.0
    %2519 = vmatpush1.msra.mxu0 0.0
    %2520 = vmatprep.subr.mxu0 0.0
    %2521 = vmatpush1.msra.mxu0 0.0
    %2522 = vmatprep.subr.mxu0 0.0
    %2523 = vmatpush1.msra.mxu0 0.0
    %2524 = vmatprep.subr.mxu0 0.0
    %2525 = vmatpush1.msra.mxu0 0.0
    %2526 = vmatprep.subr.mxu0 0.0
    %2527 = vmatpush1.msra.mxu0 0.0
    %2528 = vmatprep.subr.mxu0 0.0
    %2529 = vmatpush1.msra.mxu0 0.0
    %2530 = vmatprep.subr.mxu0 0.0
    %2531 = vmatpush1.msra.mxu0 0.0
    %2532 = vmatprep.subr.mxu0 0.0
    %2533 = vmatpush1.msra.mxu0 0.0
    %2534 = vmatprep.mubr.f32.mxu0 0.0
    %2535 = vmatmul.mubr.f32.gmra.mrb[0].mxu0 %v2468
    %v2536 = vpop.f32.mrb[0].mxu0
    %v2537 = vadd.f32 0.0, %v2536
    %v2538 = vpop.f32.mrb[0].mxu0
    %2539 = vdwg.mxu0
    %v2541 = vrot.slane %v2537, 4
    %v2543 = vadd.f32 %v2240, %v2541
    %v2544 = vxor.u32 %v2543, 2147483648
    %v2545 = vmul.f32 %v2544, 1.442695
    %v2546 = vpow.pop %v2545
    %v2547 = vadd.f32 %v2546, 1.0
    %v2548 = vrcp.pop %v2547
    %v2549 = vmul.f32 1.0, %v2548
    %v2550 = vadd.f32 %v2537, %v2334
    %v2552 = vrot.slane %v2550, 4
    %2553 = vrot.lane.b32.xlu0 %v2552, 108
    %v2554 = vpop.permute.xlu0 %2553
    %v2556 = vmul.f32 %v2549, %v2554
    %2558 = vrot.lane.b32.xlu0 %v2556, 20
    %v2559 = vpop.permute.xlu0 %2558
    %v2561 = vadd.f32 %v2240, %v2559
    %v2562 = vtanh.pop %v2561
    %v2563 = vsub.f32 1.0, %v2549
    %2565 = vrot.lane.b32.xlu0 %v2562, 118
    %v2566 = vpop.permute.xlu0 %2565
    %v2568 = vmul.f32 %v2563, %v2566
    %v2569 = vrot.slane %v2463, 6
    %v2571 = vmul.f32 %v2549, %v2569
    %v2572 = vadd.f32 %v2568, %v2571
    %v2574 = vrot.slane %v2572, 4
    %2575 = vrot.lane.b32.xlu0 %v2574, 118
    %v2576 = vpop.permute.xlu0 %2575
    %v2577 = vsel %vm257, %v2576, 0
    %2579 = vmatprep.subr.mxu0 0.0
    %2580 = vmatpush1.msra.mxu0 %v2152
    %2581 = vmatprep.subr.mxu0 0.0
    %2582 = vmatpush1.msra.mxu0 %v2249
    %2583 = vmatprep.subr.mxu0 0.0
    %2584 = vmatpush1.msra.mxu0 0.0
    %2585 = vmatprep.subr.mxu0 0.0
    %2586 = vmatpush1.msra.mxu0 0.0
    %2587 = vmatprep.subr.mxu0 0.0
    %2588 = vmatpush1.msra.mxu0 0.0
    %2589 = vmatprep.subr.mxu0 0.0
    %2590 = vmatpush1.msra.mxu0 0.0
    %2591 = vmatprep.subr.mxu0 0.0
    %2592 = vmatpush1.msra.mxu0 0.0
    %2593 = vmatprep.subr.mxu0 0.0
    %2594 = vmatpush1.msra.mxu0 0.0
    %2595 = vmatprep.subr.mxu0 0.0
    %2596 = vmatpush1.msra.mxu0 0.0
    %2597 = vmatprep.subr.mxu0 0.0
    %2598 = vmatpush1.msra.mxu0 0.0
    %2599 = vmatprep.subr.mxu0 0.0
    %2600 = vmatpush1.msra.mxu0 0.0
    %2601 = vmatprep.subr.mxu0 0.0
    %2602 = vmatpush1.msra.mxu0 0.0
    %2603 = vmatprep.subr.mxu0 0.0
    %2604 = vmatpush1.msra.mxu0 0.0
    %2605 = vmatprep.subr.mxu0 0.0
    %2606 = vmatpush1.msra.mxu0 0.0
    %2607 = vmatprep.subr.mxu0 0.0
    %2608 = vmatpush1.msra.mxu0 0.0
    %2609 = vmatprep.subr.mxu0 0.0
    %2610 = vmatpush1.msra.mxu0 0.0
    %2611 = vmatprep.subr.mxu0 0.0
    %2612 = vmatpush1.msra.mxu0 0.0
    %2613 = vmatprep.subr.mxu0 0.0
    %2614 = vmatpush1.msra.mxu0 0.0
    %2615 = vmatprep.subr.mxu0 0.0
    %2616 = vmatpush1.msra.mxu0 0.0
    %2617 = vmatprep.subr.mxu0 0.0
    %2618 = vmatpush1.msra.mxu0 0.0
    %2619 = vmatprep.subr.mxu0 0.0
    %2620 = vmatpush1.msra.mxu0 0.0
    %2621 = vmatprep.subr.mxu0 0.0
    %2622 = vmatpush1.msra.mxu0 0.0
    %2623 = vmatprep.subr.mxu0 0.0
    %2624 = vmatpush1.msra.mxu0 0.0
    %2625 = vmatprep.subr.mxu0 0.0
    %2626 = vmatpush1.msra.mxu0 0.0
    %2627 = vmatprep.subr.mxu0 0.0
    %2628 = vmatpush1.msra.mxu0 0.0
    %2629 = vmatprep.subr.mxu0 0.0
    %2630 = vmatpush1.msra.mxu0 0.0
    %2631 = vmatprep.subr.mxu0 0.0
    %2632 = vmatpush1.msra.mxu0 0.0
    %2633 = vmatprep.subr.mxu0 0.0
    %2634 = vmatpush1.msra.mxu0 0.0
    %2635 = vmatprep.subr.mxu0 0.0
    %2636 = vmatpush1.msra.mxu0 0.0
    %2637 = vmatprep.subr.mxu0 0.0
    %2638 = vmatpush1.msra.mxu0 0.0
    %2639 = vmatprep.subr.mxu0 0.0
    %2640 = vmatpush1.msra.mxu0 0.0
    %2641 = vmatprep.subr.mxu0 0.0
    %2642 = vmatpush1.msra.mxu0 0.0
    %2643 = vmatprep.mubr.f32.mxu0 0.0
    %2644 = vmatmul.mubr.f32.gmra.mrb[0].mxu0 %v2577
    %v2645 = vpop.f32.mrb[0].mxu0
    %v2646 = vadd.f32 0.0, %v2645
    %v2647 = vpop.f32.mrb[0].mxu0
    %2648 = vdwg.mxu0
    %v2650 = vrot.slane %v2646, 2
    %v2652 = vadd.f32 %v2240, %v2650
    %v2653 = vxor.u32 %v2652, 2147483648
    %v2654 = vmul.f32 %v2653, 1.442695
    %v2655 = vpow.pop %v2654
    %v2656 = vadd.f32 %v2655, 1.0
    %v2657 = vrcp.pop %v2656
    %v2658 = vmul.f32 1.0, %v2657
    %v2659 = vadd.f32 %v2646, %v2334
    %v2661 = vrot.slane %v2659, 2
    %2662 = vrot.lane.b32.xlu0 %v2661, 108
    %v2663 = vpop.permute.xlu0 %2662
    %v2665 = vmul.f32 %v2658, %v2663
    %2667 = vrot.lane.b32.xlu0 %v2665, 20
    %v2668 = vpop.permute.xlu0 %2667
    %v2670 = vadd.f32 %v2240, %v2668
    %v2671 = vtanh.pop %v2670
    %v2672 = vsub.f32 1.0, %v2658
    %2674 = vrot.lane.b32.xlu0 %v2671, 118
    %v2675 = vpop.permute.xlu0 %2674
    %v2677 = vmul.f32 %v2672, %v2675
    %v2678 = vrot.slane %v2572, 6
    %v2680 = vmul.f32 %v2658, %v2678
    %v2681 = vadd.f32 %v2677, %v2680
    %v2683 = vrot.slane %v2681, 6
    %2684 = vrot.lane.b32.xlu0 %v2683, 118
    %v2685 = vpop.permute.xlu0 %2684
    %v2686 = vsel %vm257, %v2685, 0
    %2688 = vmatprep.subr.mxu0 0.0
    %2689 = vmatpush1.msra.mxu0 %v2152
    %2690 = vmatprep.subr.mxu0 0.0
    %2691 = vmatpush1.msra.mxu0 %v2249
    %2692 = vmatprep.subr.mxu0 0.0
    %2693 = vmatpush1.msra.mxu0 0.0
    %2694 = vmatprep.subr.mxu0 0.0
    %2695 = vmatpush1.msra.mxu0 0.0
    %2696 = vmatprep.subr.mxu0 0.0
    %2697 = vmatpush1.msra.mxu0 0.0
    %2698 = vmatprep.subr.mxu0 0.0
    %2699 = vmatpush1.msra.mxu0 0.0
    %2700 = vmatprep.subr.mxu0 0.0
    %2701 = vmatpush1.msra.mxu0 0.0
    %2702 = vmatprep.subr.mxu0 0.0
    %2703 = vmatpush1.msra.mxu0 0.0
    %2704 = vmatprep.subr.mxu0 0.0
    %2705 = vmatpush1.msra.mxu0 0.0
    %2706 = vmatprep.subr.mxu0 0.0
    %2707 = vmatpush1.msra.mxu0 0.0
    %2708 = vmatprep.subr.mxu0 0.0
    %2709 = vmatpush1.msra.mxu0 0.0
    %2710 = vmatprep.subr.mxu0 0.0
    %2711 = vmatpush1.msra.mxu0 0.0
    %2712 = vmatprep.subr.mxu0 0.0
    %2713 = vmatpush1.msra.mxu0 0.0
    %2714 = vmatprep.subr.mxu0 0.0
    %2715 = vmatpush1.msra.mxu0 0.0
    %2716 = vmatprep.subr.mxu0 0.0
    %2717 = vmatpush1.msra.mxu0 0.0
    %2718 = vmatprep.subr.mxu0 0.0
    %2719 = vmatpush1.msra.mxu0 0.0
    %2720 = vmatprep.subr.mxu0 0.0
    %2721 = vmatpush1.msra.mxu0 0.0
    %2722 = vmatprep.subr.mxu0 0.0
    %2723 = vmatpush1.msra.mxu0 0.0
    %2724 = vmatprep.subr.mxu0 0.0
    %2725 = vmatpush1.msra.mxu0 0.0
    %2726 = vmatprep.subr.mxu0 0.0
    %2727 = vmatpush1.msra.mxu0 0.0
    %2728 = vmatprep.subr.mxu0 0.0
    %2729 = vmatpush1.msra.mxu0 0.0
    %2730 = vmatprep.subr.mxu0 0.0
    %2731 = vmatpush1.msra.mxu0 0.0
    %2732 = vmatprep.subr.mxu0 0.0
    %2733 = vmatpush1.msra.mxu0 0.0
    %2734 = vmatprep.subr.mxu0 0.0
    %2735 = vmatpush1.msra.mxu0 0.0
    %2736 = vmatprep.subr.mxu0 0.0
    %2737 = vmatpush1.msra.mxu0 0.0
    %2738 = vmatprep.subr.mxu0 0.0
    %2739 = vmatpush1.msra.mxu0 0.0
    %2740 = vmatprep.subr.mxu0 0.0
    %2741 = vmatpush1.msra.mxu0 0.0
    %2742 = vmatprep.subr.mxu0 0.0
    %2743 = vmatpush1.msra.mxu0 0.0
    %2744 = vmatprep.subr.mxu0 0.0
    %2745 = vmatpush1.msra.mxu0 0.0
    %2746 = vmatprep.subr.mxu0 0.0
    %2747 = vmatpush1.msra.mxu0 0.0
    %2748 = vmatprep.subr.mxu0 0.0
    %2749 = vmatpush1.msra.mxu0 0.0
    %2750 = vmatprep.subr.mxu0 0.0
    %2751 = vmatpush1.msra.mxu0 0.0
    %2752 = vmatprep.mubr.f32.mxu0 0.0
    %2753 = vmatmul.mubr.f32.gmra.mrb[0].mxu0 %v2686
    %v2754 = vpop.f32.mrb[0].mxu0
    %v2755 = vadd.f32 0.0, %v2754
    %v2756 = vpop.f32.mrb[0].mxu0
    %2757 = vdwg.mxu0
    %v2758 = vadd.f32 %v2245, %v2755
    %v2759 = vxor.u32 %v2758, 2147483648
    %v2760 = vmul.f32 %v2759, 1.442695
    %v2761 = vpow.pop %v2760
    %v2762 = vadd.f32 %v2761, 1.0
    %v2763 = vrcp.pop %v2762
    %v2764 = vmul.f32 1.0, %v2763
    %v2765 = vadd.f32 %v2755, %v2334
    %2767 = vrot.lane.b32.xlu0 %v2765, 108
    %v2768 = vpop.permute.xlu0 %2767
    %v2770 = vmul.f32 %v2764, %v2768
    %2772 = vrot.lane.b32.xlu0 %v2770, 20
    %v2773 = vpop.permute.xlu0 %2772
    %v2775 = vadd.f32 %v2245, %v2773
    %v2776 = vtanh.pop %v2775
    %v2777 = vsub.f32 1.0, %v2764
    %2779 = vrot.lane.b32.xlu0 %v2776, 118
    %v2780 = vpop.permute.xlu0 %2779
    %v2782 = vmul.f32 %v2777, %v2780
    %v2784 = vmul.f32 %v2764, %v2683
    %v2785 = vadd.f32 %v2782, %v2784
    %2787 = vrot.lane.b32.xlu0 %v2785, 118
    %v2788 = vpop.permute.xlu0 %2787
    %v2789 = vsel %vm257, %v2788, 0
    %2791 = vmatprep.subr.mxu0 0.0
    %2792 = vmatpush1.msra.mxu0 %v2152
    %2793 = vmatprep.subr.mxu0 0.0
    %2794 = vmatpush1.msra.mxu0 %v2249
    %2795 = vmatprep.subr.mxu0 0.0
    %2796 = vmatpush1.msra.mxu0 0.0
    %2797 = vmatprep.subr.mxu0 0.0
    %2798 = vmatpush1.msra.mxu0 0.0
    %2799 = vmatprep.subr.mxu0 0.0
    %2800 = vmatpush1.msra.mxu0 0.0
    %2801 = vmatprep.subr.mxu0 0.0
    %2802 = vmatpush1.msra.mxu0 0.0
    %2803 = vmatprep.subr.mxu0 0.0
    %2804 = vmatpush1.msra.mxu0 0.0
    %2805 = vmatprep.subr.mxu0 0.0
    %2806 = vmatpush1.msra.mxu0 0.0
    %2807 = vmatprep.subr.mxu0 0.0
    %2808 = vmatpush1.msra.mxu0 0.0
    %2809 = vmatprep.subr.mxu0 0.0
    %2810 = vmatpush1.msra.mxu0 0.0
    %2811 = vmatprep.subr.mxu0 0.0
    %2812 = vmatpush1.msra.mxu0 0.0
    %2813 = vmatprep.subr.mxu0 0.0
    %2814 = vmatpush1.msra.mxu0 0.0
    %2815 = vmatprep.subr.mxu0 0.0
    %2816 = vmatpush1.msra.mxu0 0.0
    %2817 = vmatprep.subr.mxu0 0.0
    %2818 = vmatpush1.msra.mxu0 0.0
    %2819 = vmatprep.subr.mxu0 0.0
    %2820 = vmatpush1.msra.mxu0 0.0
    %2821 = vmatprep.subr.mxu0 0.0
    %2822 = vmatpush1.msra.mxu0 0.0
    %2823 = vmatprep.subr.mxu0 0.0
    %2824 = vmatpush1.msra.mxu0 0.0
    %2825 = vmatprep.subr.mxu0 0.0
    %2826 = vmatpush1.msra.mxu0 0.0
    %2827 = vmatprep.subr.mxu0 0.0
    %2828 = vmatpush1.msra.mxu0 0.0
    %2829 = vmatprep.subr.mxu0 0.0
    %2830 = vmatpush1.msra.mxu0 0.0
    %2831 = vmatprep.subr.mxu0 0.0
    %2832 = vmatpush1.msra.mxu0 0.0
    %2833 = vmatprep.subr.mxu0 0.0
    %2834 = vmatpush1.msra.mxu0 0.0
    %2835 = vmatprep.subr.mxu0 0.0
    %2836 = vmatpush1.msra.mxu0 0.0
    %2837 = vmatprep.subr.mxu0 0.0
    %2838 = vmatpush1.msra.mxu0 0.0
    %2839 = vmatprep.subr.mxu0 0.0
    %2840 = vmatpush1.msra.mxu0 0.0
    %2841 = vmatprep.subr.mxu0 0.0
    %2842 = vmatpush1.msra.mxu0 0.0
    %2843 = vmatprep.subr.mxu0 0.0
    %2844 = vmatpush1.msra.mxu0 0.0
    %2845 = vmatprep.subr.mxu0 0.0
    %2846 = vmatpush1.msra.mxu0 0.0
    %2847 = vmatprep.subr.mxu0 0.0
    %2848 = vmatpush1.msra.mxu0 0.0
    %2849 = vmatprep.subr.mxu0 0.0
    %2850 = vmatpush1.msra.mxu0 0.0
    %2851 = vmatprep.subr.mxu0 0.0
    %2852 = vmatpush1.msra.mxu0 0.0
    %2853 = vmatprep.subr.mxu0 0.0
    %2854 = vmatpush1.msra.mxu0 0.0
    %2855 = vmatprep.mubr.f32.mxu0 0.0
    %2856 = vmatmul.mubr.f32.gmra.mrb[0].mxu0 %v2789
    %v2857 = vpop.f32.mrb[0].mxu0
    %v2858 = vadd.f32 0.0, %v2857
    %v2859 = vpop.f32.mrb[0].mxu0
    %2860 = vdwg.mxu0
    %v2862 = vrot.slane %v2858, 6
    %v2864 = vadd.f32 %v2245, %v2862
    %v2865 = vxor.u32 %v2864, 2147483648
    %v2866 = vmul.f32 %v2865, 1.442695
    %v2867 = vpow.pop %v2866
    %v2868 = vadd.f32 %v2867, 1.0
    %v2869 = vrcp.pop %v2868
    %v2870 = vmul.f32 1.0, %v2869
    %v2871 = vadd.f32 %v2858, %v2334
    %v2873 = vrot.slane %v2871, 6
    %2874 = vrot.lane.b32.xlu0 %v2873, 108
    %v2875 = vpop.permute.xlu0 %2874
    %v2877 = vmul.f32 %v2870, %v2875
    %2879 = vrot.lane.b32.xlu0 %v2877, 20
    %v2880 = vpop.permute.xlu0 %2879
    %v2882 = vadd.f32 %v2245, %v2880
    %v2883 = vtanh.pop %v2882
    %v2884 = vsub.f32 1.0, %v2870
    %2886 = vrot.lane.b32.xlu0 %v2883, 118
    %v2887 = vpop.permute.xlu0 %2886
    %v2889 = vmul.f32 %v2884, %v2887
    %v2890 = vrot.slane %v2785, 6
    %v2892 = vmul.f32 %v2870, %v2890
    %v2893 = vadd.f32 %v2889, %v2892
    %v2895 = vrot.slane %v2893, 2
    %2896 = vrot.lane.b32.xlu0 %v2895, 118
    %v2897 = vpop.permute.xlu0 %2896
    %v2898 = vsel %vm257, %v2897, 0
    %2900 = vmatprep.subr.mxu0 0.0
    %2901 = vmatpush1.msra.mxu0 %v2152
    %2902 = vmatprep.subr.mxu0 0.0
    %2903 = vmatpush1.msra.mxu0 %v2249
    %2904 = vmatprep.subr.mxu0 0.0
    %2905 = vmatpush1.msra.mxu0 0.0
    %2906 = vmatprep.subr.mxu0 0.0
    %2907 = vmatpush1.msra.mxu0 0.0
    %2908 = vmatprep.subr.mxu0 0.0
    %2909 = vmatpush1.msra.mxu0 0.0
    %2910 = vmatprep.subr.mxu0 0.0
    %2911 = vmatpush1.msra.mxu0 0.0
    %2912 = vmatprep.subr.mxu0 0.0
    %2913 = vmatpush1.msra.mxu0 0.0
    %2914 = vmatprep.subr.mxu0 0.0
    %2915 = vmatpush1.msra.mxu0 0.0
    %2916 = vmatprep.subr.mxu0 0.0
    %2917 = vmatpush1.msra.mxu0 0.0
    %2918 = vmatprep.subr.mxu0 0.0
    %2919 = vmatpush1.msra.mxu0 0.0
    %2920 = vmatprep.subr.mxu0 0.0
    %2921 = vmatpush1.msra.mxu0 0.0
    %2922 = vmatprep.subr.mxu0 0.0
    %2923 = vmatpush1.msra.mxu0 0.0
    %2924 = vmatprep.subr.mxu0 0.0
    %2925 = vmatpush1.msra.mxu0 0.0
    %2926 = vmatprep.subr.mxu0 0.0
    %2927 = vmatpush1.msra.mxu0 0.0
    %2928 = vmatprep.subr.mxu0 0.0
    %2929 = vmatpush1.msra.mxu0 0.0
    %2930 = vmatprep.subr.mxu0 0.0
    %2931 = vmatpush1.msra.mxu0 0.0
    %2932 = vmatprep.subr.mxu0 0.0
    %2933 = vmatpush1.msra.mxu0 0.0
    %2934 = vmatprep.subr.mxu0 0.0
    %2935 = vmatpush1.msra.mxu0 0.0
    %2936 = vmatprep.subr.mxu0 0.0
    %2937 = vmatpush1.msra.mxu0 0.0
    %2938 = vmatprep.subr.mxu0 0.0
    %2939 = vmatpush1.msra.mxu0 0.0
    %2940 = vmatprep.subr.mxu0 0.0
    %2941 = vmatpush1.msra.mxu0 0.0
    %2942 = vmatprep.subr.mxu0 0.0
    %2943 = vmatpush1.msra.mxu0 0.0
    %2944 = vmatprep.subr.mxu0 0.0
    %2945 = vmatpush1.msra.mxu0 0.0
    %2946 = vmatprep.subr.mxu0 0.0
    %2947 = vmatpush1.msra.mxu0 0.0
    %2948 = vmatprep.subr.mxu0 0.0
    %2949 = vmatpush1.msra.mxu0 0.0
    %2950 = vmatprep.subr.mxu0 0.0
    %2951 = vmatpush1.msra.mxu0 0.0
    %2952 = vmatprep.subr.mxu0 0.0
    %2953 = vmatpush1.msra.mxu0 0.0
    %2954 = vmatprep.subr.mxu0 0.0
    %2955 = vmatpush1.msra.mxu0 0.0
    %2956 = vmatprep.subr.mxu0 0.0
    %2957 = vmatpush1.msra.mxu0 0.0
    %2958 = vmatprep.subr.mxu0 0.0
    %2959 = vmatpush1.msra.mxu0 0.0
    %2960 = vmatprep.subr.mxu0 0.0
    %2961 = vmatpush1.msra.mxu0 0.0
    %2962 = vmatprep.subr.mxu0 0.0
    %2963 = vmatpush1.msra.mxu0 0.0
    %2964 = vmatprep.mubr.f32.mxu0 0.0
    %2965 = vmatmul.mubr.f32.gmra.mrb[0].mxu0 %v2898
    %v2966 = vpop.f32.mrb[0].mxu0
    %v2967 = vadd.f32 0.0, %v2966
    %v2968 = vpop.f32.mrb[0].mxu0
    %2969 = vdwg.mxu0
    %v2971 = vrot.slane %v2967, 4
    %v2973 = vadd.f32 %v2245, %v2971
    %v2974 = vxor.u32 %v2973, 2147483648
    %v2975 = vmul.f32 %v2974, 1.442695
    %v2976 = vpow.pop %v2975
    %v2977 = vadd.f32 %v2976, 1.0
    %v2978 = vrcp.pop %v2977
    %v2979 = vmul.f32 1.0, %v2978
    %v2980 = vadd.f32 %v2967, %v2334
    %v2982 = vrot.slane %v2980, 4
    %2983 = vrot.lane.b32.xlu0 %v2982, 108
    %v2984 = vpop.permute.xlu0 %2983
    %v2986 = vmul.f32 %v2979, %v2984
    %2988 = vrot.lane.b32.xlu0 %v2986, 20
    %v2989 = vpop.permute.xlu0 %2988
    %v2991 = vadd.f32 %v2245, %v2989
    %v2992 = vtanh.pop %v2991
    %v2993 = vsub.f32 1.0, %v2979
    %2995 = vrot.lane.b32.xlu0 %v2992, 118
    %v2996 = vpop.permute.xlu0 %2995
    %v2998 = vmul.f32 %v2993, %v2996
    %v2999 = vrot.slane %v2893, 6
    %v3001 = vmul.f32 %v2979, %v2999
    %v3002 = vadd.f32 %v2998, %v3001
    %v3004 = vrot.slane %v3002, 4
    %3005 = vrot.lane.b32.xlu0 %v3004, 118
    %v3006 = vpop.permute.xlu0 %3005
    %v3007 = vsel %vm257, %v3006, 0
    %3009 = vmatprep.subr.mxu0 0.0
    %3010 = vmatpush1.msra.mxu0 %v2152
    %3011 = vmatprep.subr.mxu0 0.0
    %3012 = vmatpush1.msra.mxu0 %v2249
    %3013 = vmatprep.subr.mxu0 0.0
    %3014 = vmatpush1.msra.mxu0 0.0
    %3015 = vmatprep.subr.mxu0 0.0
    %3016 = vmatpush1.msra.mxu0 0.0
    %3017 = vmatprep.subr.mxu0 0.0
    %3018 = vmatpush1.msra.mxu0 0.0
    %3019 = vmatprep.subr.mxu0 0.0
    %3020 = vmatpush1.msra.mxu0 0.0
    %3021 = vmatprep.subr.mxu0 0.0
    %3022 = vmatpush1.msra.mxu0 0.0
    %3023 = vmatprep.subr.mxu0 0.0
    %3024 = vmatpush1.msra.mxu0 0.0
    %3025 = vmatprep.subr.mxu0 0.0
    %3026 = vmatpush1.msra.mxu0 0.0
    %3027 = vmatprep.subr.mxu0 0.0
    %3028 = vmatpush1.msra.mxu0 0.0
    %3029 = vmatprep.subr.mxu0 0.0
    %3030 = vmatpush1.msra.mxu0 0.0
    %3031 = vmatprep.subr.mxu0 0.0
    %3032 = vmatpush1.msra.mxu0 0.0
    %3033 = vmatprep.subr.mxu0 0.0
    %3034 = vmatpush1.msra.mxu0 0.0
    %3035 = vmatprep.subr.mxu0 0.0
    %3036 = vmatpush1.msra.mxu0 0.0
    %3037 = vmatprep.subr.mxu0 0.0
    %3038 = vmatpush1.msra.mxu0 0.0
    %3039 = vmatprep.subr.mxu0 0.0
    %3040 = vmatpush1.msra.mxu0 0.0
    %3041 = vmatprep.subr.mxu0 0.0
    %3042 = vmatpush1.msra.mxu0 0.0
    %3043 = vmatprep.subr.mxu0 0.0
    %3044 = vmatpush1.msra.mxu0 0.0
    %3045 = vmatprep.subr.mxu0 0.0
    %3046 = vmatpush1.msra.mxu0 0.0
    %3047 = vmatprep.subr.mxu0 0.0
    %3048 = vmatpush1.msra.mxu0 0.0
    %3049 = vmatprep.subr.mxu0 0.0
    %3050 = vmatpush1.msra.mxu0 0.0
    %3051 = vmatprep.subr.mxu0 0.0
    %3052 = vmatpush1.msra.mxu0 0.0
    %3053 = vmatprep.subr.mxu0 0.0
    %3054 = vmatpush1.msra.mxu0 0.0
    %3055 = vmatprep.subr.mxu0 0.0
    %3056 = vmatpush1.msra.mxu0 0.0
    %3057 = vmatprep.subr.mxu0 0.0
    %3058 = vmatpush1.msra.mxu0 0.0
    %3059 = vmatprep.subr.mxu0 0.0
    %3060 = vmatpush1.msra.mxu0 0.0
    %3061 = vmatprep.subr.mxu0 0.0
    %3062 = vmatpush1.msra.mxu0 0.0
    %3063 = vmatprep.subr.mxu0 0.0
    %3064 = vmatpush1.msra.mxu0 0.0
    %3065 = vmatprep.subr.mxu0 0.0
    %3066 = vmatpush1.msra.mxu0 0.0
    %3067 = vmatprep.subr.mxu0 0.0
    %3068 = vmatpush1.msra.mxu0 0.0
    %3069 = vmatprep.subr.mxu0 0.0
    %3070 = vmatpush1.msra.mxu0 0.0
    %3071 = vmatprep.subr.mxu0 0.0
    %3072 = vmatpush1.msra.mxu0 0.0
    %3073 = vmatprep.mubr.f32.mxu0 0.0
    %3074 = vmatmul.mubr.f32.gmra.mrb[0].mxu0 %v3007
    %v3075 = vpop.f32.mrb[0].mxu0
    %v3076 = vadd.f32 0.0, %v3075
    %v3077 = vpop.f32.mrb[0].mxu0
    %3078 = vdwg.mxu0
    %v3080 = vrot.slane %v3076, 2
    %v3082 = vadd.f32 %v2245, %v3080
    %v3083 = vxor.u32 %v3082, 2147483648
    %v3084 = vmul.f32 %v3083, 1.442695
    %v3085 = vpow.pop %v3084
    %v3086 = vadd.f32 %v3085, 1.0
    %v3087 = vrcp.pop %v3086
    %v3088 = vmul.f32 1.0, %v3087
    %v3089 = vadd.f32 %v3076, %v2334
    %v3091 = vrot.slane %v3089, 2
    %3092 = vrot.lane.b32.xlu0 %v3091, 108
    %v3093 = vpop.permute.xlu0 %3092
    %v3095 = vmul.f32 %v3088, %v3093
    %3097 = vrot.lane.b32.xlu0 %v3095, 20
    %v3098 = vpop.permute.xlu0 %3097
    %v3100 = vadd.f32 %v2245, %v3098
    %v3101 = vtanh.pop %v3100
    %v3102 = vsub.f32 1.0, %v3088
    %3104 = vrot.lane.b32.xlu0 %v3101, 118
    %v3105 = vpop.permute.xlu0 %3104
    %v3107 = vmul.f32 %v3102, %v3105
    %v3108 = vrot.slane %v3002, 6
    %v3110 = vmul.f32 %v3088, %v3108
    %v3111 = vadd.f32 %v3107, %v3110
    %v3112 = vld [vmem:[%s13] sm:$0xff]
    %v3113 = vld [vmem:[%s13 + $0x8] sm:$0x3]
    %v3114 = vld [vmem:[#allocation15] sm:$0x1]
    %v3116 = vlaneseq
    %v3117 = vshrl.u32 %v3116, 7
    %v3118 = vsub.s32 0, %v3117
    %v3119 = vrot.slane %v3114, %v3118
    %v3122 = vrot.slane %v3111, 6
    %3123 = vrot.lane.b32.xlu0 %v3122, 118
    %v3124 = vpop.permute.xlu0 %3123
    %v3125 = vsel %vm257, %v3124, 0
    %v3128 = vsel %vm261, %v3113, 0
    %3130 = vmatprep.subr.mxu0 0.0
    %3131 = vmatpush1.msra.mxu0 %v3112
    %3132 = vmatprep.subr.mxu0 0.0
    %3133 = vmatpush1.msra.mxu0 %v3128
    %3134 = vmatprep.subr.mxu0 0.0
    %3135 = vmatpush1.msra.mxu0 0.0
    %3136 = vmatprep.subr.mxu0 0.0
    %3137 = vmatpush1.msra.mxu0 0.0
    %3138 = vmatprep.subr.mxu0 0.0
    %3139 = vmatpush1.msra.mxu0 0.0
    %3140 = vmatprep.subr.mxu0 0.0
    %3141 = vmatpush1.msra.mxu0 0.0
    %3142 = vmatprep.subr.mxu0 0.0
    %3143 = vmatpush1.msra.mxu0 0.0
    %3144 = vmatprep.subr.mxu0 0.0
    %3145 = vmatpush1.msra.mxu0 0.0
    %3146 = vmatprep.subr.mxu0 0.0
    %3147 = vmatpush1.msra.mxu0 0.0
    %3148 = vmatprep.subr.mxu0 0.0
    %3149 = vmatpush1.msra.mxu0 0.0
    %3150 = vmatprep.subr.mxu0 0.0
    %3151 = vmatpush1.msra.mxu0 0.0
    %3152 = vmatprep.subr.mxu0 0.0
    %3153 = vmatpush1.msra.mxu0 0.0
    %3154 = vmatprep.subr.mxu0 0.0
    %3155 = vmatpush1.msra.mxu0 0.0
    %3156 = vmatprep.subr.mxu0 0.0
    %3157 = vmatpush1.msra.mxu0 0.0
    %3158 = vmatprep.subr.mxu0 0.0
    %3159 = vmatpush1.msra.mxu0 0.0
    %3160 = vmatprep.subr.mxu0 0.0
    %3161 = vmatpush1.msra.mxu0 0.0
    %3162 = vmatprep.subr.mxu0 0.0
    %3163 = vmatpush1.msra.mxu0 0.0
    %3164 = vmatprep.subr.mxu0 0.0
    %3165 = vmatpush1.msra.mxu0 0.0
    %3166 = vmatprep.subr.mxu0 0.0
    %3167 = vmatpush1.msra.mxu0 0.0
    %3168 = vmatprep.subr.mxu0 0.0
    %3169 = vmatpush1.msra.mxu0 0.0
    %3170 = vmatprep.subr.mxu0 0.0
    %3171 = vmatpush1.msra.mxu0 0.0
    %3172 = vmatprep.subr.mxu0 0.0
    %3173 = vmatpush1.msra.mxu0 0.0
    %3174 = vmatprep.subr.mxu0 0.0
    %3175 = vmatpush1.msra.mxu0 0.0
    %3176 = vmatprep.subr.mxu0 0.0
    %3177 = vmatpush1.msra.mxu0 0.0
    %3178 = vmatprep.subr.mxu0 0.0
    %3179 = vmatpush1.msra.mxu0 0.0
    %3180 = vmatprep.subr.mxu0 0.0
    %3181 = vmatpush1.msra.mxu0 0.0
    %3182 = vmatprep.subr.mxu0 0.0
    %3183 = vmatpush1.msra.mxu0 0.0
    %3184 = vmatprep.subr.mxu0 0.0
    %3185 = vmatpush1.msra.mxu0 0.0
    %3186 = vmatprep.subr.mxu0 0.0
    %3187 = vmatpush1.msra.mxu0 0.0
    %3188 = vmatprep.subr.mxu0 0.0
    %3189 = vmatpush1.msra.mxu0 0.0
    %3190 = vmatprep.subr.mxu0 0.0
    %3191 = vmatpush1.msra.mxu0 0.0
    %3192 = vmatprep.subr.mxu0 0.0
    %3193 = vmatpush1.msra.mxu0 0.0
    %3194 = vmatprep.mubr.f32.mxu0 0.0
    %3195 = vmatmul.mubr.f32.gmra.mrb[0].mxu0 %v3125
    %v3196 = vpop.f32.mrb[0].mxu0
    %v3197 = vadd.f32 %v3119, %v3196
    %v3198 = vpop.f32.mrb[0].mxu0
    %3199 = vdwg.mxu0
    %v3200 = vmax.f32 %v3197, 0.0
    %v3201 = vld [vmem:[%s15] sm:$0xff]
    %v3202 = vld [vmem:[%s15 + $0x8] sm:$0xff]
    %v3203 = vld [vmem:[%s15 + $0x10] sm:$0xf]
    %v3204 = vld [vmem:[%s16] sm:$0x1]
    %v3206 = vlaneseq
    %v3207 = vshrl.u32 %v3206, 7
    %v3208 = vsub.s32 0, %v3207
    %v3209 = vrot.slane %v3204, %v3208
    %vm3211 = vcmask 162816
    %v3213 = vsel %vm3211, %v3200, 0
    %v3216 = vsel %vm178, %v3203, 0
    %3218 = vmatprep.subr.mxu0 0.0
    %3219 = vmatpush1.msra.mxu0 %v3201
    %3220 = vmatprep.subr.mxu0 0.0
    %3221 = vmatpush1.msra.mxu0 %v3202
    %3222 = vmatprep.subr.mxu0 0.0
    %3223 = vmatpush1.msra.mxu0 %v3216
    %3224 = vmatprep.subr.mxu0 0.0
    %3225 = vmatpush1.msra.mxu0 0.0
    %3226 = vmatprep.subr.mxu0 0.0
    %3227 = vmatpush1.msra.mxu0 0.0
    %3228 = vmatprep.subr.mxu0 0.0
    %3229 = vmatpush1.msra.mxu0 0.0
    %3230 = vmatprep.subr.mxu0 0.0
    %3231 = vmatpush1.msra.mxu0 0.0
    %3232 = vmatprep.subr.mxu0 0.0
    %3233 = vmatpush1.msra.mxu0 0.0
    %3234 = vmatprep.subr.mxu0 0.0
    %3235 = vmatpush1.msra.mxu0 0.0
    %3236 = vmatprep.subr.mxu0 0.0
    %3237 = vmatpush1.msra.mxu0 0.0
    %3238 = vmatprep.subr.mxu0 0.0
    %3239 = vmatpush1.msra.mxu0 0.0
    %3240 = vmatprep.subr.mxu0 0.0
    %3241 = vmatpush1.msra.mxu0 0.0
    %3242 = vmatprep.subr.mxu0 0.0
    %3243 = vmatpush1.msra.mxu0 0.0
    %3244 = vmatprep.subr.mxu0 0.0
    %3245 = vmatpush1.msra.mxu0 0.0
    %3246 = vmatprep.subr.mxu0 0.0
    %3247 = vmatpush1.msra.mxu0 0.0
    %3248 = vmatprep.subr.mxu0 0.0
    %3249 = vmatpush1.msra.mxu0 0.0
    %3250 = vmatprep.subr.mxu0 0.0
    %3251 = vmatpush1.msra.mxu0 0.0
    %3252 = vmatprep.subr.mxu0 0.0
    %3253 = vmatpush1.msra.mxu0 0.0
    %3254 = vmatprep.subr.mxu0 0.0
    %3255 = vmatpush1.msra.mxu0 0.0
    %3256 = vmatprep.subr.mxu0 0.0
    %3257 = vmatpush1.msra.mxu0 0.0
    %3258 = vmatprep.subr.mxu0 0.0
    %3259 = vmatpush1.msra.mxu0 0.0
    %3260 = vmatprep.subr.mxu0 0.0
    %3261 = vmatpush1.msra.mxu0 0.0
    %3262 = vmatprep.subr.mxu0 0.0
    %3263 = vmatpush1.msra.mxu0 0.0
    %3264 = vmatprep.subr.mxu0 0.0
    %3265 = vmatpush1.msra.mxu0 0.0
    %3266 = vmatprep.subr.mxu0 0.0
    %3267 = vmatpush1.msra.mxu0 0.0
    %3268 = vmatprep.subr.mxu0 0.0
    %3269 = vmatpush1.msra.mxu0 0.0
    %3270 = vmatprep.subr.mxu0 0.0
    %3271 = vmatpush1.msra.mxu0 0.0
    %3272 = vmatprep.subr.mxu0 0.0
    %3273 = vmatpush1.msra.mxu0 0.0
    %3274 = vmatprep.subr.mxu0 0.0
    %3275 = vmatpush1.msra.mxu0 0.0
    %3276 = vmatprep.subr.mxu0 0.0
    %3277 = vmatpush1.msra.mxu0 0.0
    %3278 = vmatprep.subr.mxu0 0.0
    %3279 = vmatpush1.msra.mxu0 0.0
    %3280 = vmatprep.subr.mxu0 0.0
    %3281 = vmatpush1.msra.mxu0 0.0
    %3282 = vmatprep.mubr.f32.mxu0 0.0
    %3283 = vmatmul.mubr.f32.gmra.mrb[0].mxu0 %v3213
    %v3284 = vpop.f32.mrb[0].mxu0
    %v3285 = vadd.f32 %v3209, %v3284
    %v3286 = vpop.f32.mrb[0].mxu0
    %3287 = vdwg.mxu0
    %v3288 = vmax.f32 %v3285, 0.0
    %v3289 = vld [vmem:[%s17] sm:$0xff]
    %v3290 = vld [vmem:[%s17 + $0x8] sm:$0xff]
    %v3291 = vld [vmem:[%s17 + $0x10] sm:$0xff]
    %v3292 = vld [vmem:[%s17 + $0x18] sm:$0x3f]
    %v3293 = vld [vmem:[%s18] sm:$0x1]
    %v3295 = vlaneseq
    %v3296 = vshrl.u32 %v3295, 7
    %v3297 = vsub.s32 0, %v3296
    %v3298 = vrot.slane %v3293, %v3297
    %vm3300 = vcmask 244736
    %v3302 = vsel %vm3300, %v3288, 0
    %vm3304 = vcmask 1045504
    %v3306 = vsel %vm3304, %v3292, 0
    %3308 = vmatprep.subr.mxu0 0.0
    %3309 = vmatpush1.msra.mxu0 %v3289
    %3310 = vmatprep.subr.mxu0 0.0
    %3311 = vmatpush1.msra.mxu0 %v3290
    %3312 = vmatprep.subr.mxu0 0.0
    %3313 = vmatpush1.msra.mxu0 %v3291
    %3314 = vmatprep.subr.mxu0 0.0
    %3315 = vmatpush1.msra.mxu0 %v3306
    %3316 = vmatprep.subr.mxu0 0.0
    %3317 = vmatpush1.msra.mxu0 0.0
    %3318 = vmatprep.subr.mxu0 0.0
    %3319 = vmatpush1.msra.mxu0 0.0
    %3320 = vmatprep.subr.mxu0 0.0
    %3321 = vmatpush1.msra.mxu0 0.0
    %3322 = vmatprep.subr.mxu0 0.0
    %3323 = vmatpush1.msra.mxu0 0.0
    %3324 = vmatprep.subr.mxu0 0.0
    %3325 = vmatpush1.msra.mxu0 0.0
    %3326 = vmatprep.subr.mxu0 0.0
    %3327 = vmatpush1.msra.mxu0 0.0
    %3328 = vmatprep.subr.mxu0 0.0
    %3329 = vmatpush1.msra.mxu0 0.0
    %3330 = vmatprep.subr.mxu0 0.0
    %3331 = vmatpush1.msra.mxu0 0.0
    %3332 = vmatprep.subr.mxu0 0.0
    %3333 = vmatpush1.msra.mxu0 0.0
    %3334 = vmatprep.subr.mxu0 0.0
    %3335 = vmatpush1.msra.mxu0 0.0
    %3336 = vmatprep.subr.mxu0 0.0
    %3337 = vmatpush1.msra.mxu0 0.0
    %3338 = vmatprep.subr.mxu0 0.0
    %3339 = vmatpush1.msra.mxu0 0.0
    %3340 = vmatprep.subr.mxu0 0.0
    %3341 = vmatpush1.msra.mxu0 0.0
    %3342 = vmatprep.subr.mxu0 0.0
    %3343 = vmatpush1.msra.mxu0 0.0
    %3344 = vmatprep.subr.mxu0 0.0
    %3345 = vmatpush1.msra.mxu0 0.0
    %3346 = vmatprep.subr.mxu0 0.0
    %3347 = vmatpush1.msra.mxu0 0.0
    %3348 = vmatprep.subr.mxu0 0.0
    %3349 = vmatpush1.msra.mxu0 0.0
    %3350 = vmatprep.subr.mxu0 0.0
    %3351 = vmatpush1.msra.mxu0 0.0
    %3352 = vmatprep.subr.mxu0 0.0
    %3353 = vmatpush1.msra.mxu0 0.0
    %3354 = vmatprep.subr.mxu0 0.0
    %3355 = vmatpush1.msra.mxu0 0.0
    %3356 = vmatprep.subr.mxu0 0.0
    %3357 = vmatpush1.msra.mxu0 0.0
    %3358 = vmatprep.subr.mxu0 0.0
    %3359 = vmatpush1.msra.mxu0 0.0
    %3360 = vmatprep.subr.mxu0 0.0
    %3361 = vmatpush1.msra.mxu0 0.0
    %3362 = vmatprep.subr.mxu0 0.0
    %3363 = vmatpush1.msra.mxu0 0.0
    %3364 = vmatprep.subr.mxu0 0.0
    %3365 = vmatpush1.msra.mxu0 0.0
    %3366 = vmatprep.subr.mxu0 0.0
    %3367 = vmatpush1.msra.mxu0 0.0
    %3368 = vmatprep.subr.mxu0 0.0
    %3369 = vmatpush1.msra.mxu0 0.0
    %3370 = vmatprep.subr.mxu0 0.0
    %3371 = vmatpush1.msra.mxu0 0.0
    %3372 = vmatprep.mubr.f32.mxu0 0.0
    %3373 = vmatmul.mubr.f32.gmra.mrb[0].mxu0 %v3302
    %v3374 = vpop.f32.mrb[0].mxu0
    %v3375 = vadd.f32 %v3298, %v3374
    %v3376 = vpop.f32.mrb[0].mxu0
    %3377 = vdwg.mxu0
    %vm3378 = vcmask 41984
    %3379 = vst.msk [vmem:[#allocation17] sm:$0x3] %vm3378, %v3375
    // Predicated region
    $region110: #{tpu_custom_call.1} parent=1 // pred_check
      _
    $region111: #{tpu_custom_call.1} parent=1 // pred_check_branch
      %3381 = sbr.rel (0) target = $region113
    $region112: #{tpu_custom_call.1} parent=1 // pred_region
      %s3383 = ssub.s32 32, 32
      %3384 = vsyncadd [#allocation5], %s3383
      %s3386 = sshll.u32 [#allocation17], 4
      %s3387 = int_to_ptr.vmem [resolvable:$true] %s3386
      %3389 = dma.vmem_to_hbm [thread:$0]  %s3387, 32, %s19, [#allocation5]
    $region113: #{tpu_custom_call.1} parent=1 // pred_fallthru
      _
    // Predicated region
    $region114: #{tpu_custom_call.1} parent=1 // pred_check
      _
    $region115: #{tpu_custom_call.1} parent=1 // pred_check_branch
      %3391 = sbr.rel (0) target = $region117
    $region116: #{tpu_custom_call.1} parent=1 // pred_region
      %3392 = dma.done [#allocation5], 32
    $region117: #{tpu_custom_call.1} parent=1 // pred_fallthru
      _
    %3393 = vsyncpa [#allocation4], 1
    %3394 = vsyncpa [#allocation7], 1
    %3395 = vsyncpa [#allocation10], 1
    %3396 = vsyncpa [#allocation13], 1
    %3397 = vsyncpa [#allocation16], 1
    %3398 = vsyncpa [#allocation5], 1

</llo_original>
